<compile_context>
chip_gen: v7x
topology: tpu7x:2x2x1
jax: 0.10.0
libtpu: 0.0.40
codegen_flags: <defaults>
</compile_context>

<pallas_src>
import jax
import jax.numpy as jnp
from jax.experimental import pallas as pl
from jax.experimental.pallas import tpu as pltpu

_WPAD = 8  # left halo on the W (sublane) axis; keeps the interior scratch store aligned


def _double_conv_kernel(x_ref, w1_ref, b1_ref, w2_ref, b2_ref, o_ref,
                        xpad_ref, mid_ref, slab1_ref, slab2_ref):
    # x_ref  : (1, H, W, Cin)            input tile (one image), NHWC
    # w1_ref : (9*Cin, C1)               conv1 weights, im2col order (kh, kw, cin) x cout
    # b1_ref : (1, C1)
    # w2_ref : (9*C1, C2)                conv2 weights
    # b2_ref : (1, C2)
    # o_ref  : (1, H*W, C2)              output tile (pixels-major)
    # xpad_ref: (H+2, W+_WPAD+1, Cin)    f32 scratch, zero halo ring around the image
    # mid_ref : (H+2, W+_WPAD+1, C1)     f32 scratch, conv1 activation + halo (stays in VMEM)
    # slab1_ref: (H*W, 9*Cin)            f32 im2col slab for conv1
    # slab2_ref: (H*W, 9*C1)             f32 im2col slab for conv2
    _, H, W, Cin = x_ref.shape
    C1 = w1_ref.shape[1]
    C2 = w2_ref.shape[1]

    def zero_halo_ring(pad_ref, c):
        # Zero only the 1-pixel halo ring the taps actually read; the interior is fully
        # overwritten below, so nothing else needs clearing.
        wp = pad_ref.shape[1]
        zrow = jnp.zeros((1, wp, c), jnp.float32)
        pad_ref[0:1, :, :] = zrow                                   # top halo row
        pad_ref[H + 1:H + 2, :, :] = zrow                           # bottom halo row
        zcol = jnp.zeros((H + 2, 1, c), jnp.float32)
        pad_ref[:, _WPAD - 1:_WPAD, :] = zcol                       # left halo column
        pad_ref[:, _WPAD + W:_WPAD + W + 1, :] = zcol               # right halo column

    def conv3x3_relu(pad_ref, slab_ref, w_ref, b_ref, cin):
        # Build the im2col slab (H*W, 9*cin) in VMEM: column block (kh*3+kw)*cin holds the
        # shifted window for that tap.  Then a SINGLE MXU matmul with K = 9*cin.
        for kh in range(3):
            for kw in range(3):
                w0 = _WPAD - 1 + kw
                c0 = (kh * 3 + kw) * cin
                patch = pad_ref[kh:kh + H, w0:w0 + W, :]            # (H, W, cin)
                slab_ref[:, c0:c0 + cin] = patch.reshape(H * W, cin)
        acc = jnp.dot(slab_ref[...], w_ref[...],
                      preferred_element_type=jnp.float32)           # (H*W, cout)
        return jnp.maximum(acc + b_ref[0, :], 0.0)                  # fused bias + ReLU

    # ---- stage 1: in-kernel zero halo + conv1 + bias + ReLU -----------------------------
    zero_halo_ring(xpad_ref, Cin)
    xpad_ref[1:1 + H, _WPAD:_WPAD + W, :] = x_ref[0].astype(jnp.float32)
    act1 = conv3x3_relu(xpad_ref, slab1_ref, w1_ref, b1_ref, Cin)   # (H*W, C1) f32

    # ---- stage 2: conv1 activation stays in f32 VMEM (fused, no HBM round trip) ---------
    zero_halo_ring(mid_ref, C1)
    mid_ref[1:1 + H, _WPAD:_WPAD + W, :] = act1.reshape(H, W, C1)
    act2 = conv3x3_relu(mid_ref, slab2_ref, w2_ref, b2_ref, C1)     # (H*W, C2)

    o_ref[0] = act2.astype(o_ref.dtype)


def _double_conv_nhwc(x_nhwc, w1_mat, b1, w2_mat, b2):
    """Fused DoubleConv over NHWC input via a single pallas_call (grid over batch)."""
    N, H, W, Cin = x_nhwc.shape
    C1 = w1_mat.shape[1]
    C2 = w2_mat.shape[1]
    wp = W + _WPAD + 1

    return pl.pallas_call(
        _double_conv_kernel,
        out_shape=jax.ShapeDtypeStruct((N, H * W, C2), x_nhwc.dtype),
        grid_spec=pltpu.PrefetchScalarGridSpec(
            num_scalar_prefetch=0,
            grid=(N,),
            in_specs=[
                pl.BlockSpec((1, H, W, Cin), lambda n: (n, 0, 0, 0)),
                pl.BlockSpec((9 * Cin, C1), lambda n: (0, 0)),
                pl.BlockSpec((1, C1), lambda n: (0, 0)),
                pl.BlockSpec((9 * C1, C2), lambda n: (0, 0)),
                pl.BlockSpec((1, C2), lambda n: (0, 0)),
            ],
            out_specs=pl.BlockSpec((1, H * W, C2), lambda n: (n, 0, 0)),
            scratch_shapes=[
                pltpu.VMEM((H + 2, wp, Cin), jnp.float32),   # padded input
                pltpu.VMEM((H + 2, wp, C1), jnp.float32),    # padded conv1 activation
                pltpu.VMEM((H * W, 9 * Cin), jnp.float32),   # im2col slab, conv1
                pltpu.VMEM((H * W, 9 * C1), jnp.float32),    # im2col slab, conv2
            ],
        ),
        compiler_params=pltpu.CompilerParams(
            dimension_semantics=("parallel",),
        ),
    )(x_nhwc, w1_mat, b1, w2_mat, b2)


def double_conv(x_nchw, w1, b1, w2, b2):
    """DoubleConv forward. x_nchw: (N, Cin, H, W); w*: (Cout, Cin, 3, 3) PyTorch layout."""
    N, Cin, H, W = x_nchw.shape
    C1 = w1.shape[0]
    C2 = w2.shape[0]

    x_nhwc = jnp.transpose(x_nchw, (0, 2, 3, 1))                     # NCHW -> NHWC
    # One-time (wrapper-side, XLA) weight prep: OIHW -> (kh, kw, cin, cout) -> (9*cin, cout)
    # matching the im2col slab column order (kh*3 + kw)*cin + cin_idx.
    w1_mat = jnp.transpose(w1, (2, 3, 1, 0)).reshape(9 * Cin, C1).astype(jnp.float32)
    w2_mat = jnp.transpose(w2, (2, 3, 1, 0)).reshape(9 * C1, C2).astype(jnp.float32)

    y = _double_conv_nhwc(x_nhwc, w1_mat,
                          b1.reshape(1, C1).astype(jnp.float32),
                          w2_mat,
                          b2.reshape(1, C2).astype(jnp.float32))     # (N, H*W, C2)
    return jnp.transpose(y.reshape(N, H, W, C2), (0, 3, 1, 2))       # -> NCHW


def _reference_double_conv(x_nchw, w1, b1, w2, b2):
    """Pure-JAX reference (lax conv) for correctness check."""
    def conv(x, w, b):
        y = jax.lax.conv_general_dilated(
            x, w, window_strides=(1, 1), padding=((1, 1), (1, 1)),
            dimension_numbers=("NCHW", "OIHW", "NCHW"))
        return jnp.maximum(y + b.reshape(1, -1, 1, 1), 0.0)
    return conv(conv(x_nchw, w1, b1), w2, b2)


if __name__ == "__main__":
    N, Cin, Cout, H, W = 2, 4, 8, 16, 16

    key = jax.random.PRNGKey(0)
    kx, kw1, kb1, kw2, kb2 = jax.random.split(key, 5)

    x = jax.random.normal(kx, (N, Cin, H, W), jnp.float32)
    # PyTorch Conv2d shapes: weight OIHW, bias (Cout,)
    w1 = 0.1 * jax.random.normal(kw1, (Cout, Cin, 3, 3), jnp.float32)
    b1 = 0.1 * jax.random.normal(kb1, (Cout,), jnp.float32)
    w2 = 0.1 * jax.random.normal(kw2, (Cout, Cout, 3, 3), jnp.float32)
    b2 = 0.1 * jax.random.normal(kb2, (Cout,), jnp.float32)

    out = jax.block_until_ready(double_conv(x, w1, b1, w2, b2))
    ref = jax.block_until_ready(_reference_double_conv(x, w1, b1, w2, b2))

    assert out.shape == (N, Cout, H, W)
    assert jnp.allclose(out, ref, atol=1e-3, rtol=1e-3), "mismatch vs JAX reference"

    print("KERNEL_OK")
</pallas_src>

<mosaic_0001>
module attributes {stable_mosaic.version = 11 : i64} {
  func.func @_double_conv_kernel(%arg0: i32, %arg1: memref<1x16x16x4xf32, #tpu.memory_space<vmem>>, %arg2: memref<36x8xf32, #tpu.memory_space<vmem>>, %arg3: memref<1x8xf32, #tpu.memory_space<vmem>>, %arg4: memref<72x8xf32, #tpu.memory_space<vmem>>, %arg5: memref<1x8xf32, #tpu.memory_space<vmem>>, %arg6: memref<1x256x8xf32, #tpu.memory_space<vmem>>, %arg7: memref<18x25x4xf32, #tpu.memory_space<vmem>>, %arg8: memref<18x25x8xf32, #tpu.memory_space<vmem>>, %arg9: memref<256x36xf32, #tpu.memory_space<vmem>>, %arg10: memref<256x72xf32, #tpu.memory_space<vmem>>) attributes {dimension_semantics = [#tpu.dimension_semantics<parallel>], iteration_bounds = array<i64: 2>, scalar_prefetch = 0 : i64, scratch_operands = 4 : i64, tpu.core_type = #tpu.core_type<tc>, window_params = [{transform_indices = @transform_0, window_bounds = array<i64: 1, 16, 16, 4>}, {pipeline_mode = #tpu.pipeline_mode<synchronous>, transform_indices = @transform_1, window_bounds = array<i64: 36, 8>}, {pipeline_mode = #tpu.pipeline_mode<synchronous>, transform_indices = @transform_2, window_bounds = array<i64: 1, 8>}, {pipeline_mode = #tpu.pipeline_mode<synchronous>, transform_indices = @transform_3, window_bounds = array<i64: 72, 8>}, {pipeline_mode = #tpu.pipeline_mode<synchronous>, transform_indices = @transform_4, window_bounds = array<i64: 1, 8>}, {transform_indices = @transform_5, window_bounds = array<i64: 1, 256, 8>}]} {
    %cst = arith.constant 0.000000e+00 : f32
    %0 = vector.broadcast %cst : f32 to vector<1x25x4xf32>
    %c0 = arith.constant 0 : index
    %c0_0 = arith.constant 0 : index
    %c0_1 = arith.constant 0 : index
    %1 = vector.load %arg7[%c0, %c0_0, %c0_1] : memref<18x25x4xf32, #tpu.memory_space<vmem>>, vector<1x25x4xf32>
    tpu.vector_store %arg7[%c0, %c0_0, %c0_1], %0 {strides = array<i32>} : memref<18x25x4xf32, #tpu.memory_space<vmem>>, vector<1x25x4xf32>,
    %c17 = arith.constant 17 : index
    %c0_2 = arith.constant 0 : index
    %c0_3 = arith.constant 0 : index
    %2 = vector.load %arg7[%c17, %c0_2, %c0_3] : memref<18x25x4xf32, #tpu.memory_space<vmem>>, vector<1x25x4xf32>
    tpu.vector_store %arg7[%c17, %c0_2, %c0_3], %0 {strides = array<i32>} : memref<18x25x4xf32, #tpu.memory_space<vmem>>, vector<1x25x4xf32>,
    %cst_4 = arith.constant 0.000000e+00 : f32
    %3 = vector.broadcast %cst_4 : f32 to vector<18x1x4xf32>
    %c0_5 = arith.constant 0 : index
    %c7 = arith.constant 7 : index
    %c0_6 = arith.constant 0 : index
    %4 = vector.load %arg7[%c0_5, %c7, %c0_6] : memref<18x25x4xf32, #tpu.memory_space<vmem>>, vector<18x1x4xf32>
    tpu.vector_store %arg7[%c0_5, %c7, %c0_6], %3 {strides = array<i32>} : memref<18x25x4xf32, #tpu.memory_space<vmem>>, vector<18x1x4xf32>,
    %c0_7 = arith.constant 0 : index
    %c24 = arith.constant 24 : index
    %c0_8 = arith.constant 0 : index
    %5 = vector.load %arg7[%c0_7, %c24, %c0_8] : memref<18x25x4xf32, #tpu.memory_space<vmem>>, vector<18x1x4xf32>
    tpu.vector_store %arg7[%c0_7, %c24, %c0_8], %3 {strides = array<i32>} : memref<18x25x4xf32, #tpu.memory_space<vmem>>, vector<18x1x4xf32>,
    %c0_9 = arith.constant 0 : index
    %c0_10 = arith.constant 0 : index
    %c0_11 = arith.constant 0 : index
    %c0_12 = arith.constant 0 : index
    %6 = vector.load %arg1[%c0_9, %c0_10, %c0_11, %c0_12] : memref<1x16x16x4xf32, #tpu.memory_space<vmem>>, vector<1x16x16x4xf32>
    %7 = vector.shape_cast %6 : vector<1x16x16x4xf32> to vector<16x16x4xf32>
    %c1 = arith.constant 1 : index
    %c8 = arith.constant 8 : index
    %c0_13 = arith.constant 0 : index
    %8 = vector.load %arg7[%c1, %c8, %c0_13] : memref<18x25x4xf32, #tpu.memory_space<vmem>>, vector<16x16x4xf32>
    tpu.vector_store %arg7[%c1, %c8, %c0_13], %7 {strides = array<i32>} : memref<18x25x4xf32, #tpu.memory_space<vmem>>, vector<16x16x4xf32>,
    %c0_14 = arith.constant 0 : index
    %c7_15 = arith.constant 7 : index
    %c0_16 = arith.constant 0 : index
    %9 = vector.load %arg7[%c0_14, %c7_15, %c0_16] : memref<18x25x4xf32, #tpu.memory_space<vmem>>, vector<16x16x4xf32>
    %10 = vector.shape_cast %9 : vector<16x16x4xf32> to vector<256x4xf32>
    %c0_17 = arith.constant 0 : index
    %c0_18 = arith.constant 0 : index
    %11 = vector.load %arg9[%c0_17, %c0_18] : memref<256x36xf32, #tpu.memory_space<vmem>>, vector<256x4xf32>
    tpu.vector_store %arg9[%c0_17, %c0_18], %10 {strides = array<i32>} : memref<256x36xf32, #tpu.memory_space<vmem>>, vector<256x4xf32>,
    %c0_19 = arith.constant 0 : index
    %c8_20 = arith.constant 8 : index
    %c0_21 = arith.constant 0 : index
    %12 = vector.load %arg7[%c0_19, %c8_20, %c0_21] : memref<18x25x4xf32, #tpu.memory_space<vmem>>, vector<16x16x4xf32>
    %13 = vector.shape_cast %12 : vector<16x16x4xf32> to vector<256x4xf32>
    %c0_22 = arith.constant 0 : index
    %c4 = arith.constant 4 : index
    %14 = vector.load %arg9[%c0_22, %c4] : memref<256x36xf32, #tpu.memory_space<vmem>>, vector<256x4xf32>
    tpu.vector_store %arg9[%c0_22, %c4], %13 {strides = array<i32>} : memref<256x36xf32, #tpu.memory_space<vmem>>, vector<256x4xf32>,
    %c0_23 = arith.constant 0 : index
    %c9 = arith.constant 9 : index
    %c0_24 = arith.constant 0 : index
    %15 = vector.load %arg7[%c0_23, %c9, %c0_24] : memref<18x25x4xf32, #tpu.memory_space<vmem>>, vector<16x16x4xf32>
    %16 = vector.shape_cast %15 : vector<16x16x4xf32> to vector<256x4xf32>
    %c0_25 = arith.constant 0 : index
    %c8_26 = arith.constant 8 : index
    %17 = vector.load %arg9[%c0_25, %c8_26] : memref<256x36xf32, #tpu.memory_space<vmem>>, vector<256x4xf32>
    tpu.vector_store %arg9[%c0_25, %c8_26], %16 {strides = array<i32>} : memref<256x36xf32, #tpu.memory_space<vmem>>, vector<256x4xf32>,
    %c1_27 = arith.constant 1 : index
    %c7_28 = arith.constant 7 : index
    %c0_29 = arith.constant 0 : index
    %18 = vector.load %arg7[%c1_27, %c7_28, %c0_29] : memref<18x25x4xf32, #tpu.memory_space<vmem>>, vector<16x16x4xf32>
    %19 = vector.shape_cast %18 : vector<16x16x4xf32> to vector<256x4xf32>
    %c0_30 = arith.constant 0 : index
    %c12 = arith.constant 12 : index
    %20 = vector.load %arg9[%c0_30, %c12] : memref<256x36xf32, #tpu.memory_space<vmem>>, vector<256x4xf32>
    tpu.vector_store %arg9[%c0_30, %c12], %19 {strides = array<i32>} : memref<256x36xf32, #tpu.memory_space<vmem>>, vector<256x4xf32>,
    %c1_31 = arith.constant 1 : index
    %c8_32 = arith.constant 8 : index
    %c0_33 = arith.constant 0 : index
    %21 = vector.load %arg7[%c1_31, %c8_32, %c0_33] : memref<18x25x4xf32, #tpu.memory_space<vmem>>, vector<16x16x4xf32>
    %22 = vector.shape_cast %21 : vector<16x16x4xf32> to vector<256x4xf32>
    %c0_34 = arith.constant 0 : index
    %c16 = arith.constant 16 : index
    %23 = vector.load %arg9[%c0_34, %c16] : memref<256x36xf32, #tpu.memory_space<vmem>>, vector<256x4xf32>
    tpu.vector_store %arg9[%c0_34, %c16], %22 {strides = array<i32>} : memref<256x36xf32, #tpu.memory_space<vmem>>, vector<256x4xf32>,
    %c1_35 = arith.constant 1 : index
    %c9_36 = arith.constant 9 : index
    %c0_37 = arith.constant 0 : index
    %24 = vector.load %arg7[%c1_35, %c9_36, %c0_37] : memref<18x25x4xf32, #tpu.memory_space<vmem>>, vector<16x16x4xf32>
    %25 = vector.shape_cast %24 : vector<16x16x4xf32> to vector<256x4xf32>
    %c0_38 = arith.constant 0 : index
    %c20 = arith.constant 20 : index
    %26 = vector.load %arg9[%c0_38, %c20] : memref<256x36xf32, #tpu.memory_space<vmem>>, vector<256x4xf32>
    tpu.vector_store %arg9[%c0_38, %c20], %25 {strides = array<i32>} : memref<256x36xf32, #tpu.memory_space<vmem>>, vector<256x4xf32>,
    %c2 = arith.constant 2 : index
    %c7_39 = arith.constant 7 : index
    %c0_40 = arith.constant 0 : index
    %27 = vector.load %arg7[%c2, %c7_39, %c0_40] : memref<18x25x4xf32, #tpu.memory_space<vmem>>, vector<16x16x4xf32>
    %28 = vector.shape_cast %27 : vector<16x16x4xf32> to vector<256x4xf32>
    %c0_41 = arith.constant 0 : index
    %c24_42 = arith.constant 24 : index
    %29 = vector.load %arg9[%c0_41, %c24_42] : memref<256x36xf32, #tpu.memory_space<vmem>>, vector<256x4xf32>
    tpu.vector_store %arg9[%c0_41, %c24_42], %28 {strides = array<i32>} : memref<256x36xf32, #tpu.memory_space<vmem>>, vector<256x4xf32>,
    %c2_43 = arith.constant 2 : index
    %c8_44 = arith.constant 8 : index
    %c0_45 = arith.constant 0 : index
    %30 = vector.load %arg7[%c2_43, %c8_44, %c0_45] : memref<18x25x4xf32, #tpu.memory_space<vmem>>, vector<16x16x4xf32>
    %31 = vector.shape_cast %30 : vector<16x16x4xf32> to vector<256x4xf32>
    %c0_46 = arith.constant 0 : index
    %c28 = arith.constant 28 : index
    %32 = vector.load %arg9[%c0_46, %c28] : memref<256x36xf32, #tpu.memory_space<vmem>>, vector<256x4xf32>
    tpu.vector_store %arg9[%c0_46, %c28], %31 {strides = array<i32>} : memref<256x36xf32, #tpu.memory_space<vmem>>, vector<256x4xf32>,
    %c2_47 = arith.constant 2 : index
    %c9_48 = arith.constant 9 : index
    %c0_49 = arith.constant 0 : index
    %33 = vector.load %arg7[%c2_47, %c9_48, %c0_49] : memref<18x25x4xf32, #tpu.memory_space<vmem>>, vector<16x16x4xf32>
    %34 = vector.shape_cast %33 : vector<16x16x4xf32> to vector<256x4xf32>
    %c0_50 = arith.constant 0 : index
    %c32 = arith.constant 32 : index
    %35 = vector.load %arg9[%c0_50, %c32] : memref<256x36xf32, #tpu.memory_space<vmem>>, vector<256x4xf32>
    tpu.vector_store %arg9[%c0_50, %c32], %34 {strides = array<i32>} : memref<256x36xf32, #tpu.memory_space<vmem>>, vector<256x4xf32>,
    %c0_51 = arith.constant 0 : index
    %c0_52 = arith.constant 0 : index
    %36 = vector.load %arg9[%c0_51, %c0_52] : memref<256x36xf32, #tpu.memory_space<vmem>>, vector<256x36xf32>
    %c0_53 = arith.constant 0 : index
    %c0_54 = arith.constant 0 : index
    %37 = vector.load %arg2[%c0_53, %c0_54] : memref<36x8xf32, #tpu.memory_space<vmem>>, vector<36x8xf32>
    %cst_55 = arith.constant dense<0.000000e+00> : vector<256x8xf32>
    %38 = tpu.matmul %36, %37, %cst_55 {dimension_numbers = #tpu.dot_dimension_numbers<[1], [0], [0], [1], [0, 0, 1, 1], [], []>} : vector<256x36xf32>, vector<36x8xf32>, vector<256x8xf32> -> vector<256x8xf32>
    %c0_56 = arith.constant 0 : index
    %c0_57 = arith.constant 0 : index
    %39 = vector.load %arg3[%c0_56, %c0_57] : memref<1x8xf32, #tpu.memory_space<vmem>>, vector<1x8xf32>
    %40 = vector.shape_cast %39 : vector<1x8xf32> to vector<8xf32>
    %41 = vector.shape_cast %40 : vector<8xf32> to vector<1x8xf32>
    %42 = vector.broadcast %41 : vector<1x8xf32> to vector<256x8xf32>
    %43 = arith.addf %38, %42 : vector<256x8xf32>
    %cst_58 = arith.constant 0.000000e+00 : f32
    %44 = vector.broadcast %cst_58 : f32 to vector<256x8xf32>
    %45 = arith.maximumf %43, %44 : vector<256x8xf32>
    %cst_59 = arith.constant 0.000000e+00 : f32
    %46 = vector.broadcast %cst_59 : f32 to vector<1x25x8xf32>
    %c0_60 = arith.constant 0 : index
    %c0_61 = arith.constant 0 : index
    %c0_62 = arith.constant 0 : index
    %47 = vector.load %arg8[%c0_60, %c0_61, %c0_62] : memref<18x25x8xf32, #tpu.memory_space<vmem>>, vector<1x25x8xf32>
    tpu.vector_store %arg8[%c0_60, %c0_61, %c0_62], %46 {strides = array<i32>} : memref<18x25x8xf32, #tpu.memory_space<vmem>>, vector<1x25x8xf32>,
    %c17_63 = arith.constant 17 : index
    %c0_64 = arith.constant 0 : index
    %c0_65 = arith.constant 0 : index
    %48 = vector.load %arg8[%c17_63, %c0_64, %c0_65] : memref<18x25x8xf32, #tpu.memory_space<vmem>>, vector<1x25x8xf32>
    tpu.vector_store %arg8[%c17_63, %c0_64, %c0_65], %46 {strides = array<i32>} : memref<18x25x8xf32, #tpu.memory_space<vmem>>, vector<1x25x8xf32>,
    %cst_66 = arith.constant 0.000000e+00 : f32
    %49 = vector.broadcast %cst_66 : f32 to vector<18x1x8xf32>
    %c0_67 = arith.constant 0 : index
    %c7_68 = arith.constant 7 : index
    %c0_69 = arith.constant 0 : index
    %50 = vector.load %arg8[%c0_67, %c7_68, %c0_69] : memref<18x25x8xf32, #tpu.memory_space<vmem>>, vector<18x1x8xf32>
    tpu.vector_store %arg8[%c0_67, %c7_68, %c0_69], %49 {strides = array<i32>} : memref<18x25x8xf32, #tpu.memory_space<vmem>>, vector<18x1x8xf32>,
    %c0_70 = arith.constant 0 : index
    %c24_71 = arith.constant 24 : index
    %c0_72 = arith.constant 0 : index
    %51 = vector.load %arg8[%c0_70, %c24_71, %c0_72] : memref<18x25x8xf32, #tpu.memory_space<vmem>>, vector<18x1x8xf32>
    tpu.vector_store %arg8[%c0_70, %c24_71, %c0_72], %49 {strides = array<i32>} : memref<18x25x8xf32, #tpu.memory_space<vmem>>, vector<18x1x8xf32>,
    %52 = vector.shape_cast %45 : vector<256x8xf32> to vector<16x16x8xf32>
    %c1_73 = arith.constant 1 : index
    %c8_74 = arith.constant 8 : index
    %c0_75 = arith.constant 0 : index
    %53 = vector.load %arg8[%c1_73, %c8_74, %c0_75] : memref<18x25x8xf32, #tpu.memory_space<vmem>>, vector<16x16x8xf32>
    tpu.vector_store %arg8[%c1_73, %c8_74, %c0_75], %52 {strides = array<i32>} : memref<18x25x8xf32, #tpu.memory_space<vmem>>, vector<16x16x8xf32>,
    %c0_76 = arith.constant 0 : index
    %c7_77 = arith.constant 7 : index
    %c0_78 = arith.constant 0 : index
    %54 = vector.load %arg8[%c0_76, %c7_77, %c0_78] : memref<18x25x8xf32, #tpu.memory_space<vmem>>, vector<16x16x8xf32>
    %55 = vector.shape_cast %54 : vector<16x16x8xf32> to vector<256x8xf32>
    %c0_79 = arith.constant 0 : index
    %c0_80 = arith.constant 0 : index
    %56 = vector.load %arg10[%c0_79, %c0_80] : memref<256x72xf32, #tpu.memory_space<vmem>>, vector<256x8xf32>
    tpu.vector_store %arg10[%c0_79, %c0_80], %55 {strides = array<i32>} : memref<256x72xf32, #tpu.memory_space<vmem>>, vector<256x8xf32>,
    %c0_81 = arith.constant 0 : index
    %c8_82 = arith.constant 8 : index
    %c0_83 = arith.constant 0 : index
    %57 = vector.load %arg8[%c0_81, %c8_82, %c0_83] : memref<18x25x8xf32, #tpu.memory_space<vmem>>, vector<16x16x8xf32>
    %58 = vector.shape_cast %57 : vector<16x16x8xf32> to vector<256x8xf32>
    %c0_84 = arith.constant 0 : index
    %c8_85 = arith.constant 8 : index
    %59 = vector.load %arg10[%c0_84, %c8_85] : memref<256x72xf32, #tpu.memory_space<vmem>>, vector<256x8xf32>
    tpu.vector_store %arg10[%c0_84, %c8_85], %58 {strides = array<i32>} : memref<256x72xf32, #tpu.memory_space<vmem>>, vector<256x8xf32>,
    %c0_86 = arith.constant 0 : index
    %c9_87 = arith.constant 9 : index
    %c0_88 = arith.constant 0 : index
    %60 = vector.load %arg8[%c0_86, %c9_87, %c0_88] : memref<18x25x8xf32, #tpu.memory_space<vmem>>, vector<16x16x8xf32>
    %61 = vector.shape_cast %60 : vector<16x16x8xf32> to vector<256x8xf32>
    %c0_89 = arith.constant 0 : index
    %c16_90 = arith.constant 16 : index
    %62 = vector.load %arg10[%c0_89, %c16_90] : memref<256x72xf32, #tpu.memory_space<vmem>>, vector<256x8xf32>
    tpu.vector_store %arg10[%c0_89, %c16_90], %61 {strides = array<i32>} : memref<256x72xf32, #tpu.memory_space<vmem>>, vector<256x8xf32>,
    %c1_91 = arith.constant 1 : index
    %c7_92 = arith.constant 7 : index
    %c0_93 = arith.constant 0 : index
    %63 = vector.load %arg8[%c1_91, %c7_92, %c0_93] : memref<18x25x8xf32, #tpu.memory_space<vmem>>, vector<16x16x8xf32>
    %64 = vector.shape_cast %63 : vector<16x16x8xf32> to vector<256x8xf32>
    %c0_94 = arith.constant 0 : index
    %c24_95 = arith.constant 24 : index
    %65 = vector.load %arg10[%c0_94, %c24_95] : memref<256x72xf32, #tpu.memory_space<vmem>>, vector<256x8xf32>
    tpu.vector_store %arg10[%c0_94, %c24_95], %64 {strides = array<i32>} : memref<256x72xf32, #tpu.memory_space<vmem>>, vector<256x8xf32>,
    %c1_96 = arith.constant 1 : index
    %c8_97 = arith.constant 8 : index
    %c0_98 = arith.constant 0 : index
    %66 = vector.load %arg8[%c1_96, %c8_97, %c0_98] : memref<18x25x8xf32, #tpu.memory_space<vmem>>, vector<16x16x8xf32>
    %67 = vector.shape_cast %66 : vector<16x16x8xf32> to vector<256x8xf32>
    %c0_99 = arith.constant 0 : index
    %c32_100 = arith.constant 32 : index
    %68 = vector.load %arg10[%c0_99, %c32_100] : memref<256x72xf32, #tpu.memory_space<vmem>>, vector<256x8xf32>
    tpu.vector_store %arg10[%c0_99, %c32_100], %67 {strides = array<i32>} : memref<256x72xf32, #tpu.memory_space<vmem>>, vector<256x8xf32>,
    %c1_101 = arith.constant 1 : index
    %c9_102 = arith.constant 9 : index
    %c0_103 = arith.constant 0 : index
    %69 = vector.load %arg8[%c1_101, %c9_102, %c0_103] : memref<18x25x8xf32, #tpu.memory_space<vmem>>, vector<16x16x8xf32>
    %70 = vector.shape_cast %69 : vector<16x16x8xf32> to vector<256x8xf32>
    %c0_104 = arith.constant 0 : index
    %c40 = arith.constant 40 : index
    %71 = vector.load %arg10[%c0_104, %c40] : memref<256x72xf32, #tpu.memory_space<vmem>>, vector<256x8xf32>
    tpu.vector_store %arg10[%c0_104, %c40], %70 {strides = array<i32>} : memref<256x72xf32, #tpu.memory_space<vmem>>, vector<256x8xf32>,
    %c2_105 = arith.constant 2 : index
    %c7_106 = arith.constant 7 : index
    %c0_107 = arith.constant 0 : index
    %72 = vector.load %arg8[%c2_105, %c7_106, %c0_107] : memref<18x25x8xf32, #tpu.memory_space<vmem>>, vector<16x16x8xf32>
    %73 = vector.shape_cast %72 : vector<16x16x8xf32> to vector<256x8xf32>
    %c0_108 = arith.constant 0 : index
    %c48 = arith.constant 48 : index
    %74 = vector.load %arg10[%c0_108, %c48] : memref<256x72xf32, #tpu.memory_space<vmem>>, vector<256x8xf32>
    tpu.vector_store %arg10[%c0_108, %c48], %73 {strides = array<i32>} : memref<256x72xf32, #tpu.memory_space<vmem>>, vector<256x8xf32>,
    %c2_109 = arith.constant 2 : index
    %c8_110 = arith.constant 8 : index
    %c0_111 = arith.constant 0 : index
    %75 = vector.load %arg8[%c2_109, %c8_110, %c0_111] : memref<18x25x8xf32, #tpu.memory_space<vmem>>, vector<16x16x8xf32>
    %76 = vector.shape_cast %75 : vector<16x16x8xf32> to vector<256x8xf32>
    %c0_112 = arith.constant 0 : index
    %c56 = arith.constant 56 : index
    %77 = vector.load %arg10[%c0_112, %c56] : memref<256x72xf32, #tpu.memory_space<vmem>>, vector<256x8xf32>
    tpu.vector_store %arg10[%c0_112, %c56], %76 {strides = array<i32>} : memref<256x72xf32, #tpu.memory_space<vmem>>, vector<256x8xf32>,
    %c2_113 = arith.constant 2 : index
    %c9_114 = arith.constant 9 : index
    %c0_115 = arith.constant 0 : index
    %78 = vector.load %arg8[%c2_113, %c9_114, %c0_115] : memref<18x25x8xf32, #tpu.memory_space<vmem>>, vector<16x16x8xf32>
    %79 = vector.shape_cast %78 : vector<16x16x8xf32> to vector<256x8xf32>
    %c0_116 = arith.constant 0 : index
    %c64 = arith.constant 64 : index
    %80 = vector.load %arg10[%c0_116, %c64] : memref<256x72xf32, #tpu.memory_space<vmem>>, vector<256x8xf32>
    tpu.vector_store %arg10[%c0_116, %c64], %79 {strides = array<i32>} : memref<256x72xf32, #tpu.memory_space<vmem>>, vector<256x8xf32>,
    %c0_117 = arith.constant 0 : index
    %c0_118 = arith.constant 0 : index
    %81 = vector.load %arg10[%c0_117, %c0_118] : memref<256x72xf32, #tpu.memory_space<vmem>>, vector<256x72xf32>
    %c0_119 = arith.constant 0 : index
    %c0_120 = arith.constant 0 : index
    %82 = vector.load %arg4[%c0_119, %c0_120] : memref<72x8xf32, #tpu.memory_space<vmem>>, vector<72x8xf32>
    %cst_121 = arith.constant dense<0.000000e+00> : vector<256x8xf32>
    %83 = tpu.matmul %81, %82, %cst_121 {dimension_numbers = #tpu.dot_dimension_numbers<[1], [0], [0], [1], [0, 0, 1, 1], [], []>} : vector<256x72xf32>, vector<72x8xf32>, vector<256x8xf32> -> vector<256x8xf32>
    %c0_122 = arith.constant 0 : index
    %c0_123 = arith.constant 0 : index
    %84 = vector.load %arg5[%c0_122, %c0_123] : memref<1x8xf32, #tpu.memory_space<vmem>>, vector<1x8xf32>
    %85 = vector.shape_cast %84 : vector<1x8xf32> to vector<8xf32>
    %86 = vector.shape_cast %85 : vector<8xf32> to vector<1x8xf32>
    %87 = vector.broadcast %86 : vector<1x8xf32> to vector<256x8xf32>
    %88 = arith.addf %83, %87 : vector<256x8xf32>
    %cst_124 = arith.constant 0.000000e+00 : f32
    %89 = vector.broadcast %cst_124 : f32 to vector<256x8xf32>
    %90 = arith.maximumf %88, %89 : vector<256x8xf32>
    %c0_125 = arith.constant 0 : index
    %c0_126 = arith.constant 0 : index
    %c0_127 = arith.constant 0 : index
    %91 = vector.load %arg6[%c0_125, %c0_126, %c0_127] : memref<1x256x8xf32, #tpu.memory_space<vmem>>, vector<1x256x8xf32>
    %92 = vector.shape_cast %91 : vector<1x256x8xf32> to vector<256x8xf32>
    %93 = vector.shape_cast %90 : vector<256x8xf32> to vector<1x256x8xf32>
    tpu.vector_store %arg6[%c0_125, %c0_126, %c0_127], %93 {strides = array<i32>} : memref<1x256x8xf32, #tpu.memory_space<vmem>>, vector<1x256x8xf32>,
    return
  }
  func.func @transform_0(%arg0: i32) -> (i32, i32, i32, i32) {
    %c0_i32 = arith.constant 0 : i32
    %c0_i32_0 = arith.constant 0 : i32
    %c0_i32_1 = arith.constant 0 : i32
    %c0_i32_2 = arith.constant 0 : i32
    return %arg0, %c0_i32, %c0_i32_0, %c0_i32_1 : i32, i32, i32, i32
  }
  func.func @transform_1(%arg0: i32) -> (i32, i32) {
    %c0_i32 = arith.constant 0 : i32
    %c0_i32_0 = arith.constant 0 : i32
    %c0_i32_1 = arith.constant 0 : i32
    return %c0_i32, %c0_i32_0 : i32, i32
  }
  func.func @transform_2(%arg0: i32) -> (i32, i32) {
    %c0_i32 = arith.constant 0 : i32
    %c0_i32_0 = arith.constant 0 : i32
    %c0_i32_1 = arith.constant 0 : i32
    return %c0_i32, %c0_i32_0 : i32, i32
  }
  func.func @transform_3(%arg0: i32) -> (i32, i32) {
    %c0_i32 = arith.constant 0 : i32
    %c0_i32_0 = arith.constant 0 : i32
    %c0_i32_1 = arith.constant 0 : i32
    return %c0_i32, %c0_i32_0 : i32, i32
  }
  func.func @transform_4(%arg0: i32) -> (i32, i32) {
    %c0_i32 = arith.constant 0 : i32
    %c0_i32_0 = arith.constant 0 : i32
    %c0_i32_1 = arith.constant 0 : i32
    return %c0_i32, %c0_i32_0 : i32, i32
  }
  func.func @transform_5(%arg0: i32) -> (i32, i32, i32) {
    %c0_i32 = arith.constant 0 : i32
    %c0_i32_0 = arith.constant 0 : i32
    %c0_i32_1 = arith.constant 0 : i32
    return %arg0, %c0_i32, %c0_i32_0 : i32, i32, i32
  }
}

</mosaic_0001>

<llo_original>
// kernel: tpu_custom_call.1
$region0: #{tpu_custom_call.1}
  #allocation0 [shape = 'u32[]', space=smem, size = 0x4, offset = 0x4, fixed_abs, tag = 'smem constant byte address 0x4 - core index']
  #allocation1 [shape = 'u32[144,128]{1,0:T(1,128)}', space=vmem, size = 0x12000, scoped, tag = 'internal scratch']
  #allocation2 [shape = 'f32[18,25,4]{2,1,0:T(8,128)}', space=vmem, size = 0x48000, scoped, tag = 'scratch operand']
  #allocation3 [shape = 'f32[18,25,8]{2,1,0:T(8,128)}', space=vmem, size = 0x48000, scoped, tag = 'scratch operand']
  #allocation4 [shape = 'f32[256,36]{1,0:T(8,128)}', space=vmem, size = 0x20000, scoped, tag = 'scratch operand']
  #allocation5 [shape = 'f32[256,72]{1,0:T(8,128)}', space=vmem, size = 0x20000, scoped, tag = 'scratch operand']
  %s0 = inlined_call_operand.vmem [shape: f32[2,16,16,4], index: 0, kind: input, shape index: {}]
  %s1 = inlined_call_operand.vmem [shape: f32[36,8], index: 1, kind: input, shape index: {}]
  %s2 = inlined_call_operand.vmem [shape: f32[1,8], index: 2, kind: input, shape index: {}]
  %s3 = inlined_call_operand.vmem [shape: f32[72,8], index: 3, kind: input, shape index: {}]
  %s4 = inlined_call_operand.vmem [shape: f32[1,8], index: 4, kind: input, shape index: {}]
  %s5 = inlined_call_operand.vmem [shape: f32[2,256,8], index: 5, kind: output, shape index: {}]
  %s6 = sld [smem:[#allocation0]]
  $region53: #{tpu_custom_call.1} parent=0
    _
  %s8 = ssub.s32 1, %s6
  %s9 = scalar_select 0, %s8, %s6
  loop: start=0, step=1, limit=4
  $region2: #{tpu_custom_call.1} parent=0 // loop_pre_header
    _
  $region3: #{tpu_custom_call.1} parent=0 // loop_header
    %s11 = sphi 0, %s15
    %p12 = scmp.ge.s32.totalorder %s11, 4
    %s21 = sphi 0, %s23
    %s24 = sphi 0, %s21
    %s25 = sphi 0, %s24
    %s41 = sphi 0, %s25
    %s45 = sphi 0, %s45
    %s47 = sphi 0, %s45
    %s48 = sphi 0, %s47
    %s62 = sphi 0, %s48
    %s66 = sphi 0, %s66
    %s68 = sphi 0, %s66
    %s69 = sphi 0, %s68
    %s83 = sphi 0, %s69
    %s87 = sphi 0, %s87
    %s89 = sphi 0, %s87
    %s90 = sphi 0, %s89
    %s104 = sphi 0, %s90
    %s108 = sphi 0, %s108
    %s110 = sphi 0, %s108
    %s111 = sphi 0, %s110
    %s125 = sphi 0, %s111
    %s131 = sphi 0, %s133
    %s134 = sphi 0, %s131
    %s135 = sphi 0, %s134
    %s151 = sphi 0, %s135
  $region4: #{tpu_custom_call.1} parent=0 // loop_header_branch
    %14 = sbr.rel (%p12) target = $region8
  $region5: #{tpu_custom_call.1} parent=0 // loop_body
    %s16 = ssub.s32 %s11, 1
    %s17 = ssub.s32 %s11, 2
    %s18 = sadd.s32 %s11, 1
    %s19 = ssub.s32 %s11, %s18
    %p20 = scmp.eq.s32.totalorder %s19, 0
    %s22 = sadd.s32 %s21, 1
    %s23 = scalar_select %p20, %s21, %s22
    %p26 = pneg %p20
    %p27 = scmp.eq.s32.totalorder %s11, 1
    %p28 = por %p26, %p27
    %p29 = scmp.ne.s32.totalorder %s21, %s24
    %p30 = scmp.eq.s32.totalorder %s11, 0
    %p31 = por %p29, %p30
    %p32 = scmp.ne.s32.totalorder %s21, %s24
    %p33 = scmp.eq.s32.totalorder %s16, 1
    %p34 = por %p32, %p33
    %p35 = scmp.ne.s32.totalorder %s24, %s25
    %p36 = scmp.eq.s32.totalorder %s16, 0
    %p37 = por %p35, %p36
    %p38 = scmp.ne.s32.totalorder %s24, %s25
    %p39 = scmp.eq.s32.totalorder %s17, 1
    %p40 = por %p38, %p39
    %p42 = scmp.ne.s32.totalorder %s25, %s41
    %p43 = scmp.eq.s32.totalorder %s17, 0
    %p44 = por %p42, %p43
    %s46 = sadd.s32 %s45, 1
    %p49 = scmp.eq.s32.totalorder %s11, 1
    %p50 = scmp.ne.s32.totalorder %s45, %s47
    %p51 = scmp.eq.s32.totalorder %s11, 0
    %p52 = por %p50, %p51
    %p53 = scmp.ne.s32.totalorder %s45, %s47
    %p54 = scmp.eq.s32.totalorder %s16, 1
    %p55 = por %p53, %p54
    %p56 = scmp.ne.s32.totalorder %s47, %s48
    %p57 = scmp.eq.s32.totalorder %s16, 0
    %p58 = por %p56, %p57
    %p59 = scmp.ne.s32.totalorder %s47, %s48
    %p60 = scmp.eq.s32.totalorder %s17, 1
    %p61 = por %p59, %p60
    %p63 = scmp.ne.s32.totalorder %s48, %s62
    %p64 = scmp.eq.s32.totalorder %s17, 0
    %p65 = por %p63, %p64
    %s67 = sadd.s32 %s66, 1
    %p70 = scmp.eq.s32.totalorder %s11, 1
    %p71 = scmp.ne.s32.totalorder %s66, %s68
    %p72 = scmp.eq.s32.totalorder %s11, 0
    %p73 = por %p71, %p72
    %p74 = scmp.ne.s32.totalorder %s66, %s68
    %p75 = scmp.eq.s32.totalorder %s16, 1
    %p76 = por %p74, %p75
    %p77 = scmp.ne.s32.totalorder %s68, %s69
    %p78 = scmp.eq.s32.totalorder %s16, 0
    %p79 = por %p77, %p78
    %p80 = scmp.ne.s32.totalorder %s68, %s69
    %p81 = scmp.eq.s32.totalorder %s17, 1
    %p82 = por %p80, %p81
    %p84 = scmp.ne.s32.totalorder %s69, %s83
    %p85 = scmp.eq.s32.totalorder %s17, 0
    %p86 = por %p84, %p85
    %s88 = sadd.s32 %s87, 1
    %p91 = scmp.eq.s32.totalorder %s11, 1
    %p92 = scmp.ne.s32.totalorder %s87, %s89
    %p93 = scmp.eq.s32.totalorder %s11, 0
    %p94 = por %p92, %p93
    %p95 = scmp.ne.s32.totalorder %s87, %s89
    %p96 = scmp.eq.s32.totalorder %s16, 1
    %p97 = por %p95, %p96
    %p98 = scmp.ne.s32.totalorder %s89, %s90
    %p99 = scmp.eq.s32.totalorder %s16, 0
    %p100 = por %p98, %p99
    %p101 = scmp.ne.s32.totalorder %s89, %s90
    %p102 = scmp.eq.s32.totalorder %s17, 1
    %p103 = por %p101, %p102
    %p105 = scmp.ne.s32.totalorder %s90, %s104
    %p106 = scmp.eq.s32.totalorder %s17, 0
    %p107 = por %p105, %p106
    %s109 = sadd.s32 %s108, 1
    %p112 = scmp.eq.s32.totalorder %s11, 1
    %p113 = scmp.ne.s32.totalorder %s108, %s110
    %p114 = scmp.eq.s32.totalorder %s11, 0
    %p115 = por %p113, %p114
    %p116 = scmp.ne.s32.totalorder %s108, %s110
    %p117 = scmp.eq.s32.totalorder %s16, 1
    %p118 = por %p116, %p117
    %p119 = scmp.ne.s32.totalorder %s110, %s111
    %p120 = scmp.eq.s32.totalorder %s16, 0
    %p121 = por %p119, %p120
    %p122 = scmp.ne.s32.totalorder %s110, %s111
    %p123 = scmp.eq.s32.totalorder %s17, 1
    %p124 = por %p122, %p123
    %p126 = scmp.ne.s32.totalorder %s111, %s125
    %p127 = scmp.eq.s32.totalorder %s17, 0
    %p128 = por %p126, %p127
    %s129 = ssub.s32 %s11, %s18
    %p130 = scmp.eq.s32.totalorder %s129, 0
    %s132 = sadd.s32 %s131, 1
    %s133 = scalar_select %p130, %s131, %s132
    %p136 = pneg %p130
    %p137 = scmp.eq.s32.totalorder %s11, 1
    %p138 = por %p136, %p137
    %p139 = scmp.ne.s32.totalorder %s131, %s134
    %p140 = scmp.eq.s32.totalorder %s11, 0
    %p141 = por %p139, %p140
    %p142 = scmp.ne.s32.totalorder %s131, %s134
    %p143 = scmp.eq.s32.totalorder %s16, 1
    %p144 = por %p142, %p143
    %p145 = scmp.ne.s32.totalorder %s134, %s135
    %p146 = scmp.eq.s32.totalorder %s16, 0
    %p147 = por %p145, %p146
    %p148 = scmp.ne.s32.totalorder %s134, %s135
    %p149 = scmp.eq.s32.totalorder %s17, 1
    %p150 = por %p148, %p149
    %p152 = scmp.ne.s32.totalorder %s135, %s151
    %p153 = scmp.eq.s32.totalorder %s17, 0
    %p154 = por %p152, %p153
    %p155 = scmp.le.s32.totalorder 1, %s11
    %p156 = scmp.lt.s32.totalorder %s11, 3
    %p157 = pnand %p155, %p156
    %p158 = pneg %p157
    // Predicated region
    $region9: #{tpu_custom_call.1} parent=5 // pred_check
      _
    $region10: #{tpu_custom_call.1} parent=5 // pred_check_branch
      %160 = sbr.rel (%p157) target = $region12
    $region11: #{tpu_custom_call.1} parent=5 // pred_region
      %s161 = ssub.s32 %s11, 1
      // Predicated region
      $region13: #{tpu_custom_call.1} parent=11 // pred_check
        %p162 = pneg %p58
      $region14: #{tpu_custom_call.1} parent=11 // pred_check_branch
        %164 = sbr.rel (%p162) target = $region16
      $region15: #{tpu_custom_call.1} parent=11 // pred_region
        _
      $region16: #{tpu_custom_call.1} parent=11 // pred_fallthru
        _
      // Predicated region
      $region17: #{tpu_custom_call.1} parent=11 // pred_check
        %p165 = pneg %p79
      $region18: #{tpu_custom_call.1} parent=11 // pred_check_branch
        %167 = sbr.rel (%p165) target = $region20
      $region19: #{tpu_custom_call.1} parent=11 // pred_region
        _
      $region20: #{tpu_custom_call.1} parent=11 // pred_fallthru
        _
      // Predicated region
      $region21: #{tpu_custom_call.1} parent=11 // pred_check
        %p168 = pneg %p100
      $region22: #{tpu_custom_call.1} parent=11 // pred_check_branch
        %170 = sbr.rel (%p168) target = $region24
      $region23: #{tpu_custom_call.1} parent=11 // pred_region
        _
      $region24: #{tpu_custom_call.1} parent=11 // pred_fallthru
        _
      // Predicated region
      $region25: #{tpu_custom_call.1} parent=11 // pred_check
        %p171 = pneg %p121
      $region26: #{tpu_custom_call.1} parent=11 // pred_check_branch
        %173 = sbr.rel (%p171) target = $region28
      $region27: #{tpu_custom_call.1} parent=11 // pred_region
        _
      $region28: #{tpu_custom_call.1} parent=11 // pred_fallthru
        _
    $region12: #{tpu_custom_call.1} parent=5 // pred_fallthru
      _
    %p174 = scmp.lt.s32.totalorder %s11, 2
    // Predicated region
    $region29: #{tpu_custom_call.1} parent=5 // pred_check
      %p175 = pneg %p174
    $region30: #{tpu_custom_call.1} parent=5 // pred_check_branch
      %177 = sbr.rel (%p175) target = $region32
    $region31: #{tpu_custom_call.1} parent=5 // pred_region
      // Predicated region
      $region33: #{tpu_custom_call.1} parent=31 // pred_check
        %p178 = pneg %p31
      $region34: #{tpu_custom_call.1} parent=31 // pred_check_branch
        %180 = sbr.rel (%p178) target = $region36
      $region35: #{tpu_custom_call.1} parent=31 // pred_region
        %p181 = scmp.lt.s32.totalorder %s11, 1
        %s182 = scalar_select %p181, %s11, 1
        %s183 = smul.addr %s182, 32
        %s184 = smul.addr %s183, 8
        %s185 = scalar_lea.vmem %s0, %s184
      $region36: #{tpu_custom_call.1} parent=31 // pred_fallthru
        _
    $region32: #{tpu_custom_call.1} parent=5 // pred_fallthru
      _
    %p186 = scmp.le.s32.totalorder 1, %s11
    %p187 = scmp.lt.s32.totalorder %s11, 3
    %p188 = pnand %p186, %p187
    %p189 = pneg %p188
    // Predicated region
    $region37: #{tpu_custom_call.1} parent=5 // pred_check
      _
    $region38: #{tpu_custom_call.1} parent=5 // pred_check_branch
      %191 = sbr.rel (%p188) target = $region40
    $region39: #{tpu_custom_call.1} parent=5 // pred_region
      %s192 = ssub.s32 %s11, 1
      %p193 = scmp.lt.s32.totalorder %s16, 1
      %s194 = scalar_select %p193, %s16, 1
      %s195 = smul.addr %s194, 32
      %s196 = smul.addr %s195, 8
      %s197 = scalar_lea.vmem %s0, %s196
      %p198 = pneg %p37
      %p199 = pneg %p34
      %p200 = pneg %p58
      %p201 = pneg %p55
      %p202 = pneg %p79
      %p203 = pneg %p76
      %p204 = pneg %p100
      %p205 = pneg %p97
      %p206 = pneg %p121
      %p207 = pneg %p118
      %p208 = pneg %p147
      %p209 = pneg %p144
      %p210 = scmp.lt.s32.totalorder %s16, 1
      %s211 = scalar_select %p210, %s16, 1
      %s212 = smul.addr %s211, 32
      %s213 = smul.addr %s212, 8
      %s214 = scalar_lea.vmem %s5, %s213
      %p215 = scmp.lt.s32.totalorder %s16, 1
      %s216 = scalar_select %p215, %s16, 1
      %s217 = smul.addr %s216, 32
      %s218 = smul.addr %s217, 8
      %s219 = scalar_lea.vmem %s0, %s218
      %p220 = scmp.lt.s32.totalorder %s16, 1
      %s221 = scalar_select %p220, %s16, 1
      %s222 = smul.addr %s221, 32
      %s223 = smul.addr %s222, 8
      %s224 = scalar_lea.vmem %s5, %s223
      %vm225 = vcmask 31744
      %226 = vst.msk [vmem:[#allocation2] sm:$0xff] %vm225, 0.0
      %227 = vst.msk [vmem:[#allocation2 + $0x8] sm:$0xff] %vm225, 0.0
      %228 = vst.msk [vmem:[#allocation2 + $0x10] sm:$0xff] %vm225, 0.0
      %vm229 = vcmask 24576
      %230 = vst.msk [vmem:[#allocation2 + $0x18] sm:$0x1] %vm229, 0.0
      %s231 = scalar_lea.vmem [#allocation2], 544
      %232 = vst.msk [vmem:[%s231] sm:$0xff] %vm225, 0.0
      %233 = vst.msk [vmem:[%s231 + $0x8] sm:$0xff] %vm225, 0.0
      %234 = vst.msk [vmem:[%s231 + $0x10] sm:$0xff] %vm225, 0.0
      %235 = vst.msk [vmem:[%s231 + $0x18] sm:$0x1] %vm229, 0.0
      %236 = vst.msk [vmem:[#allocation2 + $0x7] sm:$0x1] %vm229, 0.0
      %237 = vst.msk [vmem:[#allocation2 + $0x27] sm:$0x1] %vm229, 0.0
      %238 = vst.msk [vmem:[#allocation2 + $0x47] sm:$0x1] %vm229, 0.0
      %239 = vst.msk [vmem:[#allocation2 + $0x67] sm:$0x1] %vm229, 0.0
      %240 = vst.msk [vmem:[#allocation2 + $0x87] sm:$0x1] %vm229, 0.0
      %241 = vst.msk [vmem:[#allocation2 + $0xa7] sm:$0x1] %vm229, 0.0
      %242 = vst.msk [vmem:[#allocation2 + $0xc7] sm:$0x1] %vm229, 0.0
      %243 = vst.msk [vmem:[#allocation2 + $0xe7] sm:$0x1] %vm229, 0.0
      %244 = vst.msk [vmem:[#allocation2 + $0x107] sm:$0x1] %vm229, 0.0
      %245 = vst.msk [vmem:[#allocation2 + $0x127] sm:$0x1] %vm229, 0.0
      %246 = vst.msk [vmem:[#allocation2 + $0x147] sm:$0x1] %vm229, 0.0
      %247 = vst.msk [vmem:[#allocation2 + $0x167] sm:$0x1] %vm229, 0.0
      %248 = vst.msk [vmem:[#allocation2 + $0x187] sm:$0x1] %vm229, 0.0
      %249 = vst.msk [vmem:[#allocation2 + $0x1a7] sm:$0x1] %vm229, 0.0
      %250 = vst.msk [vmem:[#allocation2 + $0x1c7] sm:$0x1] %vm229, 0.0
      %251 = vst.msk [vmem:[#allocation2 + $0x1e7] sm:$0x1] %vm229, 0.0
      %252 = vst.msk [vmem:[#allocation2 + $0x207] sm:$0x1] %vm229, 0.0
      %253 = vst.msk [vmem:[#allocation2 + $0x227] sm:$0x1] %vm229, 0.0
      %254 = vst.msk [vmem:[#allocation2 + $0x18] sm:$0x1] %vm229, 0.0
      %255 = vst.msk [vmem:[#allocation2 + $0x38] sm:$0x1] %vm229, 0.0
      %256 = vst.msk [vmem:[#allocation2 + $0x58] sm:$0x1] %vm229, 0.0
      %257 = vst.msk [vmem:[#allocation2 + $0x78] sm:$0x1] %vm229, 0.0
      %258 = vst.msk [vmem:[#allocation2 + $0x98] sm:$0x1] %vm229, 0.0
      %259 = vst.msk [vmem:[#allocation2 + $0xb8] sm:$0x1] %vm229, 0.0
      %260 = vst.msk [vmem:[#allocation2 + $0xd8] sm:$0x1] %vm229, 0.0
      %261 = vst.msk [vmem:[#allocation2 + $0xf8] sm:$0x1] %vm229, 0.0
      %262 = vst.msk [vmem:[#allocation2 + $0x118] sm:$0x1] %vm229, 0.0
      %263 = vst.msk [vmem:[#allocation2 + $0x138] sm:$0x1] %vm229, 0.0
      %264 = vst.msk [vmem:[#allocation2 + $0x158] sm:$0x1] %vm229, 0.0
      %265 = vst.msk [vmem:[#allocation2 + $0x178] sm:$0x1] %vm229, 0.0
      %266 = vst.msk [vmem:[#allocation2 + $0x198] sm:$0x1] %vm229, 0.0
      %267 = vst.msk [vmem:[#allocation2 + $0x1b8] sm:$0x1] %vm229, 0.0
      %268 = vst.msk [vmem:[#allocation2 + $0x1d8] sm:$0x1] %vm229, 0.0
      %269 = vst.msk [vmem:[#allocation2 + $0x1f8] sm:$0x1] %vm229, 0.0
      %270 = vst.msk [vmem:[#allocation2 + $0x218] sm:$0x1] %vm229, 0.0
      %271 = vst.msk [vmem:[#allocation2 + $0x238] sm:$0x1] %vm229, 0.0
      %v272 = vld [vmem:[%s219] sm:$0xff]
      %v273 = vld [vmem:[%s219 + $0x8] sm:$0xff]
      %v274 = vld [vmem:[%s219 + $0x10] sm:$0xff]
      %v275 = vld [vmem:[%s219 + $0x18] sm:$0xff]
      %v276 = vld [vmem:[%s219 + $0x20] sm:$0xff]
      %v277 = vld [vmem:[%s219 + $0x28] sm:$0xff]
      %v278 = vld [vmem:[%s219 + $0x30] sm:$0xff]
      %v279 = vld [vmem:[%s219 + $0x38] sm:$0xff]
      %v280 = vld [vmem:[%s219 + $0x40] sm:$0xff]
      %v281 = vld [vmem:[%s219 + $0x48] sm:$0xff]
      %v282 = vld [vmem:[%s219 + $0x50] sm:$0xff]
      %v283 = vld [vmem:[%s219 + $0x58] sm:$0xff]
      %v284 = vld [vmem:[%s219 + $0x60] sm:$0xff]
      %v285 = vld [vmem:[%s219 + $0x68] sm:$0xff]
      %v286 = vld [vmem:[%s219 + $0x70] sm:$0xff]
      %v287 = vld [vmem:[%s219 + $0x78] sm:$0xff]
      %v288 = vld [vmem:[%s219 + $0x80] sm:$0xff]
      %v289 = vld [vmem:[%s219 + $0x88] sm:$0xff]
      %v290 = vld [vmem:[%s219 + $0x90] sm:$0xff]
      %v291 = vld [vmem:[%s219 + $0x98] sm:$0xff]
      %v292 = vld [vmem:[%s219 + $0xa0] sm:$0xff]
      %v293 = vld [vmem:[%s219 + $0xa8] sm:$0xff]
      %v294 = vld [vmem:[%s219 + $0xb0] sm:$0xff]
      %v295 = vld [vmem:[%s219 + $0xb8] sm:$0xff]
      %v296 = vld [vmem:[%s219 + $0xc0] sm:$0xff]
      %v297 = vld [vmem:[%s219 + $0xc8] sm:$0xff]
      %v298 = vld [vmem:[%s219 + $0xd0] sm:$0xff]
      %v299 = vld [vmem:[%s219 + $0xd8] sm:$0xff]
      %v300 = vld [vmem:[%s219 + $0xe0] sm:$0xff]
      %v301 = vld [vmem:[%s219 + $0xe8] sm:$0xff]
      %v302 = vld [vmem:[%s219 + $0xf0] sm:$0xff]
      %v303 = vld [vmem:[%s219 + $0xf8] sm:$0xff]
      %s304 = scalar_lea.vmem [#allocation2], 32
      %305 = vst.msk [vmem:[%s304 + $0x8] sm:$0xff] %vm225, %v272
      %306 = vst.msk [vmem:[%s304 + $0x10] sm:$0xff] %vm225, %v273
      %307 = vst.msk [vmem:[%s304 + $0x28] sm:$0xff] %vm225, %v274
      %308 = vst.msk [vmem:[%s304 + $0x30] sm:$0xff] %vm225, %v275
      %309 = vst.msk [vmem:[%s304 + $0x48] sm:$0xff] %vm225, %v276
      %310 = vst.msk [vmem:[%s304 + $0x50] sm:$0xff] %vm225, %v277
      %311 = vst.msk [vmem:[%s304 + $0x68] sm:$0xff] %vm225, %v278
      %312 = vst.msk [vmem:[%s304 + $0x70] sm:$0xff] %vm225, %v279
      %313 = vst.msk [vmem:[%s304 + $0x88] sm:$0xff] %vm225, %v280
      %314 = vst.msk [vmem:[%s304 + $0x90] sm:$0xff] %vm225, %v281
      %315 = vst.msk [vmem:[%s304 + $0xa8] sm:$0xff] %vm225, %v282
      %316 = vst.msk [vmem:[%s304 + $0xb0] sm:$0xff] %vm225, %v283
      %317 = vst.msk [vmem:[%s304 + $0xc8] sm:$0xff] %vm225, %v284
      %318 = vst.msk [vmem:[%s304 + $0xd0] sm:$0xff] %vm225, %v285
      %319 = vst.msk [vmem:[%s304 + $0xe8] sm:$0xff] %vm225, %v286
      %320 = vst.msk [vmem:[%s304 + $0xf0] sm:$0xff] %vm225, %v287
      %321 = vst.msk [vmem:[%s304 + $0x108] sm:$0xff] %vm225, %v288
      %322 = vst.msk [vmem:[%s304 + $0x110] sm:$0xff] %vm225, %v289
      %323 = vst.msk [vmem:[%s304 + $0x128] sm:$0xff] %vm225, %v290
      %324 = vst.msk [vmem:[%s304 + $0x130] sm:$0xff] %vm225, %v291
      %325 = vst.msk [vmem:[%s304 + $0x148] sm:$0xff] %vm225, %v292
      %326 = vst.msk [vmem:[%s304 + $0x150] sm:$0xff] %vm225, %v293
      %327 = vst.msk [vmem:[%s304 + $0x168] sm:$0xff] %vm225, %v294
      %328 = vst.msk [vmem:[%s304 + $0x170] sm:$0xff] %vm225, %v295
      %329 = vst.msk [vmem:[%s304 + $0x188] sm:$0xff] %vm225, %v296
      %330 = vst.msk [vmem:[%s304 + $0x190] sm:$0xff] %vm225, %v297
      %331 = vst.msk [vmem:[%s304 + $0x1a8] sm:$0xff] %vm225, %v298
      %332 = vst.msk [vmem:[%s304 + $0x1b0] sm:$0xff] %vm225, %v299
      %333 = vst.msk [vmem:[%s304 + $0x1c8] sm:$0xff] %vm225, %v300
      %334 = vst.msk [vmem:[%s304 + $0x1d0] sm:$0xff] %vm225, %v301
      %335 = vst.msk [vmem:[%s304 + $0x1e8] sm:$0xff] %vm225, %v302
      %336 = vst.msk [vmem:[%s304 + $0x1f0] sm:$0xff] %vm225, %v303
      %v337 = vld [vmem:[#allocation2 + $0x7] sm:$0xff]
      %v338 = vld [vmem:[#allocation2 + $0xf] sm:$0xff]
      %v339 = vld [vmem:[#allocation2 + $0x27] sm:$0xff]
      %v340 = vld [vmem:[#allocation2 + $0x2f] sm:$0xff]
      %v341 = vld [vmem:[#allocation2 + $0x47] sm:$0xff]
      %v342 = vld [vmem:[#allocation2 + $0x4f] sm:$0xff]
      %v343 = vld [vmem:[#allocation2 + $0x67] sm:$0xff]
      %v344 = vld [vmem:[#allocation2 + $0x6f] sm:$0xff]
      %v345 = vld [vmem:[#allocation2 + $0x87] sm:$0xff]
      %v346 = vld [vmem:[#allocation2 + $0x8f] sm:$0xff]
      %v347 = vld [vmem:[#allocation2 + $0xa7] sm:$0xff]
      %v348 = vld [vmem:[#allocation2 + $0xaf] sm:$0xff]
      %v349 = vld [vmem:[#allocation2 + $0xc7] sm:$0xff]
      %v350 = vld [vmem:[#allocation2 + $0xcf] sm:$0xff]
      %v351 = vld [vmem:[#allocation2 + $0xe7] sm:$0xff]
      %v352 = vld [vmem:[#allocation2 + $0xef] sm:$0xff]
      %v353 = vld [vmem:[#allocation2 + $0x107] sm:$0xff]
      %v354 = vld [vmem:[#allocation2 + $0x10f] sm:$0xff]
      %v355 = vld [vmem:[#allocation2 + $0x127] sm:$0xff]
      %v356 = vld [vmem:[#allocation2 + $0x12f] sm:$0xff]
      %v357 = vld [vmem:[#allocation2 + $0x147] sm:$0xff]
      %v358 = vld [vmem:[#allocation2 + $0x14f] sm:$0xff]
      %v359 = vld [vmem:[#allocation2 + $0x167] sm:$0xff]
      %v360 = vld [vmem:[#allocation2 + $0x16f] sm:$0xff]
      %v361 = vld [vmem:[#allocation2 + $0x187] sm:$0xff]
      %v362 = vld [vmem:[#allocation2 + $0x18f] sm:$0xff]
      %v363 = vld [vmem:[#allocation2 + $0x1a7] sm:$0xff]
      %v364 = vld [vmem:[#allocation2 + $0x1af] sm:$0xff]
      %v365 = vld [vmem:[#allocation2 + $0x1c7] sm:$0xff]
      %v366 = vld [vmem:[#allocation2 + $0x1cf] sm:$0xff]
      %v367 = vld [vmem:[#allocation2 + $0x1e7] sm:$0xff]
      %v368 = vld [vmem:[#allocation2 + $0x1ef] sm:$0xff]
      %369 = vst.msk [vmem:[#allocation4] sm:$0xff] %vm225, %v337
      %370 = vst.msk [vmem:[#allocation4 + $0x8] sm:$0xff] %vm225, %v338
      %371 = vst.msk [vmem:[#allocation4 + $0x10] sm:$0xff] %vm225, %v339
      %372 = vst.msk [vmem:[#allocation4 + $0x18] sm:$0xff] %vm225, %v340
      %373 = vst.msk [vmem:[#allocation4 + $0x20] sm:$0xff] %vm225, %v341
      %374 = vst.msk [vmem:[#allocation4 + $0x28] sm:$0xff] %vm225, %v342
      %375 = vst.msk [vmem:[#allocation4 + $0x30] sm:$0xff] %vm225, %v343
      %376 = vst.msk [vmem:[#allocation4 + $0x38] sm:$0xff] %vm225, %v344
      %377 = vst.msk [vmem:[#allocation4 + $0x40] sm:$0xff] %vm225, %v345
      %378 = vst.msk [vmem:[#allocation4 + $0x48] sm:$0xff] %vm225, %v346
      %379 = vst.msk [vmem:[#allocation4 + $0x50] sm:$0xff] %vm225, %v347
      %380 = vst.msk [vmem:[#allocation4 + $0x58] sm:$0xff] %vm225, %v348
      %381 = vst.msk [vmem:[#allocation4 + $0x60] sm:$0xff] %vm225, %v349
      %382 = vst.msk [vmem:[#allocation4 + $0x68] sm:$0xff] %vm225, %v350
      %383 = vst.msk [vmem:[#allocation4 + $0x70] sm:$0xff] %vm225, %v351
      %384 = vst.msk [vmem:[#allocation4 + $0x78] sm:$0xff] %vm225, %v352
      %385 = vst.msk [vmem:[#allocation4 + $0x80] sm:$0xff] %vm225, %v353
      %386 = vst.msk [vmem:[#allocation4 + $0x88] sm:$0xff] %vm225, %v354
      %387 = vst.msk [vmem:[#allocation4 + $0x90] sm:$0xff] %vm225, %v355
      %388 = vst.msk [vmem:[#allocation4 + $0x98] sm:$0xff] %vm225, %v356
      %389 = vst.msk [vmem:[#allocation4 + $0xa0] sm:$0xff] %vm225, %v357
      %390 = vst.msk [vmem:[#allocation4 + $0xa8] sm:$0xff] %vm225, %v358
      %391 = vst.msk [vmem:[#allocation4 + $0xb0] sm:$0xff] %vm225, %v359
      %392 = vst.msk [vmem:[#allocation4 + $0xb8] sm:$0xff] %vm225, %v360
      %393 = vst.msk [vmem:[#allocation4 + $0xc0] sm:$0xff] %vm225, %v361
      %394 = vst.msk [vmem:[#allocation4 + $0xc8] sm:$0xff] %vm225, %v362
      %395 = vst.msk [vmem:[#allocation4 + $0xd0] sm:$0xff] %vm225, %v363
      %396 = vst.msk [vmem:[#allocation4 + $0xd8] sm:$0xff] %vm225, %v364
      %397 = vst.msk [vmem:[#allocation4 + $0xe0] sm:$0xff] %vm225, %v365
      %398 = vst.msk [vmem:[#allocation4 + $0xe8] sm:$0xff] %vm225, %v366
      %399 = vst.msk [vmem:[#allocation4 + $0xf0] sm:$0xff] %vm225, %v367
      %400 = vst.msk [vmem:[#allocation4 + $0xf8] sm:$0xff] %vm225, %v368
      %v401 = vld [vmem:[#allocation2 + $0x8] sm:$0xff]
      %v402 = vld [vmem:[#allocation2 + $0x10] sm:$0xff]
      %v403 = vld [vmem:[#allocation2 + $0x28] sm:$0xff]
      %v404 = vld [vmem:[#allocation2 + $0x30] sm:$0xff]
      %v405 = vld [vmem:[#allocation2 + $0x48] sm:$0xff]
      %v406 = vld [vmem:[#allocation2 + $0x50] sm:$0xff]
      %v407 = vld [vmem:[#allocation2 + $0x68] sm:$0xff]
      %v408 = vld [vmem:[#allocation2 + $0x70] sm:$0xff]
      %v409 = vld [vmem:[#allocation2 + $0x88] sm:$0xff]
      %v410 = vld [vmem:[#allocation2 + $0x90] sm:$0xff]
      %v411 = vld [vmem:[#allocation2 + $0xa8] sm:$0xff]
      %v412 = vld [vmem:[#allocation2 + $0xb0] sm:$0xff]
      %v413 = vld [vmem:[#allocation2 + $0xc8] sm:$0xff]
      %v414 = vld [vmem:[#allocation2 + $0xd0] sm:$0xff]
      %v415 = vld [vmem:[#allocation2 + $0xe8] sm:$0xff]
      %v416 = vld [vmem:[#allocation2 + $0xf0] sm:$0xff]
      %v417 = vld [vmem:[#allocation2 + $0x108] sm:$0xff]
      %v418 = vld [vmem:[#allocation2 + $0x110] sm:$0xff]
      %v419 = vld [vmem:[#allocation2 + $0x128] sm:$0xff]
      %v420 = vld [vmem:[#allocation2 + $0x130] sm:$0xff]
      %v421 = vld [vmem:[#allocation2 + $0x148] sm:$0xff]
      %v422 = vld [vmem:[#allocation2 + $0x150] sm:$0xff]
      %v423 = vld [vmem:[#allocation2 + $0x168] sm:$0xff]
      %v424 = vld [vmem:[#allocation2 + $0x170] sm:$0xff]
      %v425 = vld [vmem:[#allocation2 + $0x188] sm:$0xff]
      %v426 = vld [vmem:[#allocation2 + $0x190] sm:$0xff]
      %v427 = vld [vmem:[#allocation2 + $0x1a8] sm:$0xff]
      %v428 = vld [vmem:[#allocation2 + $0x1b0] sm:$0xff]
      %v429 = vld [vmem:[#allocation2 + $0x1c8] sm:$0xff]
      %v430 = vld [vmem:[#allocation2 + $0x1d0] sm:$0xff]
      %v431 = vld [vmem:[#allocation2 + $0x1e8] sm:$0xff]
      %v432 = vld [vmem:[#allocation2 + $0x1f0] sm:$0xff]
      %465 = vrot.lane.b32.xlu0 %v401, 4
      %v466 = vpop.permute.xlu0 %465
      %467 = vrot.lane.b32.xlu0 %v402, 4
      %v468 = vpop.permute.xlu0 %467
      %469 = vrot.lane.b32.xlu0 %v403, 4
      %v470 = vpop.permute.xlu0 %469
      %471 = vrot.lane.b32.xlu0 %v404, 4
      %v472 = vpop.permute.xlu0 %471
      %473 = vrot.lane.b32.xlu0 %v405, 4
      %v474 = vpop.permute.xlu0 %473
      %475 = vrot.lane.b32.xlu0 %v406, 4
      %v476 = vpop.permute.xlu0 %475
      %477 = vrot.lane.b32.xlu0 %v407, 4
      %v478 = vpop.permute.xlu0 %477
      %479 = vrot.lane.b32.xlu0 %v408, 4
      %v480 = vpop.permute.xlu0 %479
      %481 = vrot.lane.b32.xlu0 %v409, 4
      %v482 = vpop.permute.xlu0 %481
      %483 = vrot.lane.b32.xlu0 %v410, 4
      %v484 = vpop.permute.xlu0 %483
      %485 = vrot.lane.b32.xlu0 %v411, 4
      %v486 = vpop.permute.xlu0 %485
      %487 = vrot.lane.b32.xlu0 %v412, 4
      %v488 = vpop.permute.xlu0 %487
      %489 = vrot.lane.b32.xlu0 %v413, 4
      %v490 = vpop.permute.xlu0 %489
      %491 = vrot.lane.b32.xlu0 %v414, 4
      %v492 = vpop.permute.xlu0 %491
      %493 = vrot.lane.b32.xlu0 %v415, 4
      %v494 = vpop.permute.xlu0 %493
      %495 = vrot.lane.b32.xlu0 %v416, 4
      %v496 = vpop.permute.xlu0 %495
      %497 = vrot.lane.b32.xlu0 %v417, 4
      %v498 = vpop.permute.xlu0 %497
      %499 = vrot.lane.b32.xlu0 %v418, 4
      %v500 = vpop.permute.xlu0 %499
      %501 = vrot.lane.b32.xlu0 %v419, 4
      %v502 = vpop.permute.xlu0 %501
      %503 = vrot.lane.b32.xlu0 %v420, 4
      %v504 = vpop.permute.xlu0 %503
      %505 = vrot.lane.b32.xlu0 %v421, 4
      %v506 = vpop.permute.xlu0 %505
      %507 = vrot.lane.b32.xlu0 %v422, 4
      %v508 = vpop.permute.xlu0 %507
      %509 = vrot.lane.b32.xlu0 %v423, 4
      %v510 = vpop.permute.xlu0 %509
      %511 = vrot.lane.b32.xlu0 %v424, 4
      %v512 = vpop.permute.xlu0 %511
      %513 = vrot.lane.b32.xlu0 %v425, 4
      %v514 = vpop.permute.xlu0 %513
      %515 = vrot.lane.b32.xlu0 %v426, 4
      %v516 = vpop.permute.xlu0 %515
      %517 = vrot.lane.b32.xlu0 %v427, 4
      %v518 = vpop.permute.xlu0 %517
      %519 = vrot.lane.b32.xlu0 %v428, 4
      %v520 = vpop.permute.xlu0 %519
      %521 = vrot.lane.b32.xlu0 %v429, 4
      %v522 = vpop.permute.xlu0 %521
      %523 = vrot.lane.b32.xlu0 %v430, 4
      %v524 = vpop.permute.xlu0 %523
      %525 = vrot.lane.b32.xlu0 %v431, 4
      %v526 = vpop.permute.xlu0 %525
      %527 = vrot.lane.b32.xlu0 %v432, 4
      %v528 = vpop.permute.xlu0 %527
      %vm561 = vcmask 64544
      %562 = vst.msk [vmem:[#allocation4] sm:$0xff] %vm561, %v466
      %563 = vst.msk [vmem:[#allocation4 + $0x8] sm:$0xff] %vm561, %v468
      %564 = vst.msk [vmem:[#allocation4 + $0x10] sm:$0xff] %vm561, %v470
      %565 = vst.msk [vmem:[#allocation4 + $0x18] sm:$0xff] %vm561, %v472
      %566 = vst.msk [vmem:[#allocation4 + $0x20] sm:$0xff] %vm561, %v474
      %567 = vst.msk [vmem:[#allocation4 + $0x28] sm:$0xff] %vm561, %v476
      %568 = vst.msk [vmem:[#allocation4 + $0x30] sm:$0xff] %vm561, %v478
      %569 = vst.msk [vmem:[#allocation4 + $0x38] sm:$0xff] %vm561, %v480
      %570 = vst.msk [vmem:[#allocation4 + $0x40] sm:$0xff] %vm561, %v482
      %571 = vst.msk [vmem:[#allocation4 + $0x48] sm:$0xff] %vm561, %v484
      %572 = vst.msk [vmem:[#allocation4 + $0x50] sm:$0xff] %vm561, %v486
      %573 = vst.msk [vmem:[#allocation4 + $0x58] sm:$0xff] %vm561, %v488
      %574 = vst.msk [vmem:[#allocation4 + $0x60] sm:$0xff] %vm561, %v490
      %575 = vst.msk [vmem:[#allocation4 + $0x68] sm:$0xff] %vm561, %v492
      %576 = vst.msk [vmem:[#allocation4 + $0x70] sm:$0xff] %vm561, %v494
      %577 = vst.msk [vmem:[#allocation4 + $0x78] sm:$0xff] %vm561, %v496
      %578 = vst.msk [vmem:[#allocation4 + $0x80] sm:$0xff] %vm561, %v498
      %579 = vst.msk [vmem:[#allocation4 + $0x88] sm:$0xff] %vm561, %v500
      %580 = vst.msk [vmem:[#allocation4 + $0x90] sm:$0xff] %vm561, %v502
      %581 = vst.msk [vmem:[#allocation4 + $0x98] sm:$0xff] %vm561, %v504
      %582 = vst.msk [vmem:[#allocation4 + $0xa0] sm:$0xff] %vm561, %v506
      %583 = vst.msk [vmem:[#allocation4 + $0xa8] sm:$0xff] %vm561, %v508
      %584 = vst.msk [vmem:[#allocation4 + $0xb0] sm:$0xff] %vm561, %v510
      %585 = vst.msk [vmem:[#allocation4 + $0xb8] sm:$0xff] %vm561, %v512
      %586 = vst.msk [vmem:[#allocation4 + $0xc0] sm:$0xff] %vm561, %v514
      %587 = vst.msk [vmem:[#allocation4 + $0xc8] sm:$0xff] %vm561, %v516
      %588 = vst.msk [vmem:[#allocation4 + $0xd0] sm:$0xff] %vm561, %v518
      %589 = vst.msk [vmem:[#allocation4 + $0xd8] sm:$0xff] %vm561, %v520
      %590 = vst.msk [vmem:[#allocation4 + $0xe0] sm:$0xff] %vm561, %v522
      %591 = vst.msk [vmem:[#allocation4 + $0xe8] sm:$0xff] %vm561, %v524
      %592 = vst.msk [vmem:[#allocation4 + $0xf0] sm:$0xff] %vm561, %v526
      %593 = vst.msk [vmem:[#allocation4 + $0xf8] sm:$0xff] %vm561, %v528
      %v594 = vld [vmem:[#allocation2 + $0x9] sm:$0xff]
      %v595 = vld [vmem:[#allocation2 + $0x11] sm:$0xff]
      %v596 = vld [vmem:[#allocation2 + $0x29] sm:$0xff]
      %v597 = vld [vmem:[#allocation2 + $0x31] sm:$0xff]
      %v598 = vld [vmem:[#allocation2 + $0x49] sm:$0xff]
      %v599 = vld [vmem:[#allocation2 + $0x51] sm:$0xff]
      %v600 = vld [vmem:[#allocation2 + $0x69] sm:$0xff]
      %v601 = vld [vmem:[#allocation2 + $0x71] sm:$0xff]
      %v602 = vld [vmem:[#allocation2 + $0x89] sm:$0xff]
      %v603 = vld [vmem:[#allocation2 + $0x91] sm:$0xff]
      %v604 = vld [vmem:[#allocation2 + $0xa9] sm:$0xff]
      %v605 = vld [vmem:[#allocation2 + $0xb1] sm:$0xff]
      %v606 = vld [vmem:[#allocation2 + $0xc9] sm:$0xff]
      %v607 = vld [vmem:[#allocation2 + $0xd1] sm:$0xff]
      %v608 = vld [vmem:[#allocation2 + $0xe9] sm:$0xff]
      %v609 = vld [vmem:[#allocation2 + $0xf1] sm:$0xff]
      %v610 = vld [vmem:[#allocation2 + $0x109] sm:$0xff]
      %v611 = vld [vmem:[#allocation2 + $0x111] sm:$0xff]
      %v612 = vld [vmem:[#allocation2 + $0x129] sm:$0xff]
      %v613 = vld [vmem:[#allocation2 + $0x131] sm:$0xff]
      %v614 = vld [vmem:[#allocation2 + $0x149] sm:$0xff]
      %v615 = vld [vmem:[#allocation2 + $0x151] sm:$0xff]
      %v616 = vld [vmem:[#allocation2 + $0x169] sm:$0xff]
      %v617 = vld [vmem:[#allocation2 + $0x171] sm:$0xff]
      %v618 = vld [vmem:[#allocation2 + $0x189] sm:$0xff]
      %v619 = vld [vmem:[#allocation2 + $0x191] sm:$0xff]
      %v620 = vld [vmem:[#allocation2 + $0x1a9] sm:$0xff]
      %v621 = vld [vmem:[#allocation2 + $0x1b1] sm:$0xff]
      %v622 = vld [vmem:[#allocation2 + $0x1c9] sm:$0xff]
      %v623 = vld [vmem:[#allocation2 + $0x1d1] sm:$0xff]
      %v624 = vld [vmem:[#allocation2 + $0x1e9] sm:$0xff]
      %v625 = vld [vmem:[#allocation2 + $0x1f1] sm:$0xff]
      %658 = vrot.lane.b32.xlu0 %v594, 8
      %v659 = vpop.permute.xlu0 %658
      %660 = vrot.lane.b32.xlu0 %v595, 8
      %v661 = vpop.permute.xlu0 %660
      %662 = vrot.lane.b32.xlu0 %v596, 8
      %v663 = vpop.permute.xlu0 %662
      %664 = vrot.lane.b32.xlu0 %v597, 8
      %v665 = vpop.permute.xlu0 %664
      %666 = vrot.lane.b32.xlu0 %v598, 8
      %v667 = vpop.permute.xlu0 %666
      %668 = vrot.lane.b32.xlu0 %v599, 8
      %v669 = vpop.permute.xlu0 %668
      %670 = vrot.lane.b32.xlu0 %v600, 8
      %v671 = vpop.permute.xlu0 %670
      %672 = vrot.lane.b32.xlu0 %v601, 8
      %v673 = vpop.permute.xlu0 %672
      %674 = vrot.lane.b32.xlu0 %v602, 8
      %v675 = vpop.permute.xlu0 %674
      %676 = vrot.lane.b32.xlu0 %v603, 8
      %v677 = vpop.permute.xlu0 %676
      %678 = vrot.lane.b32.xlu0 %v604, 8
      %v679 = vpop.permute.xlu0 %678
      %680 = vrot.lane.b32.xlu0 %v605, 8
      %v681 = vpop.permute.xlu0 %680
      %682 = vrot.lane.b32.xlu0 %v606, 8
      %v683 = vpop.permute.xlu0 %682
      %684 = vrot.lane.b32.xlu0 %v607, 8
      %v685 = vpop.permute.xlu0 %684
      %686 = vrot.lane.b32.xlu0 %v608, 8
      %v687 = vpop.permute.xlu0 %686
      %688 = vrot.lane.b32.xlu0 %v609, 8
      %v689 = vpop.permute.xlu0 %688
      %690 = vrot.lane.b32.xlu0 %v610, 8
      %v691 = vpop.permute.xlu0 %690
      %692 = vrot.lane.b32.xlu0 %v611, 8
      %v693 = vpop.permute.xlu0 %692
      %694 = vrot.lane.b32.xlu0 %v612, 8
      %v695 = vpop.permute.xlu0 %694
      %696 = vrot.lane.b32.xlu0 %v613, 8
      %v697 = vpop.permute.xlu0 %696
      %698 = vrot.lane.b32.xlu0 %v614, 8
      %v699 = vpop.permute.xlu0 %698
      %700 = vrot.lane.b32.xlu0 %v615, 8
      %v701 = vpop.permute.xlu0 %700
      %702 = vrot.lane.b32.xlu0 %v616, 8
      %v703 = vpop.permute.xlu0 %702
      %704 = vrot.lane.b32.xlu0 %v617, 8
      %v705 = vpop.permute.xlu0 %704
      %706 = vrot.lane.b32.xlu0 %v618, 8
      %v707 = vpop.permute.xlu0 %706
      %708 = vrot.lane.b32.xlu0 %v619, 8
      %v709 = vpop.permute.xlu0 %708
      %710 = vrot.lane.b32.xlu0 %v620, 8
      %v711 = vpop.permute.xlu0 %710
      %712 = vrot.lane.b32.xlu0 %v621, 8
      %v713 = vpop.permute.xlu0 %712
      %714 = vrot.lane.b32.xlu0 %v622, 8
      %v715 = vpop.permute.xlu0 %714
      %716 = vrot.lane.b32.xlu0 %v623, 8
      %v717 = vpop.permute.xlu0 %716
      %718 = vrot.lane.b32.xlu0 %v624, 8
      %v719 = vpop.permute.xlu0 %718
      %720 = vrot.lane.b32.xlu0 %v625, 8
      %v721 = vpop.permute.xlu0 %720
      %vm754 = vcmask 97344
      %755 = vst.msk [vmem:[#allocation4] sm:$0xff] %vm754, %v659
      %756 = vst.msk [vmem:[#allocation4 + $0x8] sm:$0xff] %vm754, %v661
      %757 = vst.msk [vmem:[#allocation4 + $0x10] sm:$0xff] %vm754, %v663
      %758 = vst.msk [vmem:[#allocation4 + $0x18] sm:$0xff] %vm754, %v665
      %759 = vst.msk [vmem:[#allocation4 + $0x20] sm:$0xff] %vm754, %v667
      %760 = vst.msk [vmem:[#allocation4 + $0x28] sm:$0xff] %vm754, %v669
      %761 = vst.msk [vmem:[#allocation4 + $0x30] sm:$0xff] %vm754, %v671
      %762 = vst.msk [vmem:[#allocation4 + $0x38] sm:$0xff] %vm754, %v673
      %763 = vst.msk [vmem:[#allocation4 + $0x40] sm:$0xff] %vm754, %v675
      %764 = vst.msk [vmem:[#allocation4 + $0x48] sm:$0xff] %vm754, %v677
      %765 = vst.msk [vmem:[#allocation4 + $0x50] sm:$0xff] %vm754, %v679
      %766 = vst.msk [vmem:[#allocation4 + $0x58] sm:$0xff] %vm754, %v681
      %767 = vst.msk [vmem:[#allocation4 + $0x60] sm:$0xff] %vm754, %v683
      %768 = vst.msk [vmem:[#allocation4 + $0x68] sm:$0xff] %vm754, %v685
      %769 = vst.msk [vmem:[#allocation4 + $0x70] sm:$0xff] %vm754, %v687
      %770 = vst.msk [vmem:[#allocation4 + $0x78] sm:$0xff] %vm754, %v689
      %771 = vst.msk [vmem:[#allocation4 + $0x80] sm:$0xff] %vm754, %v691
      %772 = vst.msk [vmem:[#allocation4 + $0x88] sm:$0xff] %vm754, %v693
      %773 = vst.msk [vmem:[#allocation4 + $0x90] sm:$0xff] %vm754, %v695
      %774 = vst.msk [vmem:[#allocation4 + $0x98] sm:$0xff] %vm754, %v697
      %775 = vst.msk [vmem:[#allocation4 + $0xa0] sm:$0xff] %vm754, %v699
      %776 = vst.msk [vmem:[#allocation4 + $0xa8] sm:$0xff] %vm754, %v701
      %777 = vst.msk [vmem:[#allocation4 + $0xb0] sm:$0xff] %vm754, %v703
      %778 = vst.msk [vmem:[#allocation4 + $0xb8] sm:$0xff] %vm754, %v705
      %779 = vst.msk [vmem:[#allocation4 + $0xc0] sm:$0xff] %vm754, %v707
      %780 = vst.msk [vmem:[#allocation4 + $0xc8] sm:$0xff] %vm754, %v709
      %781 = vst.msk [vmem:[#allocation4 + $0xd0] sm:$0xff] %vm754, %v711
      %782 = vst.msk [vmem:[#allocation4 + $0xd8] sm:$0xff] %vm754, %v713
      %783 = vst.msk [vmem:[#allocation4 + $0xe0] sm:$0xff] %vm754, %v715
      %784 = vst.msk [vmem:[#allocation4 + $0xe8] sm:$0xff] %vm754, %v717
      %785 = vst.msk [vmem:[#allocation4 + $0xf0] sm:$0xff] %vm754, %v719
      %786 = vst.msk [vmem:[#allocation4 + $0xf8] sm:$0xff] %vm754, %v721
      %v787 = vld [vmem:[%s304 + $0x7] sm:$0xff]
      %v788 = vld [vmem:[%s304 + $0xf] sm:$0xff]
      %v789 = vld [vmem:[%s304 + $0x27] sm:$0xff]
      %v790 = vld [vmem:[%s304 + $0x2f] sm:$0xff]
      %v791 = vld [vmem:[%s304 + $0x47] sm:$0xff]
      %v792 = vld [vmem:[%s304 + $0x4f] sm:$0xff]
      %v793 = vld [vmem:[%s304 + $0x67] sm:$0xff]
      %v794 = vld [vmem:[%s304 + $0x6f] sm:$0xff]
      %v795 = vld [vmem:[%s304 + $0x87] sm:$0xff]
      %v796 = vld [vmem:[%s304 + $0x8f] sm:$0xff]
      %v797 = vld [vmem:[%s304 + $0xa7] sm:$0xff]
      %v798 = vld [vmem:[%s304 + $0xaf] sm:$0xff]
      %v799 = vld [vmem:[%s304 + $0xc7] sm:$0xff]
      %v800 = vld [vmem:[%s304 + $0xcf] sm:$0xff]
      %v801 = vld [vmem:[%s304 + $0xe7] sm:$0xff]
      %v802 = vld [vmem:[%s304 + $0xef] sm:$0xff]
      %v803 = vld [vmem:[%s304 + $0x107] sm:$0xff]
      %v804 = vld [vmem:[%s304 + $0x10f] sm:$0xff]
      %v805 = vld [vmem:[%s304 + $0x127] sm:$0xff]
      %v806 = vld [vmem:[%s304 + $0x12f] sm:$0xff]
      %v807 = vld [vmem:[%s304 + $0x147] sm:$0xff]
      %v808 = vld [vmem:[%s304 + $0x14f] sm:$0xff]
      %v809 = vld [vmem:[%s304 + $0x167] sm:$0xff]
      %v810 = vld [vmem:[%s304 + $0x16f] sm:$0xff]
      %v811 = vld [vmem:[%s304 + $0x187] sm:$0xff]
      %v812 = vld [vmem:[%s304 + $0x18f] sm:$0xff]
      %v813 = vld [vmem:[%s304 + $0x1a7] sm:$0xff]
      %v814 = vld [vmem:[%s304 + $0x1af] sm:$0xff]
      %v815 = vld [vmem:[%s304 + $0x1c7] sm:$0xff]
      %v816 = vld [vmem:[%s304 + $0x1cf] sm:$0xff]
      %v817 = vld [vmem:[%s304 + $0x1e7] sm:$0xff]
      %v818 = vld [vmem:[%s304 + $0x1ef] sm:$0xff]
      %851 = vrot.lane.b32.xlu0 %v787, 12
      %v852 = vpop.permute.xlu0 %851
      %853 = vrot.lane.b32.xlu0 %v788, 12
      %v854 = vpop.permute.xlu0 %853
      %855 = vrot.lane.b32.xlu0 %v789, 12
      %v856 = vpop.permute.xlu0 %855
      %857 = vrot.lane.b32.xlu0 %v790, 12
      %v858 = vpop.permute.xlu0 %857
      %859 = vrot.lane.b32.xlu0 %v791, 12
      %v860 = vpop.permute.xlu0 %859
      %861 = vrot.lane.b32.xlu0 %v792, 12
      %v862 = vpop.permute.xlu0 %861
      %863 = vrot.lane.b32.xlu0 %v793, 12
      %v864 = vpop.permute.xlu0 %863
      %865 = vrot.lane.b32.xlu0 %v794, 12
      %v866 = vpop.permute.xlu0 %865
      %867 = vrot.lane.b32.xlu0 %v795, 12
      %v868 = vpop.permute.xlu0 %867
      %869 = vrot.lane.b32.xlu0 %v796, 12
      %v870 = vpop.permute.xlu0 %869
      %871 = vrot.lane.b32.xlu0 %v797, 12
      %v872 = vpop.permute.xlu0 %871
      %873 = vrot.lane.b32.xlu0 %v798, 12
      %v874 = vpop.permute.xlu0 %873
      %875 = vrot.lane.b32.xlu0 %v799, 12
      %v876 = vpop.permute.xlu0 %875
      %877 = vrot.lane.b32.xlu0 %v800, 12
      %v878 = vpop.permute.xlu0 %877
      %879 = vrot.lane.b32.xlu0 %v801, 12
      %v880 = vpop.permute.xlu0 %879
      %881 = vrot.lane.b32.xlu0 %v802, 12
      %v882 = vpop.permute.xlu0 %881
      %883 = vrot.lane.b32.xlu0 %v803, 12
      %v884 = vpop.permute.xlu0 %883
      %885 = vrot.lane.b32.xlu0 %v804, 12
      %v886 = vpop.permute.xlu0 %885
      %887 = vrot.lane.b32.xlu0 %v805, 12
      %v888 = vpop.permute.xlu0 %887
      %889 = vrot.lane.b32.xlu0 %v806, 12
      %v890 = vpop.permute.xlu0 %889
      %891 = vrot.lane.b32.xlu0 %v807, 12
      %v892 = vpop.permute.xlu0 %891
      %893 = vrot.lane.b32.xlu0 %v808, 12
      %v894 = vpop.permute.xlu0 %893
      %895 = vrot.lane.b32.xlu0 %v809, 12
      %v896 = vpop.permute.xlu0 %895
      %897 = vrot.lane.b32.xlu0 %v810, 12
      %v898 = vpop.permute.xlu0 %897
      %899 = vrot.lane.b32.xlu0 %v811, 12
      %v900 = vpop.permute.xlu0 %899
      %901 = vrot.lane.b32.xlu0 %v812, 12
      %v902 = vpop.permute.xlu0 %901
      %903 = vrot.lane.b32.xlu0 %v813, 12
      %v904 = vpop.permute.xlu0 %903
      %905 = vrot.lane.b32.xlu0 %v814, 12
      %v906 = vpop.permute.xlu0 %905
      %907 = vrot.lane.b32.xlu0 %v815, 12
      %v908 = vpop.permute.xlu0 %907
      %909 = vrot.lane.b32.xlu0 %v816, 12
      %v910 = vpop.permute.xlu0 %909
      %911 = vrot.lane.b32.xlu0 %v817, 12
      %v912 = vpop.permute.xlu0 %911
      %913 = vrot.lane.b32.xlu0 %v818, 12
      %v914 = vpop.permute.xlu0 %913
      %vm947 = vcmask 130144
      %948 = vst.msk [vmem:[#allocation4] sm:$0xff] %vm947, %v852
      %949 = vst.msk [vmem:[#allocation4 + $0x8] sm:$0xff] %vm947, %v854
      %950 = vst.msk [vmem:[#allocation4 + $0x10] sm:$0xff] %vm947, %v856
      %951 = vst.msk [vmem:[#allocation4 + $0x18] sm:$0xff] %vm947, %v858
      %952 = vst.msk [vmem:[#allocation4 + $0x20] sm:$0xff] %vm947, %v860
      %953 = vst.msk [vmem:[#allocation4 + $0x28] sm:$0xff] %vm947, %v862
      %954 = vst.msk [vmem:[#allocation4 + $0x30] sm:$0xff] %vm947, %v864
      %955 = vst.msk [vmem:[#allocation4 + $0x38] sm:$0xff] %vm947, %v866
      %956 = vst.msk [vmem:[#allocation4 + $0x40] sm:$0xff] %vm947, %v868
      %957 = vst.msk [vmem:[#allocation4 + $0x48] sm:$0xff] %vm947, %v870
      %958 = vst.msk [vmem:[#allocation4 + $0x50] sm:$0xff] %vm947, %v872
      %959 = vst.msk [vmem:[#allocation4 + $0x58] sm:$0xff] %vm947, %v874
      %960 = vst.msk [vmem:[#allocation4 + $0x60] sm:$0xff] %vm947, %v876
      %961 = vst.msk [vmem:[#allocation4 + $0x68] sm:$0xff] %vm947, %v878
      %962 = vst.msk [vmem:[#allocation4 + $0x70] sm:$0xff] %vm947, %v880
      %963 = vst.msk [vmem:[#allocation4 + $0x78] sm:$0xff] %vm947, %v882
      %964 = vst.msk [vmem:[#allocation4 + $0x80] sm:$0xff] %vm947, %v884
      %965 = vst.msk [vmem:[#allocation4 + $0x88] sm:$0xff] %vm947, %v886
      %966 = vst.msk [vmem:[#allocation4 + $0x90] sm:$0xff] %vm947, %v888
      %967 = vst.msk [vmem:[#allocation4 + $0x98] sm:$0xff] %vm947, %v890
      %968 = vst.msk [vmem:[#allocation4 + $0xa0] sm:$0xff] %vm947, %v892
      %969 = vst.msk [vmem:[#allocation4 + $0xa8] sm:$0xff] %vm947, %v894
      %970 = vst.msk [vmem:[#allocation4 + $0xb0] sm:$0xff] %vm947, %v896
      %971 = vst.msk [vmem:[#allocation4 + $0xb8] sm:$0xff] %vm947, %v898
      %972 = vst.msk [vmem:[#allocation4 + $0xc0] sm:$0xff] %vm947, %v900
      %973 = vst.msk [vmem:[#allocation4 + $0xc8] sm:$0xff] %vm947, %v902
      %974 = vst.msk [vmem:[#allocation4 + $0xd0] sm:$0xff] %vm947, %v904
      %975 = vst.msk [vmem:[#allocation4 + $0xd8] sm:$0xff] %vm947, %v906
      %976 = vst.msk [vmem:[#allocation4 + $0xe0] sm:$0xff] %vm947, %v908
      %977 = vst.msk [vmem:[#allocation4 + $0xe8] sm:$0xff] %vm947, %v910
      %978 = vst.msk [vmem:[#allocation4 + $0xf0] sm:$0xff] %vm947, %v912
      %979 = vst.msk [vmem:[#allocation4 + $0xf8] sm:$0xff] %vm947, %v914
      %v980 = vld [vmem:[%s304 + $0x8] sm:$0xff]
      %v981 = vld [vmem:[%s304 + $0x10] sm:$0xff]
      %v982 = vld [vmem:[%s304 + $0x28] sm:$0xff]
      %v983 = vld [vmem:[%s304 + $0x30] sm:$0xff]
      %v984 = vld [vmem:[%s304 + $0x48] sm:$0xff]
      %v985 = vld [vmem:[%s304 + $0x50] sm:$0xff]
      %v986 = vld [vmem:[%s304 + $0x68] sm:$0xff]
      %v987 = vld [vmem:[%s304 + $0x70] sm:$0xff]
      %v988 = vld [vmem:[%s304 + $0x88] sm:$0xff]
      %v989 = vld [vmem:[%s304 + $0x90] sm:$0xff]
      %v990 = vld [vmem:[%s304 + $0xa8] sm:$0xff]
      %v991 = vld [vmem:[%s304 + $0xb0] sm:$0xff]
      %v992 = vld [vmem:[%s304 + $0xc8] sm:$0xff]
      %v993 = vld [vmem:[%s304 + $0xd0] sm:$0xff]
      %v994 = vld [vmem:[%s304 + $0xe8] sm:$0xff]
      %v995 = vld [vmem:[%s304 + $0xf0] sm:$0xff]
      %v996 = vld [vmem:[%s304 + $0x108] sm:$0xff]
      %v997 = vld [vmem:[%s304 + $0x110] sm:$0xff]
      %v998 = vld [vmem:[%s304 + $0x128] sm:$0xff]
      %v999 = vld [vmem:[%s304 + $0x130] sm:$0xff]
      %v1000 = vld [vmem:[%s304 + $0x148] sm:$0xff]
      %v1001 = vld [vmem:[%s304 + $0x150] sm:$0xff]
      %v1002 = vld [vmem:[%s304 + $0x168] sm:$0xff]
      %v1003 = vld [vmem:[%s304 + $0x170] sm:$0xff]
      %v1004 = vld [vmem:[%s304 + $0x188] sm:$0xff]
      %v1005 = vld [vmem:[%s304 + $0x190] sm:$0xff]
      %v1006 = vld [vmem:[%s304 + $0x1a8] sm:$0xff]
      %v1007 = vld [vmem:[%s304 + $0x1b0] sm:$0xff]
      %v1008 = vld [vmem:[%s304 + $0x1c8] sm:$0xff]
      %v1009 = vld [vmem:[%s304 + $0x1d0] sm:$0xff]
      %v1010 = vld [vmem:[%s304 + $0x1e8] sm:$0xff]
      %v1011 = vld [vmem:[%s304 + $0x1f0] sm:$0xff]
      %1044 = vrot.lane.b32.xlu0 %v980, 16
      %v1045 = vpop.permute.xlu0 %1044
      %1046 = vrot.lane.b32.xlu0 %v981, 16
      %v1047 = vpop.permute.xlu0 %1046
      %1048 = vrot.lane.b32.xlu0 %v982, 16
      %v1049 = vpop.permute.xlu0 %1048
      %1050 = vrot.lane.b32.xlu0 %v983, 16
      %v1051 = vpop.permute.xlu0 %1050
      %1052 = vrot.lane.b32.xlu0 %v984, 16
      %v1053 = vpop.permute.xlu0 %1052
      %1054 = vrot.lane.b32.xlu0 %v985, 16
      %v1055 = vpop.permute.xlu0 %1054
      %1056 = vrot.lane.b32.xlu0 %v986, 16
      %v1057 = vpop.permute.xlu0 %1056
      %1058 = vrot.lane.b32.xlu0 %v987, 16
      %v1059 = vpop.permute.xlu0 %1058
      %1060 = vrot.lane.b32.xlu0 %v988, 16
      %v1061 = vpop.permute.xlu0 %1060
      %1062 = vrot.lane.b32.xlu0 %v989, 16
      %v1063 = vpop.permute.xlu0 %1062
      %1064 = vrot.lane.b32.xlu0 %v990, 16
      %v1065 = vpop.permute.xlu0 %1064
      %1066 = vrot.lane.b32.xlu0 %v991, 16
      %v1067 = vpop.permute.xlu0 %1066
      %1068 = vrot.lane.b32.xlu0 %v992, 16
      %v1069 = vpop.permute.xlu0 %1068
      %1070 = vrot.lane.b32.xlu0 %v993, 16
      %v1071 = vpop.permute.xlu0 %1070
      %1072 = vrot.lane.b32.xlu0 %v994, 16
      %v1073 = vpop.permute.xlu0 %1072
      %1074 = vrot.lane.b32.xlu0 %v995, 16
      %v1075 = vpop.permute.xlu0 %1074
      %1076 = vrot.lane.b32.xlu0 %v996, 16
      %v1077 = vpop.permute.xlu0 %1076
      %1078 = vrot.lane.b32.xlu0 %v997, 16
      %v1079 = vpop.permute.xlu0 %1078
      %1080 = vrot.lane.b32.xlu0 %v998, 16
      %v1081 = vpop.permute.xlu0 %1080
      %1082 = vrot.lane.b32.xlu0 %v999, 16
      %v1083 = vpop.permute.xlu0 %1082
      %1084 = vrot.lane.b32.xlu0 %v1000, 16
      %v1085 = vpop.permute.xlu0 %1084
      %1086 = vrot.lane.b32.xlu0 %v1001, 16
      %v1087 = vpop.permute.xlu0 %1086
      %1088 = vrot.lane.b32.xlu0 %v1002, 16
      %v1089 = vpop.permute.xlu0 %1088
      %1090 = vrot.lane.b32.xlu0 %v1003, 16
      %v1091 = vpop.permute.xlu0 %1090
      %1092 = vrot.lane.b32.xlu0 %v1004, 16
      %v1093 = vpop.permute.xlu0 %1092
      %1094 = vrot.lane.b32.xlu0 %v1005, 16
      %v1095 = vpop.permute.xlu0 %1094
      %1096 = vrot.lane.b32.xlu0 %v1006, 16
      %v1097 = vpop.permute.xlu0 %1096
      %1098 = vrot.lane.b32.xlu0 %v1007, 16
      %v1099 = vpop.permute.xlu0 %1098
      %1100 = vrot.lane.b32.xlu0 %v1008, 16
      %v1101 = vpop.permute.xlu0 %1100
      %1102 = vrot.lane.b32.xlu0 %v1009, 16
      %v1103 = vpop.permute.xlu0 %1102
      %1104 = vrot.lane.b32.xlu0 %v1010, 16
      %v1105 = vpop.permute.xlu0 %1104
      %1106 = vrot.lane.b32.xlu0 %v1011, 16
      %v1107 = vpop.permute.xlu0 %1106
      %vm1140 = vcmask 162944
      %1141 = vst.msk [vmem:[#allocation4] sm:$0xff] %vm1140, %v1045
      %1142 = vst.msk [vmem:[#allocation4 + $0x8] sm:$0xff] %vm1140, %v1047
      %1143 = vst.msk [vmem:[#allocation4 + $0x10] sm:$0xff] %vm1140, %v1049
      %1144 = vst.msk [vmem:[#allocation4 + $0x18] sm:$0xff] %vm1140, %v1051
      %1145 = vst.msk [vmem:[#allocation4 + $0x20] sm:$0xff] %vm1140, %v1053
      %1146 = vst.msk [vmem:[#allocation4 + $0x28] sm:$0xff] %vm1140, %v1055
      %1147 = vst.msk [vmem:[#allocation4 + $0x30] sm:$0xff] %vm1140, %v1057
      %1148 = vst.msk [vmem:[#allocation4 + $0x38] sm:$0xff] %vm1140, %v1059
      %1149 = vst.msk [vmem:[#allocation4 + $0x40] sm:$0xff] %vm1140, %v1061
      %1150 = vst.msk [vmem:[#allocation4 + $0x48] sm:$0xff] %vm1140, %v1063
      %1151 = vst.msk [vmem:[#allocation4 + $0x50] sm:$0xff] %vm1140, %v1065
      %1152 = vst.msk [vmem:[#allocation4 + $0x58] sm:$0xff] %vm1140, %v1067
      %1153 = vst.msk [vmem:[#allocation4 + $0x60] sm:$0xff] %vm1140, %v1069
      %1154 = vst.msk [vmem:[#allocation4 + $0x68] sm:$0xff] %vm1140, %v1071
      %1155 = vst.msk [vmem:[#allocation4 + $0x70] sm:$0xff] %vm1140, %v1073
      %1156 = vst.msk [vmem:[#allocation4 + $0x78] sm:$0xff] %vm1140, %v1075
      %1157 = vst.msk [vmem:[#allocation4 + $0x80] sm:$0xff] %vm1140, %v1077
      %1158 = vst.msk [vmem:[#allocation4 + $0x88] sm:$0xff] %vm1140, %v1079
      %1159 = vst.msk [vmem:[#allocation4 + $0x90] sm:$0xff] %vm1140, %v1081
      %1160 = vst.msk [vmem:[#allocation4 + $0x98] sm:$0xff] %vm1140, %v1083
      %1161 = vst.msk [vmem:[#allocation4 + $0xa0] sm:$0xff] %vm1140, %v1085
      %1162 = vst.msk [vmem:[#allocation4 + $0xa8] sm:$0xff] %vm1140, %v1087
      %1163 = vst.msk [vmem:[#allocation4 + $0xb0] sm:$0xff] %vm1140, %v1089
      %1164 = vst.msk [vmem:[#allocation4 + $0xb8] sm:$0xff] %vm1140, %v1091
      %1165 = vst.msk [vmem:[#allocation4 + $0xc0] sm:$0xff] %vm1140, %v1093
      %1166 = vst.msk [vmem:[#allocation4 + $0xc8] sm:$0xff] %vm1140, %v1095
      %1167 = vst.msk [vmem:[#allocation4 + $0xd0] sm:$0xff] %vm1140, %v1097
      %1168 = vst.msk [vmem:[#allocation4 + $0xd8] sm:$0xff] %vm1140, %v1099
      %1169 = vst.msk [vmem:[#allocation4 + $0xe0] sm:$0xff] %vm1140, %v1101
      %1170 = vst.msk [vmem:[#allocation4 + $0xe8] sm:$0xff] %vm1140, %v1103
      %1171 = vst.msk [vmem:[#allocation4 + $0xf0] sm:$0xff] %vm1140, %v1105
      %1172 = vst.msk [vmem:[#allocation4 + $0xf8] sm:$0xff] %vm1140, %v1107
      %v1173 = vld [vmem:[%s304 + $0x9] sm:$0xff]
      %v1174 = vld [vmem:[%s304 + $0x11] sm:$0xff]
      %v1175 = vld [vmem:[%s304 + $0x29] sm:$0xff]
      %v1176 = vld [vmem:[%s304 + $0x31] sm:$0xff]
      %v1177 = vld [vmem:[%s304 + $0x49] sm:$0xff]
      %v1178 = vld [vmem:[%s304 + $0x51] sm:$0xff]
      %v1179 = vld [vmem:[%s304 + $0x69] sm:$0xff]
      %v1180 = vld [vmem:[%s304 + $0x71] sm:$0xff]
      %v1181 = vld [vmem:[%s304 + $0x89] sm:$0xff]
      %v1182 = vld [vmem:[%s304 + $0x91] sm:$0xff]
      %v1183 = vld [vmem:[%s304 + $0xa9] sm:$0xff]
      %v1184 = vld [vmem:[%s304 + $0xb1] sm:$0xff]
      %v1185 = vld [vmem:[%s304 + $0xc9] sm:$0xff]
      %v1186 = vld [vmem:[%s304 + $0xd1] sm:$0xff]
      %v1187 = vld [vmem:[%s304 + $0xe9] sm:$0xff]
      %v1188 = vld [vmem:[%s304 + $0xf1] sm:$0xff]
      %v1189 = vld [vmem:[%s304 + $0x109] sm:$0xff]
      %v1190 = vld [vmem:[%s304 + $0x111] sm:$0xff]
      %v1191 = vld [vmem:[%s304 + $0x129] sm:$0xff]
      %v1192 = vld [vmem:[%s304 + $0x131] sm:$0xff]
      %v1193 = vld [vmem:[%s304 + $0x149] sm:$0xff]
      %v1194 = vld [vmem:[%s304 + $0x151] sm:$0xff]
      %v1195 = vld [vmem:[%s304 + $0x169] sm:$0xff]
      %v1196 = vld [vmem:[%s304 + $0x171] sm:$0xff]
      %v1197 = vld [vmem:[%s304 + $0x189] sm:$0xff]
      %v1198 = vld [vmem:[%s304 + $0x191] sm:$0xff]
      %v1199 = vld [vmem:[%s304 + $0x1a9] sm:$0xff]
      %v1200 = vld [vmem:[%s304 + $0x1b1] sm:$0xff]
      %v1201 = vld [vmem:[%s304 + $0x1c9] sm:$0xff]
      %v1202 = vld [vmem:[%s304 + $0x1d1] sm:$0xff]
      %v1203 = vld [vmem:[%s304 + $0x1e9] sm:$0xff]
      %v1204 = vld [vmem:[%s304 + $0x1f1] sm:$0xff]
      %1237 = vrot.lane.b32.xlu0 %v1173, 20
      %v1238 = vpop.permute.xlu0 %1237
      %1239 = vrot.lane.b32.xlu0 %v1174, 20
      %v1240 = vpop.permute.xlu0 %1239
      %1241 = vrot.lane.b32.xlu0 %v1175, 20
      %v1242 = vpop.permute.xlu0 %1241
      %1243 = vrot.lane.b32.xlu0 %v1176, 20
      %v1244 = vpop.permute.xlu0 %1243
      %1245 = vrot.lane.b32.xlu0 %v1177, 20
      %v1246 = vpop.permute.xlu0 %1245
      %1247 = vrot.lane.b32.xlu0 %v1178, 20
      %v1248 = vpop.permute.xlu0 %1247
      %1249 = vrot.lane.b32.xlu0 %v1179, 20
      %v1250 = vpop.permute.xlu0 %1249
      %1251 = vrot.lane.b32.xlu0 %v1180, 20
      %v1252 = vpop.permute.xlu0 %1251
      %1253 = vrot.lane.b32.xlu0 %v1181, 20
      %v1254 = vpop.permute.xlu0 %1253
      %1255 = vrot.lane.b32.xlu0 %v1182, 20
      %v1256 = vpop.permute.xlu0 %1255
      %1257 = vrot.lane.b32.xlu0 %v1183, 20
      %v1258 = vpop.permute.xlu0 %1257
      %1259 = vrot.lane.b32.xlu0 %v1184, 20
      %v1260 = vpop.permute.xlu0 %1259
      %1261 = vrot.lane.b32.xlu0 %v1185, 20
      %v1262 = vpop.permute.xlu0 %1261
      %1263 = vrot.lane.b32.xlu0 %v1186, 20
      %v1264 = vpop.permute.xlu0 %1263
      %1265 = vrot.lane.b32.xlu0 %v1187, 20
      %v1266 = vpop.permute.xlu0 %1265
      %1267 = vrot.lane.b32.xlu0 %v1188, 20
      %v1268 = vpop.permute.xlu0 %1267
      %1269 = vrot.lane.b32.xlu0 %v1189, 20
      %v1270 = vpop.permute.xlu0 %1269
      %1271 = vrot.lane.b32.xlu0 %v1190, 20
      %v1272 = vpop.permute.xlu0 %1271
      %1273 = vrot.lane.b32.xlu0 %v1191, 20
      %v1274 = vpop.permute.xlu0 %1273
      %1275 = vrot.lane.b32.xlu0 %v1192, 20
      %v1276 = vpop.permute.xlu0 %1275
      %1277 = vrot.lane.b32.xlu0 %v1193, 20
      %v1278 = vpop.permute.xlu0 %1277
      %1279 = vrot.lane.b32.xlu0 %v1194, 20
      %v1280 = vpop.permute.xlu0 %1279
      %1281 = vrot.lane.b32.xlu0 %v1195, 20
      %v1282 = vpop.permute.xlu0 %1281
      %1283 = vrot.lane.b32.xlu0 %v1196, 20
      %v1284 = vpop.permute.xlu0 %1283
      %1285 = vrot.lane.b32.xlu0 %v1197, 20
      %v1286 = vpop.permute.xlu0 %1285
      %1287 = vrot.lane.b32.xlu0 %v1198, 20
      %v1288 = vpop.permute.xlu0 %1287
      %1289 = vrot.lane.b32.xlu0 %v1199, 20
      %v1290 = vpop.permute.xlu0 %1289
      %1291 = vrot.lane.b32.xlu0 %v1200, 20
      %v1292 = vpop.permute.xlu0 %1291
      %1293 = vrot.lane.b32.xlu0 %v1201, 20
      %v1294 = vpop.permute.xlu0 %1293
      %1295 = vrot.lane.b32.xlu0 %v1202, 20
      %v1296 = vpop.permute.xlu0 %1295
      %1297 = vrot.lane.b32.xlu0 %v1203, 20
      %v1298 = vpop.permute.xlu0 %1297
      %1299 = vrot.lane.b32.xlu0 %v1204, 20
      %v1300 = vpop.permute.xlu0 %1299
      %vm1333 = vcmask 195744
      %1334 = vst.msk [vmem:[#allocation4] sm:$0xff] %vm1333, %v1238
      %1335 = vst.msk [vmem:[#allocation4 + $0x8] sm:$0xff] %vm1333, %v1240
      %1336 = vst.msk [vmem:[#allocation4 + $0x10] sm:$0xff] %vm1333, %v1242
      %1337 = vst.msk [vmem:[#allocation4 + $0x18] sm:$0xff] %vm1333, %v1244
      %1338 = vst.msk [vmem:[#allocation4 + $0x20] sm:$0xff] %vm1333, %v1246
      %1339 = vst.msk [vmem:[#allocation4 + $0x28] sm:$0xff] %vm1333, %v1248
      %1340 = vst.msk [vmem:[#allocation4 + $0x30] sm:$0xff] %vm1333, %v1250
      %1341 = vst.msk [vmem:[#allocation4 + $0x38] sm:$0xff] %vm1333, %v1252
      %1342 = vst.msk [vmem:[#allocation4 + $0x40] sm:$0xff] %vm1333, %v1254
      %1343 = vst.msk [vmem:[#allocation4 + $0x48] sm:$0xff] %vm1333, %v1256
      %1344 = vst.msk [vmem:[#allocation4 + $0x50] sm:$0xff] %vm1333, %v1258
      %1345 = vst.msk [vmem:[#allocation4 + $0x58] sm:$0xff] %vm1333, %v1260
      %1346 = vst.msk [vmem:[#allocation4 + $0x60] sm:$0xff] %vm1333, %v1262
      %1347 = vst.msk [vmem:[#allocation4 + $0x68] sm:$0xff] %vm1333, %v1264
      %1348 = vst.msk [vmem:[#allocation4 + $0x70] sm:$0xff] %vm1333, %v1266
      %1349 = vst.msk [vmem:[#allocation4 + $0x78] sm:$0xff] %vm1333, %v1268
      %1350 = vst.msk [vmem:[#allocation4 + $0x80] sm:$0xff] %vm1333, %v1270
      %1351 = vst.msk [vmem:[#allocation4 + $0x88] sm:$0xff] %vm1333, %v1272
      %1352 = vst.msk [vmem:[#allocation4 + $0x90] sm:$0xff] %vm1333, %v1274
      %1353 = vst.msk [vmem:[#allocation4 + $0x98] sm:$0xff] %vm1333, %v1276
      %1354 = vst.msk [vmem:[#allocation4 + $0xa0] sm:$0xff] %vm1333, %v1278
      %1355 = vst.msk [vmem:[#allocation4 + $0xa8] sm:$0xff] %vm1333, %v1280
      %1356 = vst.msk [vmem:[#allocation4 + $0xb0] sm:$0xff] %vm1333, %v1282
      %1357 = vst.msk [vmem:[#allocation4 + $0xb8] sm:$0xff] %vm1333, %v1284
      %1358 = vst.msk [vmem:[#allocation4 + $0xc0] sm:$0xff] %vm1333, %v1286
      %1359 = vst.msk [vmem:[#allocation4 + $0xc8] sm:$0xff] %vm1333, %v1288
      %1360 = vst.msk [vmem:[#allocation4 + $0xd0] sm:$0xff] %vm1333, %v1290
      %1361 = vst.msk [vmem:[#allocation4 + $0xd8] sm:$0xff] %vm1333, %v1292
      %1362 = vst.msk [vmem:[#allocation4 + $0xe0] sm:$0xff] %vm1333, %v1294
      %1363 = vst.msk [vmem:[#allocation4 + $0xe8] sm:$0xff] %vm1333, %v1296
      %1364 = vst.msk [vmem:[#allocation4 + $0xf0] sm:$0xff] %vm1333, %v1298
      %1365 = vst.msk [vmem:[#allocation4 + $0xf8] sm:$0xff] %vm1333, %v1300
      %s1366 = scalar_lea.vmem [#allocation2], 64
      %v1367 = vld [vmem:[%s1366 + $0x7] sm:$0xff]
      %v1368 = vld [vmem:[%s1366 + $0xf] sm:$0xff]
      %v1369 = vld [vmem:[%s1366 + $0x27] sm:$0xff]
      %v1370 = vld [vmem:[%s1366 + $0x2f] sm:$0xff]
      %v1371 = vld [vmem:[%s1366 + $0x47] sm:$0xff]
      %v1372 = vld [vmem:[%s1366 + $0x4f] sm:$0xff]
      %v1373 = vld [vmem:[%s1366 + $0x67] sm:$0xff]
      %v1374 = vld [vmem:[%s1366 + $0x6f] sm:$0xff]
      %v1375 = vld [vmem:[%s1366 + $0x87] sm:$0xff]
      %v1376 = vld [vmem:[%s1366 + $0x8f] sm:$0xff]
      %v1377 = vld [vmem:[%s1366 + $0xa7] sm:$0xff]
      %v1378 = vld [vmem:[%s1366 + $0xaf] sm:$0xff]
      %v1379 = vld [vmem:[%s1366 + $0xc7] sm:$0xff]
      %v1380 = vld [vmem:[%s1366 + $0xcf] sm:$0xff]
      %v1381 = vld [vmem:[%s1366 + $0xe7] sm:$0xff]
      %v1382 = vld [vmem:[%s1366 + $0xef] sm:$0xff]
      %v1383 = vld [vmem:[%s1366 + $0x107] sm:$0xff]
      %v1384 = vld [vmem:[%s1366 + $0x10f] sm:$0xff]
      %v1385 = vld [vmem:[%s1366 + $0x127] sm:$0xff]
      %v1386 = vld [vmem:[%s1366 + $0x12f] sm:$0xff]
      %v1387 = vld [vmem:[%s1366 + $0x147] sm:$0xff]
      %v1388 = vld [vmem:[%s1366 + $0x14f] sm:$0xff]
      %v1389 = vld [vmem:[%s1366 + $0x167] sm:$0xff]
      %v1390 = vld [vmem:[%s1366 + $0x16f] sm:$0xff]
      %v1391 = vld [vmem:[%s1366 + $0x187] sm:$0xff]
      %v1392 = vld [vmem:[%s1366 + $0x18f] sm:$0xff]
      %v1393 = vld [vmem:[%s1366 + $0x1a7] sm:$0xff]
      %v1394 = vld [vmem:[%s1366 + $0x1af] sm:$0xff]
      %v1395 = vld [vmem:[%s1366 + $0x1c7] sm:$0xff]
      %v1396 = vld [vmem:[%s1366 + $0x1cf] sm:$0xff]
      %v1397 = vld [vmem:[%s1366 + $0x1e7] sm:$0xff]
      %v1398 = vld [vmem:[%s1366 + $0x1ef] sm:$0xff]
      %1431 = vrot.lane.b32.xlu0 %v1367, 24
      %v1432 = vpop.permute.xlu0 %1431
      %1433 = vrot.lane.b32.xlu0 %v1368, 24
      %v1434 = vpop.permute.xlu0 %1433
      %1435 = vrot.lane.b32.xlu0 %v1369, 24
      %v1436 = vpop.permute.xlu0 %1435
      %1437 = vrot.lane.b32.xlu0 %v1370, 24
      %v1438 = vpop.permute.xlu0 %1437
      %1439 = vrot.lane.b32.xlu0 %v1371, 24
      %v1440 = vpop.permute.xlu0 %1439
      %1441 = vrot.lane.b32.xlu0 %v1372, 24
      %v1442 = vpop.permute.xlu0 %1441
      %1443 = vrot.lane.b32.xlu0 %v1373, 24
      %v1444 = vpop.permute.xlu0 %1443
      %1445 = vrot.lane.b32.xlu0 %v1374, 24
      %v1446 = vpop.permute.xlu0 %1445
      %1447 = vrot.lane.b32.xlu0 %v1375, 24
      %v1448 = vpop.permute.xlu0 %1447
      %1449 = vrot.lane.b32.xlu0 %v1376, 24
      %v1450 = vpop.permute.xlu0 %1449
      %1451 = vrot.lane.b32.xlu0 %v1377, 24
      %v1452 = vpop.permute.xlu0 %1451
      %1453 = vrot.lane.b32.xlu0 %v1378, 24
      %v1454 = vpop.permute.xlu0 %1453
      %1455 = vrot.lane.b32.xlu0 %v1379, 24
      %v1456 = vpop.permute.xlu0 %1455
      %1457 = vrot.lane.b32.xlu0 %v1380, 24
      %v1458 = vpop.permute.xlu0 %1457
      %1459 = vrot.lane.b32.xlu0 %v1381, 24
      %v1460 = vpop.permute.xlu0 %1459
      %1461 = vrot.lane.b32.xlu0 %v1382, 24
      %v1462 = vpop.permute.xlu0 %1461
      %1463 = vrot.lane.b32.xlu0 %v1383, 24
      %v1464 = vpop.permute.xlu0 %1463
      %1465 = vrot.lane.b32.xlu0 %v1384, 24
      %v1466 = vpop.permute.xlu0 %1465
      %1467 = vrot.lane.b32.xlu0 %v1385, 24
      %v1468 = vpop.permute.xlu0 %1467
      %1469 = vrot.lane.b32.xlu0 %v1386, 24
      %v1470 = vpop.permute.xlu0 %1469
      %1471 = vrot.lane.b32.xlu0 %v1387, 24
      %v1472 = vpop.permute.xlu0 %1471
      %1473 = vrot.lane.b32.xlu0 %v1388, 24
      %v1474 = vpop.permute.xlu0 %1473
      %1475 = vrot.lane.b32.xlu0 %v1389, 24
      %v1476 = vpop.permute.xlu0 %1475
      %1477 = vrot.lane.b32.xlu0 %v1390, 24
      %v1478 = vpop.permute.xlu0 %1477
      %1479 = vrot.lane.b32.xlu0 %v1391, 24
      %v1480 = vpop.permute.xlu0 %1479
      %1481 = vrot.lane.b32.xlu0 %v1392, 24
      %v1482 = vpop.permute.xlu0 %1481
      %1483 = vrot.lane.b32.xlu0 %v1393, 24
      %v1484 = vpop.permute.xlu0 %1483
      %1485 = vrot.lane.b32.xlu0 %v1394, 24
      %v1486 = vpop.permute.xlu0 %1485
      %1487 = vrot.lane.b32.xlu0 %v1395, 24
      %v1488 = vpop.permute.xlu0 %1487
      %1489 = vrot.lane.b32.xlu0 %v1396, 24
      %v1490 = vpop.permute.xlu0 %1489
      %1491 = vrot.lane.b32.xlu0 %v1397, 24
      %v1492 = vpop.permute.xlu0 %1491
      %1493 = vrot.lane.b32.xlu0 %v1398, 24
      %v1494 = vpop.permute.xlu0 %1493
      %vm1527 = vcmask 228544
      %1528 = vst.msk [vmem:[#allocation4] sm:$0xff] %vm1527, %v1432
      %1529 = vst.msk [vmem:[#allocation4 + $0x8] sm:$0xff] %vm1527, %v1434
      %1530 = vst.msk [vmem:[#allocation4 + $0x10] sm:$0xff] %vm1527, %v1436
      %1531 = vst.msk [vmem:[#allocation4 + $0x18] sm:$0xff] %vm1527, %v1438
      %1532 = vst.msk [vmem:[#allocation4 + $0x20] sm:$0xff] %vm1527, %v1440
      %1533 = vst.msk [vmem:[#allocation4 + $0x28] sm:$0xff] %vm1527, %v1442
      %1534 = vst.msk [vmem:[#allocation4 + $0x30] sm:$0xff] %vm1527, %v1444
      %1535 = vst.msk [vmem:[#allocation4 + $0x38] sm:$0xff] %vm1527, %v1446
      %1536 = vst.msk [vmem:[#allocation4 + $0x40] sm:$0xff] %vm1527, %v1448
      %1537 = vst.msk [vmem:[#allocation4 + $0x48] sm:$0xff] %vm1527, %v1450
      %1538 = vst.msk [vmem:[#allocation4 + $0x50] sm:$0xff] %vm1527, %v1452
      %1539 = vst.msk [vmem:[#allocation4 + $0x58] sm:$0xff] %vm1527, %v1454
      %1540 = vst.msk [vmem:[#allocation4 + $0x60] sm:$0xff] %vm1527, %v1456
      %1541 = vst.msk [vmem:[#allocation4 + $0x68] sm:$0xff] %vm1527, %v1458
      %1542 = vst.msk [vmem:[#allocation4 + $0x70] sm:$0xff] %vm1527, %v1460
      %1543 = vst.msk [vmem:[#allocation4 + $0x78] sm:$0xff] %vm1527, %v1462
      %1544 = vst.msk [vmem:[#allocation4 + $0x80] sm:$0xff] %vm1527, %v1464
      %1545 = vst.msk [vmem:[#allocation4 + $0x88] sm:$0xff] %vm1527, %v1466
      %1546 = vst.msk [vmem:[#allocation4 + $0x90] sm:$0xff] %vm1527, %v1468
      %1547 = vst.msk [vmem:[#allocation4 + $0x98] sm:$0xff] %vm1527, %v1470
      %1548 = vst.msk [vmem:[#allocation4 + $0xa0] sm:$0xff] %vm1527, %v1472
      %1549 = vst.msk [vmem:[#allocation4 + $0xa8] sm:$0xff] %vm1527, %v1474
      %1550 = vst.msk [vmem:[#allocation4 + $0xb0] sm:$0xff] %vm1527, %v1476
      %1551 = vst.msk [vmem:[#allocation4 + $0xb8] sm:$0xff] %vm1527, %v1478
      %1552 = vst.msk [vmem:[#allocation4 + $0xc0] sm:$0xff] %vm1527, %v1480
      %1553 = vst.msk [vmem:[#allocation4 + $0xc8] sm:$0xff] %vm1527, %v1482
      %1554 = vst.msk [vmem:[#allocation4 + $0xd0] sm:$0xff] %vm1527, %v1484
      %1555 = vst.msk [vmem:[#allocation4 + $0xd8] sm:$0xff] %vm1527, %v1486
      %1556 = vst.msk [vmem:[#allocation4 + $0xe0] sm:$0xff] %vm1527, %v1488
      %1557 = vst.msk [vmem:[#allocation4 + $0xe8] sm:$0xff] %vm1527, %v1490
      %1558 = vst.msk [vmem:[#allocation4 + $0xf0] sm:$0xff] %vm1527, %v1492
      %1559 = vst.msk [vmem:[#allocation4 + $0xf8] sm:$0xff] %vm1527, %v1494
      %v1560 = vld [vmem:[%s1366 + $0x8] sm:$0xff]
      %v1561 = vld [vmem:[%s1366 + $0x10] sm:$0xff]
      %v1562 = vld [vmem:[%s1366 + $0x28] sm:$0xff]
      %v1563 = vld [vmem:[%s1366 + $0x30] sm:$0xff]
      %v1564 = vld [vmem:[%s1366 + $0x48] sm:$0xff]
      %v1565 = vld [vmem:[%s1366 + $0x50] sm:$0xff]
      %v1566 = vld [vmem:[%s1366 + $0x68] sm:$0xff]
      %v1567 = vld [vmem:[%s1366 + $0x70] sm:$0xff]
      %v1568 = vld [vmem:[%s1366 + $0x88] sm:$0xff]
      %v1569 = vld [vmem:[%s1366 + $0x90] sm:$0xff]
      %v1570 = vld [vmem:[%s1366 + $0xa8] sm:$0xff]
      %v1571 = vld [vmem:[%s1366 + $0xb0] sm:$0xff]
      %v1572 = vld [vmem:[%s1366 + $0xc8] sm:$0xff]
      %v1573 = vld [vmem:[%s1366 + $0xd0] sm:$0xff]
      %v1574 = vld [vmem:[%s1366 + $0xe8] sm:$0xff]
      %v1575 = vld [vmem:[%s1366 + $0xf0] sm:$0xff]
      %v1576 = vld [vmem:[%s1366 + $0x108] sm:$0xff]
      %v1577 = vld [vmem:[%s1366 + $0x110] sm:$0xff]
      %v1578 = vld [vmem:[%s1366 + $0x128] sm:$0xff]
      %v1579 = vld [vmem:[%s1366 + $0x130] sm:$0xff]
      %v1580 = vld [vmem:[%s1366 + $0x148] sm:$0xff]
      %v1581 = vld [vmem:[%s1366 + $0x150] sm:$0xff]
      %v1582 = vld [vmem:[%s1366 + $0x168] sm:$0xff]
      %v1583 = vld [vmem:[%s1366 + $0x170] sm:$0xff]
      %v1584 = vld [vmem:[%s1366 + $0x188] sm:$0xff]
      %v1585 = vld [vmem:[%s1366 + $0x190] sm:$0xff]
      %v1586 = vld [vmem:[%s1366 + $0x1a8] sm:$0xff]
      %v1587 = vld [vmem:[%s1366 + $0x1b0] sm:$0xff]
      %v1588 = vld [vmem:[%s1366 + $0x1c8] sm:$0xff]
      %v1589 = vld [vmem:[%s1366 + $0x1d0] sm:$0xff]
      %v1590 = vld [vmem:[%s1366 + $0x1e8] sm:$0xff]
      %v1591 = vld [vmem:[%s1366 + $0x1f0] sm:$0xff]
      %1624 = vrot.lane.b32.xlu0 %v1560, 28
      %v1625 = vpop.permute.xlu0 %1624
      %1626 = vrot.lane.b32.xlu0 %v1561, 28
      %v1627 = vpop.permute.xlu0 %1626
      %1628 = vrot.lane.b32.xlu0 %v1562, 28
      %v1629 = vpop.permute.xlu0 %1628
      %1630 = vrot.lane.b32.xlu0 %v1563, 28
      %v1631 = vpop.permute.xlu0 %1630
      %1632 = vrot.lane.b32.xlu0 %v1564, 28
      %v1633 = vpop.permute.xlu0 %1632
      %1634 = vrot.lane.b32.xlu0 %v1565, 28
      %v1635 = vpop.permute.xlu0 %1634
      %1636 = vrot.lane.b32.xlu0 %v1566, 28
      %v1637 = vpop.permute.xlu0 %1636
      %1638 = vrot.lane.b32.xlu0 %v1567, 28
      %v1639 = vpop.permute.xlu0 %1638
      %1640 = vrot.lane.b32.xlu0 %v1568, 28
      %v1641 = vpop.permute.xlu0 %1640
      %1642 = vrot.lane.b32.xlu0 %v1569, 28
      %v1643 = vpop.permute.xlu0 %1642
      %1644 = vrot.lane.b32.xlu0 %v1570, 28
      %v1645 = vpop.permute.xlu0 %1644
      %1646 = vrot.lane.b32.xlu0 %v1571, 28
      %v1647 = vpop.permute.xlu0 %1646
      %1648 = vrot.lane.b32.xlu0 %v1572, 28
      %v1649 = vpop.permute.xlu0 %1648
      %1650 = vrot.lane.b32.xlu0 %v1573, 28
      %v1651 = vpop.permute.xlu0 %1650
      %1652 = vrot.lane.b32.xlu0 %v1574, 28
      %v1653 = vpop.permute.xlu0 %1652
      %1654 = vrot.lane.b32.xlu0 %v1575, 28
      %v1655 = vpop.permute.xlu0 %1654
      %1656 = vrot.lane.b32.xlu0 %v1576, 28
      %v1657 = vpop.permute.xlu0 %1656
      %1658 = vrot.lane.b32.xlu0 %v1577, 28
      %v1659 = vpop.permute.xlu0 %1658
      %1660 = vrot.lane.b32.xlu0 %v1578, 28
      %v1661 = vpop.permute.xlu0 %1660
      %1662 = vrot.lane.b32.xlu0 %v1579, 28
      %v1663 = vpop.permute.xlu0 %1662
      %1664 = vrot.lane.b32.xlu0 %v1580, 28
      %v1665 = vpop.permute.xlu0 %1664
      %1666 = vrot.lane.b32.xlu0 %v1581, 28
      %v1667 = vpop.permute.xlu0 %1666
      %1668 = vrot.lane.b32.xlu0 %v1582, 28
      %v1669 = vpop.permute.xlu0 %1668
      %1670 = vrot.lane.b32.xlu0 %v1583, 28
      %v1671 = vpop.permute.xlu0 %1670
      %1672 = vrot.lane.b32.xlu0 %v1584, 28
      %v1673 = vpop.permute.xlu0 %1672
      %1674 = vrot.lane.b32.xlu0 %v1585, 28
      %v1675 = vpop.permute.xlu0 %1674
      %1676 = vrot.lane.b32.xlu0 %v1586, 28
      %v1677 = vpop.permute.xlu0 %1676
      %1678 = vrot.lane.b32.xlu0 %v1587, 28
      %v1679 = vpop.permute.xlu0 %1678
      %1680 = vrot.lane.b32.xlu0 %v1588, 28
      %v1681 = vpop.permute.xlu0 %1680
      %1682 = vrot.lane.b32.xlu0 %v1589, 28
      %v1683 = vpop.permute.xlu0 %1682
      %1684 = vrot.lane.b32.xlu0 %v1590, 28
      %v1685 = vpop.permute.xlu0 %1684
      %1686 = vrot.lane.b32.xlu0 %v1591, 28
      %v1687 = vpop.permute.xlu0 %1686
      %vm1720 = vcmask 261344
      %1721 = vst.msk [vmem:[#allocation4] sm:$0xff] %vm1720, %v1625
      %1722 = vst.msk [vmem:[#allocation4 + $0x8] sm:$0xff] %vm1720, %v1627
      %1723 = vst.msk [vmem:[#allocation4 + $0x10] sm:$0xff] %vm1720, %v1629
      %1724 = vst.msk [vmem:[#allocation4 + $0x18] sm:$0xff] %vm1720, %v1631
      %1725 = vst.msk [vmem:[#allocation4 + $0x20] sm:$0xff] %vm1720, %v1633
      %1726 = vst.msk [vmem:[#allocation4 + $0x28] sm:$0xff] %vm1720, %v1635
      %1727 = vst.msk [vmem:[#allocation4 + $0x30] sm:$0xff] %vm1720, %v1637
      %1728 = vst.msk [vmem:[#allocation4 + $0x38] sm:$0xff] %vm1720, %v1639
      %1729 = vst.msk [vmem:[#allocation4 + $0x40] sm:$0xff] %vm1720, %v1641
      %1730 = vst.msk [vmem:[#allocation4 + $0x48] sm:$0xff] %vm1720, %v1643
      %1731 = vst.msk [vmem:[#allocation4 + $0x50] sm:$0xff] %vm1720, %v1645
      %1732 = vst.msk [vmem:[#allocation4 + $0x58] sm:$0xff] %vm1720, %v1647
      %1733 = vst.msk [vmem:[#allocation4 + $0x60] sm:$0xff] %vm1720, %v1649
      %1734 = vst.msk [vmem:[#allocation4 + $0x68] sm:$0xff] %vm1720, %v1651
      %1735 = vst.msk [vmem:[#allocation4 + $0x70] sm:$0xff] %vm1720, %v1653
      %1736 = vst.msk [vmem:[#allocation4 + $0x78] sm:$0xff] %vm1720, %v1655
      %1737 = vst.msk [vmem:[#allocation4 + $0x80] sm:$0xff] %vm1720, %v1657
      %1738 = vst.msk [vmem:[#allocation4 + $0x88] sm:$0xff] %vm1720, %v1659
      %1739 = vst.msk [vmem:[#allocation4 + $0x90] sm:$0xff] %vm1720, %v1661
      %1740 = vst.msk [vmem:[#allocation4 + $0x98] sm:$0xff] %vm1720, %v1663
      %1741 = vst.msk [vmem:[#allocation4 + $0xa0] sm:$0xff] %vm1720, %v1665
      %1742 = vst.msk [vmem:[#allocation4 + $0xa8] sm:$0xff] %vm1720, %v1667
      %1743 = vst.msk [vmem:[#allocation4 + $0xb0] sm:$0xff] %vm1720, %v1669
      %1744 = vst.msk [vmem:[#allocation4 + $0xb8] sm:$0xff] %vm1720, %v1671
      %1745 = vst.msk [vmem:[#allocation4 + $0xc0] sm:$0xff] %vm1720, %v1673
      %1746 = vst.msk [vmem:[#allocation4 + $0xc8] sm:$0xff] %vm1720, %v1675
      %1747 = vst.msk [vmem:[#allocation4 + $0xd0] sm:$0xff] %vm1720, %v1677
      %1748 = vst.msk [vmem:[#allocation4 + $0xd8] sm:$0xff] %vm1720, %v1679
      %1749 = vst.msk [vmem:[#allocation4 + $0xe0] sm:$0xff] %vm1720, %v1681
      %1750 = vst.msk [vmem:[#allocation4 + $0xe8] sm:$0xff] %vm1720, %v1683
      %1751 = vst.msk [vmem:[#allocation4 + $0xf0] sm:$0xff] %vm1720, %v1685
      %1752 = vst.msk [vmem:[#allocation4 + $0xf8] sm:$0xff] %vm1720, %v1687
      %v1753 = vld [vmem:[%s1366 + $0x9] sm:$0xff]
      %v1754 = vld [vmem:[%s1366 + $0x11] sm:$0xff]
      %v1755 = vld [vmem:[%s1366 + $0x29] sm:$0xff]
      %v1756 = vld [vmem:[%s1366 + $0x31] sm:$0xff]
      %v1757 = vld [vmem:[%s1366 + $0x49] sm:$0xff]
      %v1758 = vld [vmem:[%s1366 + $0x51] sm:$0xff]
      %v1759 = vld [vmem:[%s1366 + $0x69] sm:$0xff]
      %v1760 = vld [vmem:[%s1366 + $0x71] sm:$0xff]
      %v1761 = vld [vmem:[%s1366 + $0x89] sm:$0xff]
      %v1762 = vld [vmem:[%s1366 + $0x91] sm:$0xff]
      %v1763 = vld [vmem:[%s1366 + $0xa9] sm:$0xff]
      %v1764 = vld [vmem:[%s1366 + $0xb1] sm:$0xff]
      %v1765 = vld [vmem:[%s1366 + $0xc9] sm:$0xff]
      %v1766 = vld [vmem:[%s1366 + $0xd1] sm:$0xff]
      %v1767 = vld [vmem:[%s1366 + $0xe9] sm:$0xff]
      %v1768 = vld [vmem:[%s1366 + $0xf1] sm:$0xff]
      %v1769 = vld [vmem:[%s1366 + $0x109] sm:$0xff]
      %v1770 = vld [vmem:[%s1366 + $0x111] sm:$0xff]
      %v1771 = vld [vmem:[%s1366 + $0x129] sm:$0xff]
      %v1772 = vld [vmem:[%s1366 + $0x131] sm:$0xff]
      %v1773 = vld [vmem:[%s1366 + $0x149] sm:$0xff]
      %v1774 = vld [vmem:[%s1366 + $0x151] sm:$0xff]
      %v1775 = vld [vmem:[%s1366 + $0x169] sm:$0xff]
      %v1776 = vld [vmem:[%s1366 + $0x171] sm:$0xff]
      %v1777 = vld [vmem:[%s1366 + $0x189] sm:$0xff]
      %v1778 = vld [vmem:[%s1366 + $0x191] sm:$0xff]
      %v1779 = vld [vmem:[%s1366 + $0x1a9] sm:$0xff]
      %v1780 = vld [vmem:[%s1366 + $0x1b1] sm:$0xff]
      %v1781 = vld [vmem:[%s1366 + $0x1c9] sm:$0xff]
      %v1782 = vld [vmem:[%s1366 + $0x1d1] sm:$0xff]
      %v1783 = vld [vmem:[%s1366 + $0x1e9] sm:$0xff]
      %v1784 = vld [vmem:[%s1366 + $0x1f1] sm:$0xff]
      %1817 = vrot.lane.b32.xlu0 %v1753, 32
      %v1818 = vpop.permute.xlu0 %1817
      %1819 = vrot.lane.b32.xlu0 %v1754, 32
      %v1820 = vpop.permute.xlu0 %1819
      %1821 = vrot.lane.b32.xlu0 %v1755, 32
      %v1822 = vpop.permute.xlu0 %1821
      %1823 = vrot.lane.b32.xlu0 %v1756, 32
      %v1824 = vpop.permute.xlu0 %1823
      %1825 = vrot.lane.b32.xlu0 %v1757, 32
      %v1826 = vpop.permute.xlu0 %1825
      %1827 = vrot.lane.b32.xlu0 %v1758, 32
      %v1828 = vpop.permute.xlu0 %1827
      %1829 = vrot.lane.b32.xlu0 %v1759, 32
      %v1830 = vpop.permute.xlu0 %1829
      %1831 = vrot.lane.b32.xlu0 %v1760, 32
      %v1832 = vpop.permute.xlu0 %1831
      %1833 = vrot.lane.b32.xlu0 %v1761, 32
      %v1834 = vpop.permute.xlu0 %1833
      %1835 = vrot.lane.b32.xlu0 %v1762, 32
      %v1836 = vpop.permute.xlu0 %1835
      %1837 = vrot.lane.b32.xlu0 %v1763, 32
      %v1838 = vpop.permute.xlu0 %1837
      %1839 = vrot.lane.b32.xlu0 %v1764, 32
      %v1840 = vpop.permute.xlu0 %1839
      %1841 = vrot.lane.b32.xlu0 %v1765, 32
      %v1842 = vpop.permute.xlu0 %1841
      %1843 = vrot.lane.b32.xlu0 %v1766, 32
      %v1844 = vpop.permute.xlu0 %1843
      %1845 = vrot.lane.b32.xlu0 %v1767, 32
      %v1846 = vpop.permute.xlu0 %1845
      %1847 = vrot.lane.b32.xlu0 %v1768, 32
      %v1848 = vpop.permute.xlu0 %1847
      %1849 = vrot.lane.b32.xlu0 %v1769, 32
      %v1850 = vpop.permute.xlu0 %1849
      %1851 = vrot.lane.b32.xlu0 %v1770, 32
      %v1852 = vpop.permute.xlu0 %1851
      %1853 = vrot.lane.b32.xlu0 %v1771, 32
      %v1854 = vpop.permute.xlu0 %1853
      %1855 = vrot.lane.b32.xlu0 %v1772, 32
      %v1856 = vpop.permute.xlu0 %1855
      %1857 = vrot.lane.b32.xlu0 %v1773, 32
      %v1858 = vpop.permute.xlu0 %1857
      %1859 = vrot.lane.b32.xlu0 %v1774, 32
      %v1860 = vpop.permute.xlu0 %1859
      %1861 = vrot.lane.b32.xlu0 %v1775, 32
      %v1862 = vpop.permute.xlu0 %1861
      %1863 = vrot.lane.b32.xlu0 %v1776, 32
      %v1864 = vpop.permute.xlu0 %1863
      %1865 = vrot.lane.b32.xlu0 %v1777, 32
      %v1866 = vpop.permute.xlu0 %1865
      %1867 = vrot.lane.b32.xlu0 %v1778, 32
      %v1868 = vpop.permute.xlu0 %1867
      %1869 = vrot.lane.b32.xlu0 %v1779, 32
      %v1870 = vpop.permute.xlu0 %1869
      %1871 = vrot.lane.b32.xlu0 %v1780, 32
      %v1872 = vpop.permute.xlu0 %1871
      %1873 = vrot.lane.b32.xlu0 %v1781, 32
      %v1874 = vpop.permute.xlu0 %1873
      %1875 = vrot.lane.b32.xlu0 %v1782, 32
      %v1876 = vpop.permute.xlu0 %1875
      %1877 = vrot.lane.b32.xlu0 %v1783, 32
      %v1878 = vpop.permute.xlu0 %1877
      %1879 = vrot.lane.b32.xlu0 %v1784, 32
      %v1880 = vpop.permute.xlu0 %1879
      %vm1913 = vcmask 294144
      %1914 = vst.msk [vmem:[#allocation4] sm:$0xff] %vm1913, %v1818
      %1915 = vst.msk [vmem:[#allocation4 + $0x8] sm:$0xff] %vm1913, %v1820
      %1916 = vst.msk [vmem:[#allocation4 + $0x10] sm:$0xff] %vm1913, %v1822
      %1917 = vst.msk [vmem:[#allocation4 + $0x18] sm:$0xff] %vm1913, %v1824
      %1918 = vst.msk [vmem:[#allocation4 + $0x20] sm:$0xff] %vm1913, %v1826
      %1919 = vst.msk [vmem:[#allocation4 + $0x28] sm:$0xff] %vm1913, %v1828
      %1920 = vst.msk [vmem:[#allocation4 + $0x30] sm:$0xff] %vm1913, %v1830
      %1921 = vst.msk [vmem:[#allocation4 + $0x38] sm:$0xff] %vm1913, %v1832
      %1922 = vst.msk [vmem:[#allocation4 + $0x40] sm:$0xff] %vm1913, %v1834
      %1923 = vst.msk [vmem:[#allocation4 + $0x48] sm:$0xff] %vm1913, %v1836
      %1924 = vst.msk [vmem:[#allocation4 + $0x50] sm:$0xff] %vm1913, %v1838
      %1925 = vst.msk [vmem:[#allocation4 + $0x58] sm:$0xff] %vm1913, %v1840
      %1926 = vst.msk [vmem:[#allocation4 + $0x60] sm:$0xff] %vm1913, %v1842
      %1927 = vst.msk [vmem:[#allocation4 + $0x68] sm:$0xff] %vm1913, %v1844
      %1928 = vst.msk [vmem:[#allocation4 + $0x70] sm:$0xff] %vm1913, %v1846
      %1929 = vst.msk [vmem:[#allocation4 + $0x78] sm:$0xff] %vm1913, %v1848
      %1930 = vst.msk [vmem:[#allocation4 + $0x80] sm:$0xff] %vm1913, %v1850
      %1931 = vst.msk [vmem:[#allocation4 + $0x88] sm:$0xff] %vm1913, %v1852
      %1932 = vst.msk [vmem:[#allocation4 + $0x90] sm:$0xff] %vm1913, %v1854
      %1933 = vst.msk [vmem:[#allocation4 + $0x98] sm:$0xff] %vm1913, %v1856
      %1934 = vst.msk [vmem:[#allocation4 + $0xa0] sm:$0xff] %vm1913, %v1858
      %1935 = vst.msk [vmem:[#allocation4 + $0xa8] sm:$0xff] %vm1913, %v1860
      %1936 = vst.msk [vmem:[#allocation4 + $0xb0] sm:$0xff] %vm1913, %v1862
      %1937 = vst.msk [vmem:[#allocation4 + $0xb8] sm:$0xff] %vm1913, %v1864
      %1938 = vst.msk [vmem:[#allocation4 + $0xc0] sm:$0xff] %vm1913, %v1866
      %1939 = vst.msk [vmem:[#allocation4 + $0xc8] sm:$0xff] %vm1913, %v1868
      %1940 = vst.msk [vmem:[#allocation4 + $0xd0] sm:$0xff] %vm1913, %v1870
      %1941 = vst.msk [vmem:[#allocation4 + $0xd8] sm:$0xff] %vm1913, %v1872
      %1942 = vst.msk [vmem:[#allocation4 + $0xe0] sm:$0xff] %vm1913, %v1874
      %1943 = vst.msk [vmem:[#allocation4 + $0xe8] sm:$0xff] %vm1913, %v1876
      %1944 = vst.msk [vmem:[#allocation4 + $0xf0] sm:$0xff] %vm1913, %v1878
      %1945 = vst.msk [vmem:[#allocation4 + $0xf8] sm:$0xff] %vm1913, %v1880
      %v1946 = vld [vmem:[#allocation4] sm:$0xff]
      %v1947 = vld [vmem:[#allocation4 + $0x8] sm:$0xff]
      %v1948 = vld [vmem:[#allocation4 + $0x10] sm:$0xff]
      %v1949 = vld [vmem:[#allocation4 + $0x18] sm:$0xff]
      %v1950 = vld [vmem:[#allocation4 + $0x20] sm:$0xff]
      %v1951 = vld [vmem:[#allocation4 + $0x28] sm:$0xff]
      %v1952 = vld [vmem:[#allocation4 + $0x30] sm:$0xff]
      %v1953 = vld [vmem:[#allocation4 + $0x38] sm:$0xff]
      %v1954 = vld [vmem:[#allocation4 + $0x40] sm:$0xff]
      %v1955 = vld [vmem:[#allocation4 + $0x48] sm:$0xff]
      %v1956 = vld [vmem:[#allocation4 + $0x50] sm:$0xff]
      %v1957 = vld [vmem:[#allocation4 + $0x58] sm:$0xff]
      %v1958 = vld [vmem:[#allocation4 + $0x60] sm:$0xff]
      %v1959 = vld [vmem:[#allocation4 + $0x68] sm:$0xff]
      %v1960 = vld [vmem:[#allocation4 + $0x70] sm:$0xff]
      %v1961 = vld [vmem:[#allocation4 + $0x78] sm:$0xff]
      %v1962 = vld [vmem:[#allocation4 + $0x80] sm:$0xff]
      %v1963 = vld [vmem:[#allocation4 + $0x88] sm:$0xff]
      %v1964 = vld [vmem:[#allocation4 + $0x90] sm:$0xff]
      %v1965 = vld [vmem:[#allocation4 + $0x98] sm:$0xff]
      %v1966 = vld [vmem:[#allocation4 + $0xa0] sm:$0xff]
      %v1967 = vld [vmem:[#allocation4 + $0xa8] sm:$0xff]
      %v1968 = vld [vmem:[#allocation4 + $0xb0] sm:$0xff]
      %v1969 = vld [vmem:[#allocation4 + $0xb8] sm:$0xff]
      %v1970 = vld [vmem:[#allocation4 + $0xc0] sm:$0xff]
      %v1971 = vld [vmem:[#allocation4 + $0xc8] sm:$0xff]
      %v1972 = vld [vmem:[#allocation4 + $0xd0] sm:$0xff]
      %v1973 = vld [vmem:[#allocation4 + $0xd8] sm:$0xff]
      %v1974 = vld [vmem:[#allocation4 + $0xe0] sm:$0xff]
      %v1975 = vld [vmem:[#allocation4 + $0xe8] sm:$0xff]
      %v1976 = vld [vmem:[#allocation4 + $0xf0] sm:$0xff]
      %v1977 = vld [vmem:[#allocation4 + $0xf8] sm:$0xff]
      %v1978 = vld [vmem:[%s1] sm:$0xff]
      %v1979 = vld [vmem:[%s1 + $0x8] sm:$0xff]
      %v1980 = vld [vmem:[%s1 + $0x10] sm:$0xff]
      %v1981 = vld [vmem:[%s1 + $0x18] sm:$0xff]
      %v1982 = vld [vmem:[%s1 + $0x20] sm:$0xf]
      %v1983 = vld [vmem:[%s2] sm:$0x1]
      %v1985 = vlaneseq
      %v1986 = vshrl.u32 %v1985, 7
      %v1987 = vsub.s32 0, %v1986
      %v1988 = vrot.slane %v1983, %v1987
      %vm1990 = vcmask 293888
      %v1992 = vsel %vm1990, %v1946, 0
      %v1995 = vsel %vm1990, %v1947, 0
      %v1998 = vsel %vm1990, %v1948, 0
      %v2001 = vsel %vm1990, %v1949, 0
      %v2004 = vsel %vm1990, %v1950, 0
      %v2007 = vsel %vm1990, %v1951, 0
      %v2010 = vsel %vm1990, %v1952, 0
      %v2013 = vsel %vm1990, %v1953, 0
      %v2016 = vsel %vm1990, %v1954, 0
      %v2019 = vsel %vm1990, %v1955, 0
      %v2022 = vsel %vm1990, %v1956, 0
      %v2025 = vsel %vm1990, %v1957, 0
      %v2028 = vsel %vm1990, %v1958, 0
      %v2031 = vsel %vm1990, %v1959, 0
      %v2034 = vsel %vm1990, %v1960, 0
      %v2037 = vsel %vm1990, %v1961, 0
      %v2040 = vsel %vm1990, %v1962, 0
      %v2043 = vsel %vm1990, %v1963, 0
      %v2046 = vsel %vm1990, %v1964, 0
      %v2049 = vsel %vm1990, %v1965, 0
      %v2052 = vsel %vm1990, %v1966, 0
      %v2055 = vsel %vm1990, %v1967, 0
      %v2058 = vsel %vm1990, %v1968, 0
      %v2061 = vsel %vm1990, %v1969, 0
      %v2064 = vsel %vm1990, %v1970, 0
      %v2067 = vsel %vm1990, %v1971, 0
      %v2070 = vsel %vm1990, %v1972, 0
      %v2073 = vsel %vm1990, %v1973, 0
      %v2076 = vsel %vm1990, %v1974, 0
      %v2079 = vsel %vm1990, %v1975, 0
      %v2082 = vsel %vm1990, %v1976, 0
      %v2085 = vsel %vm1990, %v1977, 0
      %vm2087 = vcmask 1043456
      %v2089 = vsel %vm2087, %v1982, 0
      %2091 = vmatprep.subr.mxu0 0.0
      %2092 = vmatpush1.msra.mxu0 %v1978
      %2093 = vmatprep.subr.mxu0 0.0
      %2094 = vmatpush1.msra.mxu0 %v1979
      %2095 = vmatprep.subr.mxu0 0.0
      %2096 = vmatpush1.msra.mxu0 %v1980
      %2097 = vmatprep.subr.mxu0 0.0
      %2098 = vmatpush1.msra.mxu0 %v1981
      %2099 = vmatprep.subr.mxu0 0.0
      %2100 = vmatpush1.msra.mxu0 %v2089
      %2101 = vmatprep.subr.mxu0 0.0
      %2102 = vmatpush1.msra.mxu0 0.0
      %2103 = vmatprep.subr.mxu0 0.0
      %2104 = vmatpush1.msra.mxu0 0.0
      %2105 = vmatprep.subr.mxu0 0.0
      %2106 = vmatpush1.msra.mxu0 0.0
      %2107 = vmatprep.subr.mxu0 0.0
      %2108 = vmatpush1.msra.mxu0 0.0
      %2109 = vmatprep.subr.mxu0 0.0
      %2110 = vmatpush1.msra.mxu0 0.0
      %2111 = vmatprep.subr.mxu0 0.0
      %2112 = vmatpush1.msra.mxu0 0.0
      %2113 = vmatprep.subr.mxu0 0.0
      %2114 = vmatpush1.msra.mxu0 0.0
      %2115 = vmatprep.subr.mxu0 0.0
      %2116 = vmatpush1.msra.mxu0 0.0
      %2117 = vmatprep.subr.mxu0 0.0
      %2118 = vmatpush1.msra.mxu0 0.0
      %2119 = vmatprep.subr.mxu0 0.0
      %2120 = vmatpush1.msra.mxu0 0.0
      %2121 = vmatprep.subr.mxu0 0.0
      %2122 = vmatpush1.msra.mxu0 0.0
      %2123 = vmatprep.subr.mxu0 0.0
      %2124 = vmatpush1.msra.mxu0 0.0
      %2125 = vmatprep.subr.mxu0 0.0
      %2126 = vmatpush1.msra.mxu0 0.0
      %2127 = vmatprep.subr.mxu0 0.0
      %2128 = vmatpush1.msra.mxu0 0.0
      %2129 = vmatprep.subr.mxu0 0.0
      %2130 = vmatpush1.msra.mxu0 0.0
      %2131 = vmatprep.subr.mxu0 0.0
      %2132 = vmatpush1.msra.mxu0 0.0
      %2133 = vmatprep.subr.mxu0 0.0
      %2134 = vmatpush1.msra.mxu0 0.0
      %2135 = vmatprep.subr.mxu0 0.0
      %2136 = vmatpush1.msra.mxu0 0.0
      %2137 = vmatprep.subr.mxu0 0.0
      %2138 = vmatpush1.msra.mxu0 0.0
      %2139 = vmatprep.subr.mxu0 0.0
      %2140 = vmatpush1.msra.mxu0 0.0
      %2141 = vmatprep.subr.mxu0 0.0
      %2142 = vmatpush1.msra.mxu0 0.0
      %2143 = vmatprep.subr.mxu0 0.0
      %2144 = vmatpush1.msra.mxu0 0.0
      %2145 = vmatprep.subr.mxu0 0.0
      %2146 = vmatpush1.msra.mxu0 0.0
      %2147 = vmatprep.subr.mxu0 0.0
      %2148 = vmatpush1.msra.mxu0 0.0
      %2149 = vmatprep.subr.mxu0 0.0
      %2150 = vmatpush1.msra.mxu0 0.0
      %2151 = vmatprep.subr.mxu0 0.0
      %2152 = vmatpush1.msra.mxu0 0.0
      %2153 = vmatprep.subr.mxu0 0.0
      %2154 = vmatpush1.msra.mxu0 0.0
      %2155 = vmatprep.mubr.f32.mxu0 0.0
      %2156 = vmatmul.mubr.f32.gmra.mrb[0].mxu0 %v1992
      %v2157 = vpop.f32.mrb[0].mxu0
      %v2158 = vadd.f32 %v1988, %v2157
      %v2159 = vpop.f32.mrb[0].mxu0
      %2160 = vmatprep.mubr.f32.mxu0 0.0
      %2161 = vmatmul.mubr.f32.gmra.mrb[0].mxu0 %v1995
      %v2162 = vpop.f32.mrb[0].mxu0
      %v2163 = vadd.f32 %v1988, %v2162
      %v2164 = vpop.f32.mrb[0].mxu0
      %2165 = vmatprep.mubr.f32.mxu0 0.0
      %2166 = vmatmul.mubr.f32.gmra.mrb[0].mxu0 %v1998
      %v2167 = vpop.f32.mrb[0].mxu0
      %v2168 = vadd.f32 %v1988, %v2167
      %v2169 = vpop.f32.mrb[0].mxu0
      %2170 = vmatprep.mubr.f32.mxu0 0.0
      %2171 = vmatmul.mubr.f32.gmra.mrb[0].mxu0 %v2001
      %v2172 = vpop.f32.mrb[0].mxu0
      %v2173 = vadd.f32 %v1988, %v2172
      %v2174 = vpop.f32.mrb[0].mxu0
      %2175 = vmatprep.mubr.f32.mxu0 0.0
      %2176 = vmatmul.mubr.f32.gmra.mrb[0].mxu0 %v2004
      %v2177 = vpop.f32.mrb[0].mxu0
      %v2178 = vadd.f32 %v1988, %v2177
      %v2179 = vpop.f32.mrb[0].mxu0
      %2180 = vmatprep.mubr.f32.mxu0 0.0
      %2181 = vmatmul.mubr.f32.gmra.mrb[0].mxu0 %v2007
      %v2182 = vpop.f32.mrb[0].mxu0
      %v2183 = vadd.f32 %v1988, %v2182
      %v2184 = vpop.f32.mrb[0].mxu0
      %2185 = vmatprep.mubr.f32.mxu0 0.0
      %2186 = vmatmul.mubr.f32.gmra.mrb[0].mxu0 %v2010
      %v2187 = vpop.f32.mrb[0].mxu0
      %v2188 = vadd.f32 %v1988, %v2187
      %v2189 = vpop.f32.mrb[0].mxu0
      %2190 = vmatprep.mubr.f32.mxu0 0.0
      %2191 = vmatmul.mubr.f32.gmra.mrb[0].mxu0 %v2013
      %v2192 = vpop.f32.mrb[0].mxu0
      %v2193 = vadd.f32 %v1988, %v2192
      %v2194 = vpop.f32.mrb[0].mxu0
      %2195 = vmatprep.mubr.f32.mxu0 0.0
      %2196 = vmatmul.mubr.f32.gmra.mrb[0].mxu0 %v2016
      %v2197 = vpop.f32.mrb[0].mxu0
      %v2198 = vadd.f32 %v1988, %v2197
      %v2199 = vpop.f32.mrb[0].mxu0
      %2200 = vmatprep.mubr.f32.mxu0 0.0
      %2201 = vmatmul.mubr.f32.gmra.mrb[0].mxu0 %v2019
      %v2202 = vpop.f32.mrb[0].mxu0
      %v2203 = vadd.f32 %v1988, %v2202
      %v2204 = vpop.f32.mrb[0].mxu0
      %2205 = vmatprep.mubr.f32.mxu0 0.0
      %2206 = vmatmul.mubr.f32.gmra.mrb[0].mxu0 %v2022
      %v2207 = vpop.f32.mrb[0].mxu0
      %v2208 = vadd.f32 %v1988, %v2207
      %v2209 = vpop.f32.mrb[0].mxu0
      %2210 = vmatprep.mubr.f32.mxu0 0.0
      %2211 = vmatmul.mubr.f32.gmra.mrb[0].mxu0 %v2025
      %v2212 = vpop.f32.mrb[0].mxu0
      %v2213 = vadd.f32 %v1988, %v2212
      %v2214 = vpop.f32.mrb[0].mxu0
      %2215 = vmatprep.mubr.f32.mxu0 0.0
      %2216 = vmatmul.mubr.f32.gmra.mrb[0].mxu0 %v2028
      %v2217 = vpop.f32.mrb[0].mxu0
      %v2218 = vadd.f32 %v1988, %v2217
      %v2219 = vpop.f32.mrb[0].mxu0
      %2220 = vmatprep.mubr.f32.mxu0 0.0
      %2221 = vmatmul.mubr.f32.gmra.mrb[0].mxu0 %v2031
      %v2222 = vpop.f32.mrb[0].mxu0
      %v2223 = vadd.f32 %v1988, %v2222
      %v2224 = vpop.f32.mrb[0].mxu0
      %2225 = vmatprep.mubr.f32.mxu0 0.0
      %2226 = vmatmul.mubr.f32.gmra.mrb[0].mxu0 %v2034
      %v2227 = vpop.f32.mrb[0].mxu0
      %v2228 = vadd.f32 %v1988, %v2227
      %v2229 = vpop.f32.mrb[0].mxu0
      %2230 = vmatprep.mubr.f32.mxu0 0.0
      %2231 = vmatmul.mubr.f32.gmra.mrb[0].mxu0 %v2037
      %v2232 = vpop.f32.mrb[0].mxu0
      %v2233 = vadd.f32 %v1988, %v2232
      %v2234 = vpop.f32.mrb[0].mxu0
      %2235 = vmatprep.mubr.f32.mxu0 0.0
      %2236 = vmatmul.mubr.f32.gmra.mrb[0].mxu0 %v2040
      %v2237 = vpop.f32.mrb[0].mxu0
      %v2238 = vadd.f32 %v1988, %v2237
      %v2239 = vpop.f32.mrb[0].mxu0
      %2240 = vmatprep.mubr.f32.mxu0 0.0
      %2241 = vmatmul.mubr.f32.gmra.mrb[0].mxu0 %v2043
      %v2242 = vpop.f32.mrb[0].mxu0
      %v2243 = vadd.f32 %v1988, %v2242
      %v2244 = vpop.f32.mrb[0].mxu0
      %2245 = vmatprep.mubr.f32.mxu0 0.0
      %2246 = vmatmul.mubr.f32.gmra.mrb[0].mxu0 %v2046
      %v2247 = vpop.f32.mrb[0].mxu0
      %v2248 = vadd.f32 %v1988, %v2247
      %v2249 = vpop.f32.mrb[0].mxu0
      %2250 = vmatprep.mubr.f32.mxu0 0.0
      %2251 = vmatmul.mubr.f32.gmra.mrb[0].mxu0 %v2049
      %v2252 = vpop.f32.mrb[0].mxu0
      %v2253 = vadd.f32 %v1988, %v2252
      %v2254 = vpop.f32.mrb[0].mxu0
      %2255 = vmatprep.mubr.f32.mxu0 0.0
      %2256 = vmatmul.mubr.f32.gmra.mrb[0].mxu0 %v2052
      %v2257 = vpop.f32.mrb[0].mxu0
      %v2258 = vadd.f32 %v1988, %v2257
      %v2259 = vpop.f32.mrb[0].mxu0
      %2260 = vmatprep.mubr.f32.mxu0 0.0
      %2261 = vmatmul.mubr.f32.gmra.mrb[0].mxu0 %v2055
      %v2262 = vpop.f32.mrb[0].mxu0
      %v2263 = vadd.f32 %v1988, %v2262
      %v2264 = vpop.f32.mrb[0].mxu0
      %2265 = vmatprep.mubr.f32.mxu0 0.0
      %2266 = vmatmul.mubr.f32.gmra.mrb[0].mxu0 %v2058
      %v2267 = vpop.f32.mrb[0].mxu0
      %v2268 = vadd.f32 %v1988, %v2267
      %v2269 = vpop.f32.mrb[0].mxu0
      %2270 = vmatprep.mubr.f32.mxu0 0.0
      %2271 = vmatmul.mubr.f32.gmra.mrb[0].mxu0 %v2061
      %v2272 = vpop.f32.mrb[0].mxu0
      %v2273 = vadd.f32 %v1988, %v2272
      %v2274 = vpop.f32.mrb[0].mxu0
      %2275 = vmatprep.mubr.f32.mxu0 0.0
      %2276 = vmatmul.mubr.f32.gmra.mrb[0].mxu0 %v2064
      %v2277 = vpop.f32.mrb[0].mxu0
      %v2278 = vadd.f32 %v1988, %v2277
      %v2279 = vpop.f32.mrb[0].mxu0
      %2280 = vmatprep.mubr.f32.mxu0 0.0
      %2281 = vmatmul.mubr.f32.gmra.mrb[0].mxu0 %v2067
      %v2282 = vpop.f32.mrb[0].mxu0
      %v2283 = vadd.f32 %v1988, %v2282
      %v2284 = vpop.f32.mrb[0].mxu0
      %2285 = vmatprep.mubr.f32.mxu0 0.0
      %2286 = vmatmul.mubr.f32.gmra.mrb[0].mxu0 %v2070
      %v2287 = vpop.f32.mrb[0].mxu0
      %v2288 = vadd.f32 %v1988, %v2287
      %v2289 = vpop.f32.mrb[0].mxu0
      %2290 = vmatprep.mubr.f32.mxu0 0.0
      %2291 = vmatmul.mubr.f32.gmra.mrb[0].mxu0 %v2073
      %v2292 = vpop.f32.mrb[0].mxu0
      %v2293 = vadd.f32 %v1988, %v2292
      %v2294 = vpop.f32.mrb[0].mxu0
      %2295 = vmatprep.mubr.f32.mxu0 0.0
      %2296 = vmatmul.mubr.f32.gmra.mrb[0].mxu0 %v2076
      %v2297 = vpop.f32.mrb[0].mxu0
      %v2298 = vadd.f32 %v1988, %v2297
      %v2299 = vpop.f32.mrb[0].mxu0
      %2300 = vmatprep.mubr.f32.mxu0 0.0
      %2301 = vmatmul.mubr.f32.gmra.mrb[0].mxu0 %v2079
      %v2302 = vpop.f32.mrb[0].mxu0
      %v2303 = vadd.f32 %v1988, %v2302
      %v2304 = vpop.f32.mrb[0].mxu0
      %2305 = vmatprep.mubr.f32.mxu0 0.0
      %2306 = vmatmul.mubr.f32.gmra.mrb[0].mxu0 %v2082
      %v2307 = vpop.f32.mrb[0].mxu0
      %v2308 = vadd.f32 %v1988, %v2307
      %v2309 = vpop.f32.mrb[0].mxu0
      %2310 = vmatprep.mubr.f32.mxu0 0.0
      %2311 = vmatmul.mubr.f32.gmra.mrb[0].mxu0 %v2085
      %v2312 = vpop.f32.mrb[0].mxu0
      %v2313 = vadd.f32 %v1988, %v2312
      %v2314 = vpop.f32.mrb[0].mxu0
      %2315 = vdwg.mxu0
      %v2316 = vmax.f32 %v2158, 0.0
      %v2317 = vmax.f32 %v2163, 0.0
      %v2318 = vmax.f32 %v2168, 0.0
      %v2319 = vmax.f32 %v2173, 0.0
      %v2320 = vmax.f32 %v2178, 0.0
      %v2321 = vmax.f32 %v2183, 0.0
      %v2322 = vmax.f32 %v2188, 0.0
      %v2323 = vmax.f32 %v2193, 0.0
      %v2324 = vmax.f32 %v2198, 0.0
      %v2325 = vmax.f32 %v2203, 0.0
      %v2326 = vmax.f32 %v2208, 0.0
      %v2327 = vmax.f32 %v2213, 0.0
      %v2328 = vmax.f32 %v2218, 0.0
      %v2329 = vmax.f32 %v2223, 0.0
      %v2330 = vmax.f32 %v2228, 0.0
      %v2331 = vmax.f32 %v2233, 0.0
      %v2332 = vmax.f32 %v2238, 0.0
      %v2333 = vmax.f32 %v2243, 0.0
      %v2334 = vmax.f32 %v2248, 0.0
      %v2335 = vmax.f32 %v2253, 0.0
      %v2336 = vmax.f32 %v2258, 0.0
      %v2337 = vmax.f32 %v2263, 0.0
      %v2338 = vmax.f32 %v2268, 0.0
      %v2339 = vmax.f32 %v2273, 0.0
      %v2340 = vmax.f32 %v2278, 0.0
      %v2341 = vmax.f32 %v2283, 0.0
      %v2342 = vmax.f32 %v2288, 0.0
      %v2343 = vmax.f32 %v2293, 0.0
      %v2344 = vmax.f32 %v2298, 0.0
      %v2345 = vmax.f32 %v2303, 0.0
      %v2346 = vmax.f32 %v2308, 0.0
      %v2347 = vmax.f32 %v2313, 0.0
      %vm2348 = vcmask 64512
      %2349 = vst.msk [vmem:[#allocation3] sm:$0xff] %vm2348, 0.0
      %2350 = vst.msk [vmem:[#allocation3 + $0x8] sm:$0xff] %vm2348, 0.0
      %2351 = vst.msk [vmem:[#allocation3 + $0x10] sm:$0xff] %vm2348, 0.0
      %vm2352 = vcmask 57344
      %2353 = vst.msk [vmem:[#allocation3 + $0x18] sm:$0x1] %vm2352, 0.0
      %s2354 = scalar_lea.vmem [#allocation3], 544
      %2355 = vst.msk [vmem:[%s2354] sm:$0xff] %vm2348, 0.0
      %2356 = vst.msk [vmem:[%s2354 + $0x8] sm:$0xff] %vm2348, 0.0
      %2357 = vst.msk [vmem:[%s2354 + $0x10] sm:$0xff] %vm2348, 0.0
      %2358 = vst.msk [vmem:[%s2354 + $0x18] sm:$0x1] %vm2352, 0.0
      %2359 = vst.msk [vmem:[#allocation3 + $0x7] sm:$0x1] %vm2352, 0.0
      %2360 = vst.msk [vmem:[#allocation3 + $0x27] sm:$0x1] %vm2352, 0.0
      %2361 = vst.msk [vmem:[#allocation3 + $0x47] sm:$0x1] %vm2352, 0.0
      %2362 = vst.msk [vmem:[#allocation3 + $0x67] sm:$0x1] %vm2352, 0.0
      %2363 = vst.msk [vmem:[#allocation3 + $0x87] sm:$0x1] %vm2352, 0.0
      %2364 = vst.msk [vmem:[#allocation3 + $0xa7] sm:$0x1] %vm2352, 0.0
      %2365 = vst.msk [vmem:[#allocation3 + $0xc7] sm:$0x1] %vm2352, 0.0
      %2366 = vst.msk [vmem:[#allocation3 + $0xe7] sm:$0x1] %vm2352, 0.0
      %2367 = vst.msk [vmem:[#allocation3 + $0x107] sm:$0x1] %vm2352, 0.0
      %2368 = vst.msk [vmem:[#allocation3 + $0x127] sm:$0x1] %vm2352, 0.0
      %2369 = vst.msk [vmem:[#allocation3 + $0x147] sm:$0x1] %vm2352, 0.0
      %2370 = vst.msk [vmem:[#allocation3 + $0x167] sm:$0x1] %vm2352, 0.0
      %2371 = vst.msk [vmem:[#allocation3 + $0x187] sm:$0x1] %vm2352, 0.0
      %2372 = vst.msk [vmem:[#allocation3 + $0x1a7] sm:$0x1] %vm2352, 0.0
      %2373 = vst.msk [vmem:[#allocation3 + $0x1c7] sm:$0x1] %vm2352, 0.0
      %2374 = vst.msk [vmem:[#allocation3 + $0x1e7] sm:$0x1] %vm2352, 0.0
      %2375 = vst.msk [vmem:[#allocation3 + $0x207] sm:$0x1] %vm2352, 0.0
      %2376 = vst.msk [vmem:[#allocation3 + $0x227] sm:$0x1] %vm2352, 0.0
      %2377 = vst.msk [vmem:[#allocation3 + $0x18] sm:$0x1] %vm2352, 0.0
      %2378 = vst.msk [vmem:[#allocation3 + $0x38] sm:$0x1] %vm2352, 0.0
      %2379 = vst.msk [vmem:[#allocation3 + $0x58] sm:$0x1] %vm2352, 0.0
      %2380 = vst.msk [vmem:[#allocation3 + $0x78] sm:$0x1] %vm2352, 0.0
      %2381 = vst.msk [vmem:[#allocation3 + $0x98] sm:$0x1] %vm2352, 0.0
      %2382 = vst.msk [vmem:[#allocation3 + $0xb8] sm:$0x1] %vm2352, 0.0
      %2383 = vst.msk [vmem:[#allocation3 + $0xd8] sm:$0x1] %vm2352, 0.0
      %2384 = vst.msk [vmem:[#allocation3 + $0xf8] sm:$0x1] %vm2352, 0.0
      %2385 = vst.msk [vmem:[#allocation3 + $0x118] sm:$0x1] %vm2352, 0.0
      %2386 = vst.msk [vmem:[#allocation3 + $0x138] sm:$0x1] %vm2352, 0.0
      %2387 = vst.msk [vmem:[#allocation3 + $0x158] sm:$0x1] %vm2352, 0.0
      %2388 = vst.msk [vmem:[#allocation3 + $0x178] sm:$0x1] %vm2352, 0.0
      %2389 = vst.msk [vmem:[#allocation3 + $0x198] sm:$0x1] %vm2352, 0.0
      %2390 = vst.msk [vmem:[#allocation3 + $0x1b8] sm:$0x1] %vm2352, 0.0
      %2391 = vst.msk [vmem:[#allocation3 + $0x1d8] sm:$0x1] %vm2352, 0.0
      %2392 = vst.msk [vmem:[#allocation3 + $0x1f8] sm:$0x1] %vm2352, 0.0
      %2393 = vst.msk [vmem:[#allocation3 + $0x218] sm:$0x1] %vm2352, 0.0
      %2394 = vst.msk [vmem:[#allocation3 + $0x238] sm:$0x1] %vm2352, 0.0
      %s2395 = scalar_lea.vmem [#allocation3], 32
      %2396 = vst.msk [vmem:[%s2395 + $0x8] sm:$0xff] %vm2348, %v2316
      %2397 = vst.msk [vmem:[%s2395 + $0x10] sm:$0xff] %vm2348, %v2317
      %2398 = vst.msk [vmem:[%s2395 + $0x28] sm:$0xff] %vm2348, %v2318
      %2399 = vst.msk [vmem:[%s2395 + $0x30] sm:$0xff] %vm2348, %v2319
      %2400 = vst.msk [vmem:[%s2395 + $0x48] sm:$0xff] %vm2348, %v2320
      %2401 = vst.msk [vmem:[%s2395 + $0x50] sm:$0xff] %vm2348, %v2321
      %2402 = vst.msk [vmem:[%s2395 + $0x68] sm:$0xff] %vm2348, %v2322
      %2403 = vst.msk [vmem:[%s2395 + $0x70] sm:$0xff] %vm2348, %v2323
      %2404 = vst.msk [vmem:[%s2395 + $0x88] sm:$0xff] %vm2348, %v2324
      %2405 = vst.msk [vmem:[%s2395 + $0x90] sm:$0xff] %vm2348, %v2325
      %2406 = vst.msk [vmem:[%s2395 + $0xa8] sm:$0xff] %vm2348, %v2326
      %2407 = vst.msk [vmem:[%s2395 + $0xb0] sm:$0xff] %vm2348, %v2327
      %2408 = vst.msk [vmem:[%s2395 + $0xc8] sm:$0xff] %vm2348, %v2328
      %2409 = vst.msk [vmem:[%s2395 + $0xd0] sm:$0xff] %vm2348, %v2329
      %2410 = vst.msk [vmem:[%s2395 + $0xe8] sm:$0xff] %vm2348, %v2330
      %2411 = vst.msk [vmem:[%s2395 + $0xf0] sm:$0xff] %vm2348, %v2331
      %2412 = vst.msk [vmem:[%s2395 + $0x108] sm:$0xff] %vm2348, %v2332
      %2413 = vst.msk [vmem:[%s2395 + $0x110] sm:$0xff] %vm2348, %v2333
      %2414 = vst.msk [vmem:[%s2395 + $0x128] sm:$0xff] %vm2348, %v2334
      %2415 = vst.msk [vmem:[%s2395 + $0x130] sm:$0xff] %vm2348, %v2335
      %2416 = vst.msk [vmem:[%s2395 + $0x148] sm:$0xff] %vm2348, %v2336
      %2417 = vst.msk [vmem:[%s2395 + $0x150] sm:$0xff] %vm2348, %v2337
      %2418 = vst.msk [vmem:[%s2395 + $0x168] sm:$0xff] %vm2348, %v2338
      %2419 = vst.msk [vmem:[%s2395 + $0x170] sm:$0xff] %vm2348, %v2339
      %2420 = vst.msk [vmem:[%s2395 + $0x188] sm:$0xff] %vm2348, %v2340
      %2421 = vst.msk [vmem:[%s2395 + $0x190] sm:$0xff] %vm2348, %v2341
      %2422 = vst.msk [vmem:[%s2395 + $0x1a8] sm:$0xff] %vm2348, %v2342
      %2423 = vst.msk [vmem:[%s2395 + $0x1b0] sm:$0xff] %vm2348, %v2343
      %2424 = vst.msk [vmem:[%s2395 + $0x1c8] sm:$0xff] %vm2348, %v2344
      %2425 = vst.msk [vmem:[%s2395 + $0x1d0] sm:$0xff] %vm2348, %v2345
      %2426 = vst.msk [vmem:[%s2395 + $0x1e8] sm:$0xff] %vm2348, %v2346
      %2427 = vst.msk [vmem:[%s2395 + $0x1f0] sm:$0xff] %vm2348, %v2347
      %v2428 = vld [vmem:[#allocation3 + $0x7] sm:$0xff]
      %v2429 = vld [vmem:[#allocation3 + $0xf] sm:$0xff]
      %v2430 = vld [vmem:[#allocation3 + $0x27] sm:$0xff]
      %v2431 = vld [vmem:[#allocation3 + $0x2f] sm:$0xff]
      %v2432 = vld [vmem:[#allocation3 + $0x47] sm:$0xff]
      %v2433 = vld [vmem:[#allocation3 + $0x4f] sm:$0xff]
      %v2434 = vld [vmem:[#allocation3 + $0x67] sm:$0xff]
      %v2435 = vld [vmem:[#allocation3 + $0x6f] sm:$0xff]
      %v2436 = vld [vmem:[#allocation3 + $0x87] sm:$0xff]
      %v2437 = vld [vmem:[#allocation3 + $0x8f] sm:$0xff]
      %v2438 = vld [vmem:[#allocation3 + $0xa7] sm:$0xff]
      %v2439 = vld [vmem:[#allocation3 + $0xaf] sm:$0xff]
      %v2440 = vld [vmem:[#allocation3 + $0xc7] sm:$0xff]
      %v2441 = vld [vmem:[#allocation3 + $0xcf] sm:$0xff]
      %v2442 = vld [vmem:[#allocation3 + $0xe7] sm:$0xff]
      %v2443 = vld [vmem:[#allocation3 + $0xef] sm:$0xff]
      %v2444 = vld [vmem:[#allocation3 + $0x107] sm:$0xff]
      %v2445 = vld [vmem:[#allocation3 + $0x10f] sm:$0xff]
      %v2446 = vld [vmem:[#allocation3 + $0x127] sm:$0xff]
      %v2447 = vld [vmem:[#allocation3 + $0x12f] sm:$0xff]
      %v2448 = vld [vmem:[#allocation3 + $0x147] sm:$0xff]
      %v2449 = vld [vmem:[#allocation3 + $0x14f] sm:$0xff]
      %v2450 = vld [vmem:[#allocation3 + $0x167] sm:$0xff]
      %v2451 = vld [vmem:[#allocation3 + $0x16f] sm:$0xff]
      %v2452 = vld [vmem:[#allocation3 + $0x187] sm:$0xff]
      %v2453 = vld [vmem:[#allocation3 + $0x18f] sm:$0xff]
      %v2454 = vld [vmem:[#allocation3 + $0x1a7] sm:$0xff]
      %v2455 = vld [vmem:[#allocation3 + $0x1af] sm:$0xff]
      %v2456 = vld [vmem:[#allocation3 + $0x1c7] sm:$0xff]
      %v2457 = vld [vmem:[#allocation3 + $0x1cf] sm:$0xff]
      %v2458 = vld [vmem:[#allocation3 + $0x1e7] sm:$0xff]
      %v2459 = vld [vmem:[#allocation3 + $0x1ef] sm:$0xff]
      %2460 = vst.msk [vmem:[#allocation5] sm:$0xff] %vm2348, %v2428
      %2461 = vst.msk [vmem:[#allocation5 + $0x8] sm:$0xff] %vm2348, %v2429
      %2462 = vst.msk [vmem:[#allocation5 + $0x10] sm:$0xff] %vm2348, %v2430
      %2463 = vst.msk [vmem:[#allocation5 + $0x18] sm:$0xff] %vm2348, %v2431
      %2464 = vst.msk [vmem:[#allocation5 + $0x20] sm:$0xff] %vm2348, %v2432
      %2465 = vst.msk [vmem:[#allocation5 + $0x28] sm:$0xff] %vm2348, %v2433
      %2466 = vst.msk [vmem:[#allocation5 + $0x30] sm:$0xff] %vm2348, %v2434
      %2467 = vst.msk [vmem:[#allocation5 + $0x38] sm:$0xff] %vm2348, %v2435
      %2468 = vst.msk [vmem:[#allocation5 + $0x40] sm:$0xff] %vm2348, %v2436
      %2469 = vst.msk [vmem:[#allocation5 + $0x48] sm:$0xff] %vm2348, %v2437
      %2470 = vst.msk [vmem:[#allocation5 + $0x50] sm:$0xff] %vm2348, %v2438
      %2471 = vst.msk [vmem:[#allocation5 + $0x58] sm:$0xff] %vm2348, %v2439
      %2472 = vst.msk [vmem:[#allocation5 + $0x60] sm:$0xff] %vm2348, %v2440
      %2473 = vst.msk [vmem:[#allocation5 + $0x68] sm:$0xff] %vm2348, %v2441
      %2474 = vst.msk [vmem:[#allocation5 + $0x70] sm:$0xff] %vm2348, %v2442
      %2475 = vst.msk [vmem:[#allocation5 + $0x78] sm:$0xff] %vm2348, %v2443
      %2476 = vst.msk [vmem:[#allocation5 + $0x80] sm:$0xff] %vm2348, %v2444
      %2477 = vst.msk [vmem:[#allocation5 + $0x88] sm:$0xff] %vm2348, %v2445
      %2478 = vst.msk [vmem:[#allocation5 + $0x90] sm:$0xff] %vm2348, %v2446
      %2479 = vst.msk [vmem:[#allocation5 + $0x98] sm:$0xff] %vm2348, %v2447
      %2480 = vst.msk [vmem:[#allocation5 + $0xa0] sm:$0xff] %vm2348, %v2448
      %2481 = vst.msk [vmem:[#allocation5 + $0xa8] sm:$0xff] %vm2348, %v2449
      %2482 = vst.msk [vmem:[#allocation5 + $0xb0] sm:$0xff] %vm2348, %v2450
      %2483 = vst.msk [vmem:[#allocation5 + $0xb8] sm:$0xff] %vm2348, %v2451
      %2484 = vst.msk [vmem:[#allocation5 + $0xc0] sm:$0xff] %vm2348, %v2452
      %2485 = vst.msk [vmem:[#allocation5 + $0xc8] sm:$0xff] %vm2348, %v2453
      %2486 = vst.msk [vmem:[#allocation5 + $0xd0] sm:$0xff] %vm2348, %v2454
      %2487 = vst.msk [vmem:[#allocation5 + $0xd8] sm:$0xff] %vm2348, %v2455
      %2488 = vst.msk [vmem:[#allocation5 + $0xe0] sm:$0xff] %vm2348, %v2456
      %2489 = vst.msk [vmem:[#allocation5 + $0xe8] sm:$0xff] %vm2348, %v2457
      %2490 = vst.msk [vmem:[#allocation5 + $0xf0] sm:$0xff] %vm2348, %v2458
      %2491 = vst.msk [vmem:[#allocation5 + $0xf8] sm:$0xff] %vm2348, %v2459
      %v2492 = vld [vmem:[#allocation3 + $0x8] sm:$0xff]
      %v2493 = vld [vmem:[#allocation3 + $0x10] sm:$0xff]
      %v2494 = vld [vmem:[#allocation3 + $0x28] sm:$0xff]
      %v2495 = vld [vmem:[#allocation3 + $0x30] sm:$0xff]
      %v2496 = vld [vmem:[#allocation3 + $0x48] sm:$0xff]
      %v2497 = vld [vmem:[#allocation3 + $0x50] sm:$0xff]
      %v2498 = vld [vmem:[#allocation3 + $0x68] sm:$0xff]
      %v2499 = vld [vmem:[#allocation3 + $0x70] sm:$0xff]
      %v2500 = vld [vmem:[#allocation3 + $0x88] sm:$0xff]
      %v2501 = vld [vmem:[#allocation3 + $0x90] sm:$0xff]
      %v2502 = vld [vmem:[#allocation3 + $0xa8] sm:$0xff]
      %v2503 = vld [vmem:[#allocation3 + $0xb0] sm:$0xff]
      %v2504 = vld [vmem:[#allocation3 + $0xc8] sm:$0xff]
      %v2505 = vld [vmem:[#allocation3 + $0xd0] sm:$0xff]
      %v2506 = vld [vmem:[#allocation3 + $0xe8] sm:$0xff]
      %v2507 = vld [vmem:[#allocation3 + $0xf0] sm:$0xff]
      %v2508 = vld [vmem:[#allocation3 + $0x108] sm:$0xff]
      %v2509 = vld [vmem:[#allocation3 + $0x110] sm:$0xff]
      %v2510 = vld [vmem:[#allocation3 + $0x128] sm:$0xff]
      %v2511 = vld [vmem:[#allocation3 + $0x130] sm:$0xff]
      %v2512 = vld [vmem:[#allocation3 + $0x148] sm:$0xff]
      %v2513 = vld [vmem:[#allocation3 + $0x150] sm:$0xff]
      %v2514 = vld [vmem:[#allocation3 + $0x168] sm:$0xff]
      %v2515 = vld [vmem:[#allocation3 + $0x170] sm:$0xff]
      %v2516 = vld [vmem:[#allocation3 + $0x188] sm:$0xff]
      %v2517 = vld [vmem:[#allocation3 + $0x190] sm:$0xff]
      %v2518 = vld [vmem:[#allocation3 + $0x1a8] sm:$0xff]
      %v2519 = vld [vmem:[#allocation3 + $0x1b0] sm:$0xff]
      %v2520 = vld [vmem:[#allocation3 + $0x1c8] sm:$0xff]
      %v2521 = vld [vmem:[#allocation3 + $0x1d0] sm:$0xff]
      %v2522 = vld [vmem:[#allocation3 + $0x1e8] sm:$0xff]
      %v2523 = vld [vmem:[#allocation3 + $0x1f0] sm:$0xff]
      %2556 = vrot.lane.b32.xlu0 %v2492, 8
      %v2557 = vpop.permute.xlu0 %2556
      %2558 = vrot.lane.b32.xlu0 %v2493, 8
      %v2559 = vpop.permute.xlu0 %2558
      %2560 = vrot.lane.b32.xlu0 %v2494, 8
      %v2561 = vpop.permute.xlu0 %2560
      %2562 = vrot.lane.b32.xlu0 %v2495, 8
      %v2563 = vpop.permute.xlu0 %2562
      %2564 = vrot.lane.b32.xlu0 %v2496, 8
      %v2565 = vpop.permute.xlu0 %2564
      %2566 = vrot.lane.b32.xlu0 %v2497, 8
      %v2567 = vpop.permute.xlu0 %2566
      %2568 = vrot.lane.b32.xlu0 %v2498, 8
      %v2569 = vpop.permute.xlu0 %2568
      %2570 = vrot.lane.b32.xlu0 %v2499, 8
      %v2571 = vpop.permute.xlu0 %2570
      %2572 = vrot.lane.b32.xlu0 %v2500, 8
      %v2573 = vpop.permute.xlu0 %2572
      %2574 = vrot.lane.b32.xlu0 %v2501, 8
      %v2575 = vpop.permute.xlu0 %2574
      %2576 = vrot.lane.b32.xlu0 %v2502, 8
      %v2577 = vpop.permute.xlu0 %2576
      %2578 = vrot.lane.b32.xlu0 %v2503, 8
      %v2579 = vpop.permute.xlu0 %2578
      %2580 = vrot.lane.b32.xlu0 %v2504, 8
      %v2581 = vpop.permute.xlu0 %2580
      %2582 = vrot.lane.b32.xlu0 %v2505, 8
      %v2583 = vpop.permute.xlu0 %2582
      %2584 = vrot.lane.b32.xlu0 %v2506, 8
      %v2585 = vpop.permute.xlu0 %2584
      %2586 = vrot.lane.b32.xlu0 %v2507, 8
      %v2587 = vpop.permute.xlu0 %2586
      %2588 = vrot.lane.b32.xlu0 %v2508, 8
      %v2589 = vpop.permute.xlu0 %2588
      %2590 = vrot.lane.b32.xlu0 %v2509, 8
      %v2591 = vpop.permute.xlu0 %2590
      %2592 = vrot.lane.b32.xlu0 %v2510, 8
      %v2593 = vpop.permute.xlu0 %2592
      %2594 = vrot.lane.b32.xlu0 %v2511, 8
      %v2595 = vpop.permute.xlu0 %2594
      %2596 = vrot.lane.b32.xlu0 %v2512, 8
      %v2597 = vpop.permute.xlu0 %2596
      %2598 = vrot.lane.b32.xlu0 %v2513, 8
      %v2599 = vpop.permute.xlu0 %2598
      %2600 = vrot.lane.b32.xlu0 %v2514, 8
      %v2601 = vpop.permute.xlu0 %2600
      %2602 = vrot.lane.b32.xlu0 %v2515, 8
      %v2603 = vpop.permute.xlu0 %2602
      %2604 = vrot.lane.b32.xlu0 %v2516, 8
      %v2605 = vpop.permute.xlu0 %2604
      %2606 = vrot.lane.b32.xlu0 %v2517, 8
      %v2607 = vpop.permute.xlu0 %2606
      %2608 = vrot.lane.b32.xlu0 %v2518, 8
      %v2609 = vpop.permute.xlu0 %2608
      %2610 = vrot.lane.b32.xlu0 %v2519, 8
      %v2611 = vpop.permute.xlu0 %2610
      %2612 = vrot.lane.b32.xlu0 %v2520, 8
      %v2613 = vpop.permute.xlu0 %2612
      %2614 = vrot.lane.b32.xlu0 %v2521, 8
      %v2615 = vpop.permute.xlu0 %2614
      %2616 = vrot.lane.b32.xlu0 %v2522, 8
      %v2617 = vpop.permute.xlu0 %2616
      %2618 = vrot.lane.b32.xlu0 %v2523, 8
      %v2619 = vpop.permute.xlu0 %2618
      %vm2652 = vcmask 130112
      %2653 = vst.msk [vmem:[#allocation5] sm:$0xff] %vm2652, %v2557
      %2654 = vst.msk [vmem:[#allocation5 + $0x8] sm:$0xff] %vm2652, %v2559
      %2655 = vst.msk [vmem:[#allocation5 + $0x10] sm:$0xff] %vm2652, %v2561
      %2656 = vst.msk [vmem:[#allocation5 + $0x18] sm:$0xff] %vm2652, %v2563
      %2657 = vst.msk [vmem:[#allocation5 + $0x20] sm:$0xff] %vm2652, %v2565
      %2658 = vst.msk [vmem:[#allocation5 + $0x28] sm:$0xff] %vm2652, %v2567
      %2659 = vst.msk [vmem:[#allocation5 + $0x30] sm:$0xff] %vm2652, %v2569
      %2660 = vst.msk [vmem:[#allocation5 + $0x38] sm:$0xff] %vm2652, %v2571
      %2661 = vst.msk [vmem:[#allocation5 + $0x40] sm:$0xff] %vm2652, %v2573
      %2662 = vst.msk [vmem:[#allocation5 + $0x48] sm:$0xff] %vm2652, %v2575
      %2663 = vst.msk [vmem:[#allocation5 + $0x50] sm:$0xff] %vm2652, %v2577
      %2664 = vst.msk [vmem:[#allocation5 + $0x58] sm:$0xff] %vm2652, %v2579
      %2665 = vst.msk [vmem:[#allocation5 + $0x60] sm:$0xff] %vm2652, %v2581
      %2666 = vst.msk [vmem:[#allocation5 + $0x68] sm:$0xff] %vm2652, %v2583
      %2667 = vst.msk [vmem:[#allocation5 + $0x70] sm:$0xff] %vm2652, %v2585
      %2668 = vst.msk [vmem:[#allocation5 + $0x78] sm:$0xff] %vm2652, %v2587
      %2669 = vst.msk [vmem:[#allocation5 + $0x80] sm:$0xff] %vm2652, %v2589
      %2670 = vst.msk [vmem:[#allocation5 + $0x88] sm:$0xff] %vm2652, %v2591
      %2671 = vst.msk [vmem:[#allocation5 + $0x90] sm:$0xff] %vm2652, %v2593
      %2672 = vst.msk [vmem:[#allocation5 + $0x98] sm:$0xff] %vm2652, %v2595
      %2673 = vst.msk [vmem:[#allocation5 + $0xa0] sm:$0xff] %vm2652, %v2597
      %2674 = vst.msk [vmem:[#allocation5 + $0xa8] sm:$0xff] %vm2652, %v2599
      %2675 = vst.msk [vmem:[#allocation5 + $0xb0] sm:$0xff] %vm2652, %v2601
      %2676 = vst.msk [vmem:[#allocation5 + $0xb8] sm:$0xff] %vm2652, %v2603
      %2677 = vst.msk [vmem:[#allocation5 + $0xc0] sm:$0xff] %vm2652, %v2605
      %2678 = vst.msk [vmem:[#allocation5 + $0xc8] sm:$0xff] %vm2652, %v2607
      %2679 = vst.msk [vmem:[#allocation5 + $0xd0] sm:$0xff] %vm2652, %v2609
      %2680 = vst.msk [vmem:[#allocation5 + $0xd8] sm:$0xff] %vm2652, %v2611
      %2681 = vst.msk [vmem:[#allocation5 + $0xe0] sm:$0xff] %vm2652, %v2613
      %2682 = vst.msk [vmem:[#allocation5 + $0xe8] sm:$0xff] %vm2652, %v2615
      %2683 = vst.msk [vmem:[#allocation5 + $0xf0] sm:$0xff] %vm2652, %v2617
      %2684 = vst.msk [vmem:[#allocation5 + $0xf8] sm:$0xff] %vm2652, %v2619
      %v2685 = vld [vmem:[#allocation3 + $0x9] sm:$0xff]
      %v2686 = vld [vmem:[#allocation3 + $0x11] sm:$0xff]
      %v2687 = vld [vmem:[#allocation3 + $0x29] sm:$0xff]
      %v2688 = vld [vmem:[#allocation3 + $0x31] sm:$0xff]
      %v2689 = vld [vmem:[#allocation3 + $0x49] sm:$0xff]
      %v2690 = vld [vmem:[#allocation3 + $0x51] sm:$0xff]
      %v2691 = vld [vmem:[#allocation3 + $0x69] sm:$0xff]
      %v2692 = vld [vmem:[#allocation3 + $0x71] sm:$0xff]
      %v2693 = vld [vmem:[#allocation3 + $0x89] sm:$0xff]
      %v2694 = vld [vmem:[#allocation3 + $0x91] sm:$0xff]
      %v2695 = vld [vmem:[#allocation3 + $0xa9] sm:$0xff]
      %v2696 = vld [vmem:[#allocation3 + $0xb1] sm:$0xff]
      %v2697 = vld [vmem:[#allocation3 + $0xc9] sm:$0xff]
      %v2698 = vld [vmem:[#allocation3 + $0xd1] sm:$0xff]
      %v2699 = vld [vmem:[#allocation3 + $0xe9] sm:$0xff]
      %v2700 = vld [vmem:[#allocation3 + $0xf1] sm:$0xff]
      %v2701 = vld [vmem:[#allocation3 + $0x109] sm:$0xff]
      %v2702 = vld [vmem:[#allocation3 + $0x111] sm:$0xff]
      %v2703 = vld [vmem:[#allocation3 + $0x129] sm:$0xff]
      %v2704 = vld [vmem:[#allocation3 + $0x131] sm:$0xff]
      %v2705 = vld [vmem:[#allocation3 + $0x149] sm:$0xff]
      %v2706 = vld [vmem:[#allocation3 + $0x151] sm:$0xff]
      %v2707 = vld [vmem:[#allocation3 + $0x169] sm:$0xff]
      %v2708 = vld [vmem:[#allocation3 + $0x171] sm:$0xff]
      %v2709 = vld [vmem:[#allocation3 + $0x189] sm:$0xff]
      %v2710 = vld [vmem:[#allocation3 + $0x191] sm:$0xff]
      %v2711 = vld [vmem:[#allocation3 + $0x1a9] sm:$0xff]
      %v2712 = vld [vmem:[#allocation3 + $0x1b1] sm:$0xff]
      %v2713 = vld [vmem:[#allocation3 + $0x1c9] sm:$0xff]
      %v2714 = vld [vmem:[#allocation3 + $0x1d1] sm:$0xff]
      %v2715 = vld [vmem:[#allocation3 + $0x1e9] sm:$0xff]
      %v2716 = vld [vmem:[#allocation3 + $0x1f1] sm:$0xff]
      %2749 = vrot.lane.b32.xlu0 %v2685, 16
      %v2750 = vpop.permute.xlu0 %2749
      %2751 = vrot.lane.b32.xlu0 %v2686, 16
      %v2752 = vpop.permute.xlu0 %2751
      %2753 = vrot.lane.b32.xlu0 %v2687, 16
      %v2754 = vpop.permute.xlu0 %2753
      %2755 = vrot.lane.b32.xlu0 %v2688, 16
      %v2756 = vpop.permute.xlu0 %2755
      %2757 = vrot.lane.b32.xlu0 %v2689, 16
      %v2758 = vpop.permute.xlu0 %2757
      %2759 = vrot.lane.b32.xlu0 %v2690, 16
      %v2760 = vpop.permute.xlu0 %2759
      %2761 = vrot.lane.b32.xlu0 %v2691, 16
      %v2762 = vpop.permute.xlu0 %2761
      %2763 = vrot.lane.b32.xlu0 %v2692, 16
      %v2764 = vpop.permute.xlu0 %2763
      %2765 = vrot.lane.b32.xlu0 %v2693, 16
      %v2766 = vpop.permute.xlu0 %2765
      %2767 = vrot.lane.b32.xlu0 %v2694, 16
      %v2768 = vpop.permute.xlu0 %2767
      %2769 = vrot.lane.b32.xlu0 %v2695, 16
      %v2770 = vpop.permute.xlu0 %2769
      %2771 = vrot.lane.b32.xlu0 %v2696, 16
      %v2772 = vpop.permute.xlu0 %2771
      %2773 = vrot.lane.b32.xlu0 %v2697, 16
      %v2774 = vpop.permute.xlu0 %2773
      %2775 = vrot.lane.b32.xlu0 %v2698, 16
      %v2776 = vpop.permute.xlu0 %2775
      %2777 = vrot.lane.b32.xlu0 %v2699, 16
      %v2778 = vpop.permute.xlu0 %2777
      %2779 = vrot.lane.b32.xlu0 %v2700, 16
      %v2780 = vpop.permute.xlu0 %2779
      %2781 = vrot.lane.b32.xlu0 %v2701, 16
      %v2782 = vpop.permute.xlu0 %2781
      %2783 = vrot.lane.b32.xlu0 %v2702, 16
      %v2784 = vpop.permute.xlu0 %2783
      %2785 = vrot.lane.b32.xlu0 %v2703, 16
      %v2786 = vpop.permute.xlu0 %2785
      %2787 = vrot.lane.b32.xlu0 %v2704, 16
      %v2788 = vpop.permute.xlu0 %2787
      %2789 = vrot.lane.b32.xlu0 %v2705, 16
      %v2790 = vpop.permute.xlu0 %2789
      %2791 = vrot.lane.b32.xlu0 %v2706, 16
      %v2792 = vpop.permute.xlu0 %2791
      %2793 = vrot.lane.b32.xlu0 %v2707, 16
      %v2794 = vpop.permute.xlu0 %2793
      %2795 = vrot.lane.b32.xlu0 %v2708, 16
      %v2796 = vpop.permute.xlu0 %2795
      %2797 = vrot.lane.b32.xlu0 %v2709, 16
      %v2798 = vpop.permute.xlu0 %2797
      %2799 = vrot.lane.b32.xlu0 %v2710, 16
      %v2800 = vpop.permute.xlu0 %2799
      %2801 = vrot.lane.b32.xlu0 %v2711, 16
      %v2802 = vpop.permute.xlu0 %2801
      %2803 = vrot.lane.b32.xlu0 %v2712, 16
      %v2804 = vpop.permute.xlu0 %2803
      %2805 = vrot.lane.b32.xlu0 %v2713, 16
      %v2806 = vpop.permute.xlu0 %2805
      %2807 = vrot.lane.b32.xlu0 %v2714, 16
      %v2808 = vpop.permute.xlu0 %2807
      %2809 = vrot.lane.b32.xlu0 %v2715, 16
      %v2810 = vpop.permute.xlu0 %2809
      %2811 = vrot.lane.b32.xlu0 %v2716, 16
      %v2812 = vpop.permute.xlu0 %2811
      %vm2845 = vcmask 195712
      %2846 = vst.msk [vmem:[#allocation5] sm:$0xff] %vm2845, %v2750
      %2847 = vst.msk [vmem:[#allocation5 + $0x8] sm:$0xff] %vm2845, %v2752
      %2848 = vst.msk [vmem:[#allocation5 + $0x10] sm:$0xff] %vm2845, %v2754
      %2849 = vst.msk [vmem:[#allocation5 + $0x18] sm:$0xff] %vm2845, %v2756
      %2850 = vst.msk [vmem:[#allocation5 + $0x20] sm:$0xff] %vm2845, %v2758
      %2851 = vst.msk [vmem:[#allocation5 + $0x28] sm:$0xff] %vm2845, %v2760
      %2852 = vst.msk [vmem:[#allocation5 + $0x30] sm:$0xff] %vm2845, %v2762
      %2853 = vst.msk [vmem:[#allocation5 + $0x38] sm:$0xff] %vm2845, %v2764
      %2854 = vst.msk [vmem:[#allocation5 + $0x40] sm:$0xff] %vm2845, %v2766
      %2855 = vst.msk [vmem:[#allocation5 + $0x48] sm:$0xff] %vm2845, %v2768
      %2856 = vst.msk [vmem:[#allocation5 + $0x50] sm:$0xff] %vm2845, %v2770
      %2857 = vst.msk [vmem:[#allocation5 + $0x58] sm:$0xff] %vm2845, %v2772
      %2858 = vst.msk [vmem:[#allocation5 + $0x60] sm:$0xff] %vm2845, %v2774
      %2859 = vst.msk [vmem:[#allocation5 + $0x68] sm:$0xff] %vm2845, %v2776
      %2860 = vst.msk [vmem:[#allocation5 + $0x70] sm:$0xff] %vm2845, %v2778
      %2861 = vst.msk [vmem:[#allocation5 + $0x78] sm:$0xff] %vm2845, %v2780
      %2862 = vst.msk [vmem:[#allocation5 + $0x80] sm:$0xff] %vm2845, %v2782
      %2863 = vst.msk [vmem:[#allocation5 + $0x88] sm:$0xff] %vm2845, %v2784
      %2864 = vst.msk [vmem:[#allocation5 + $0x90] sm:$0xff] %vm2845, %v2786
      %2865 = vst.msk [vmem:[#allocation5 + $0x98] sm:$0xff] %vm2845, %v2788
      %2866 = vst.msk [vmem:[#allocation5 + $0xa0] sm:$0xff] %vm2845, %v2790
      %2867 = vst.msk [vmem:[#allocation5 + $0xa8] sm:$0xff] %vm2845, %v2792
      %2868 = vst.msk [vmem:[#allocation5 + $0xb0] sm:$0xff] %vm2845, %v2794
      %2869 = vst.msk [vmem:[#allocation5 + $0xb8] sm:$0xff] %vm2845, %v2796
      %2870 = vst.msk [vmem:[#allocation5 + $0xc0] sm:$0xff] %vm2845, %v2798
      %2871 = vst.msk [vmem:[#allocation5 + $0xc8] sm:$0xff] %vm2845, %v2800
      %2872 = vst.msk [vmem:[#allocation5 + $0xd0] sm:$0xff] %vm2845, %v2802
      %2873 = vst.msk [vmem:[#allocation5 + $0xd8] sm:$0xff] %vm2845, %v2804
      %2874 = vst.msk [vmem:[#allocation5 + $0xe0] sm:$0xff] %vm2845, %v2806
      %2875 = vst.msk [vmem:[#allocation5 + $0xe8] sm:$0xff] %vm2845, %v2808
      %2876 = vst.msk [vmem:[#allocation5 + $0xf0] sm:$0xff] %vm2845, %v2810
      %2877 = vst.msk [vmem:[#allocation5 + $0xf8] sm:$0xff] %vm2845, %v2812
      %v2878 = vld [vmem:[%s2395 + $0x7] sm:$0xff]
      %v2879 = vld [vmem:[%s2395 + $0xf] sm:$0xff]
      %v2880 = vld [vmem:[%s2395 + $0x27] sm:$0xff]
      %v2881 = vld [vmem:[%s2395 + $0x2f] sm:$0xff]
      %v2882 = vld [vmem:[%s2395 + $0x47] sm:$0xff]
      %v2883 = vld [vmem:[%s2395 + $0x4f] sm:$0xff]
      %v2884 = vld [vmem:[%s2395 + $0x67] sm:$0xff]
      %v2885 = vld [vmem:[%s2395 + $0x6f] sm:$0xff]
      %v2886 = vld [vmem:[%s2395 + $0x87] sm:$0xff]
      %v2887 = vld [vmem:[%s2395 + $0x8f] sm:$0xff]
      %v2888 = vld [vmem:[%s2395 + $0xa7] sm:$0xff]
      %v2889 = vld [vmem:[%s2395 + $0xaf] sm:$0xff]
      %v2890 = vld [vmem:[%s2395 + $0xc7] sm:$0xff]
      %v2891 = vld [vmem:[%s2395 + $0xcf] sm:$0xff]
      %v2892 = vld [vmem:[%s2395 + $0xe7] sm:$0xff]
      %v2893 = vld [vmem:[%s2395 + $0xef] sm:$0xff]
      %v2894 = vld [vmem:[%s2395 + $0x107] sm:$0xff]
      %v2895 = vld [vmem:[%s2395 + $0x10f] sm:$0xff]
      %v2896 = vld [vmem:[%s2395 + $0x127] sm:$0xff]
      %v2897 = vld [vmem:[%s2395 + $0x12f] sm:$0xff]
      %v2898 = vld [vmem:[%s2395 + $0x147] sm:$0xff]
      %v2899 = vld [vmem:[%s2395 + $0x14f] sm:$0xff]
      %v2900 = vld [vmem:[%s2395 + $0x167] sm:$0xff]
      %v2901 = vld [vmem:[%s2395 + $0x16f] sm:$0xff]
      %v2902 = vld [vmem:[%s2395 + $0x187] sm:$0xff]
      %v2903 = vld [vmem:[%s2395 + $0x18f] sm:$0xff]
      %v2904 = vld [vmem:[%s2395 + $0x1a7] sm:$0xff]
      %v2905 = vld [vmem:[%s2395 + $0x1af] sm:$0xff]
      %v2906 = vld [vmem:[%s2395 + $0x1c7] sm:$0xff]
      %v2907 = vld [vmem:[%s2395 + $0x1cf] sm:$0xff]
      %v2908 = vld [vmem:[%s2395 + $0x1e7] sm:$0xff]
      %v2909 = vld [vmem:[%s2395 + $0x1ef] sm:$0xff]
      %2942 = vrot.lane.b32.xlu0 %v2878, 24
      %v2943 = vpop.permute.xlu0 %2942
      %2944 = vrot.lane.b32.xlu0 %v2879, 24
      %v2945 = vpop.permute.xlu0 %2944
      %2946 = vrot.lane.b32.xlu0 %v2880, 24
      %v2947 = vpop.permute.xlu0 %2946
      %2948 = vrot.lane.b32.xlu0 %v2881, 24
      %v2949 = vpop.permute.xlu0 %2948
      %2950 = vrot.lane.b32.xlu0 %v2882, 24
      %v2951 = vpop.permute.xlu0 %2950
      %2952 = vrot.lane.b32.xlu0 %v2883, 24
      %v2953 = vpop.permute.xlu0 %2952
      %2954 = vrot.lane.b32.xlu0 %v2884, 24
      %v2955 = vpop.permute.xlu0 %2954
      %2956 = vrot.lane.b32.xlu0 %v2885, 24
      %v2957 = vpop.permute.xlu0 %2956
      %2958 = vrot.lane.b32.xlu0 %v2886, 24
      %v2959 = vpop.permute.xlu0 %2958
      %2960 = vrot.lane.b32.xlu0 %v2887, 24
      %v2961 = vpop.permute.xlu0 %2960
      %2962 = vrot.lane.b32.xlu0 %v2888, 24
      %v2963 = vpop.permute.xlu0 %2962
      %2964 = vrot.lane.b32.xlu0 %v2889, 24
      %v2965 = vpop.permute.xlu0 %2964
      %2966 = vrot.lane.b32.xlu0 %v2890, 24
      %v2967 = vpop.permute.xlu0 %2966
      %2968 = vrot.lane.b32.xlu0 %v2891, 24
      %v2969 = vpop.permute.xlu0 %2968
      %2970 = vrot.lane.b32.xlu0 %v2892, 24
      %v2971 = vpop.permute.xlu0 %2970
      %2972 = vrot.lane.b32.xlu0 %v2893, 24
      %v2973 = vpop.permute.xlu0 %2972
      %2974 = vrot.lane.b32.xlu0 %v2894, 24
      %v2975 = vpop.permute.xlu0 %2974
      %2976 = vrot.lane.b32.xlu0 %v2895, 24
      %v2977 = vpop.permute.xlu0 %2976
      %2978 = vrot.lane.b32.xlu0 %v2896, 24
      %v2979 = vpop.permute.xlu0 %2978
      %2980 = vrot.lane.b32.xlu0 %v2897, 24
      %v2981 = vpop.permute.xlu0 %2980
      %2982 = vrot.lane.b32.xlu0 %v2898, 24
      %v2983 = vpop.permute.xlu0 %2982
      %2984 = vrot.lane.b32.xlu0 %v2899, 24
      %v2985 = vpop.permute.xlu0 %2984
      %2986 = vrot.lane.b32.xlu0 %v2900, 24
      %v2987 = vpop.permute.xlu0 %2986
      %2988 = vrot.lane.b32.xlu0 %v2901, 24
      %v2989 = vpop.permute.xlu0 %2988
      %2990 = vrot.lane.b32.xlu0 %v2902, 24
      %v2991 = vpop.permute.xlu0 %2990
      %2992 = vrot.lane.b32.xlu0 %v2903, 24
      %v2993 = vpop.permute.xlu0 %2992
      %2994 = vrot.lane.b32.xlu0 %v2904, 24
      %v2995 = vpop.permute.xlu0 %2994
      %2996 = vrot.lane.b32.xlu0 %v2905, 24
      %v2997 = vpop.permute.xlu0 %2996
      %2998 = vrot.lane.b32.xlu0 %v2906, 24
      %v2999 = vpop.permute.xlu0 %2998
      %3000 = vrot.lane.b32.xlu0 %v2907, 24
      %v3001 = vpop.permute.xlu0 %3000
      %3002 = vrot.lane.b32.xlu0 %v2908, 24
      %v3003 = vpop.permute.xlu0 %3002
      %3004 = vrot.lane.b32.xlu0 %v2909, 24
      %v3005 = vpop.permute.xlu0 %3004
      %vm3038 = vcmask 261312
      %3039 = vst.msk [vmem:[#allocation5] sm:$0xff] %vm3038, %v2943
      %3040 = vst.msk [vmem:[#allocation5 + $0x8] sm:$0xff] %vm3038, %v2945
      %3041 = vst.msk [vmem:[#allocation5 + $0x10] sm:$0xff] %vm3038, %v2947
      %3042 = vst.msk [vmem:[#allocation5 + $0x18] sm:$0xff] %vm3038, %v2949
      %3043 = vst.msk [vmem:[#allocation5 + $0x20] sm:$0xff] %vm3038, %v2951
      %3044 = vst.msk [vmem:[#allocation5 + $0x28] sm:$0xff] %vm3038, %v2953
      %3045 = vst.msk [vmem:[#allocation5 + $0x30] sm:$0xff] %vm3038, %v2955
      %3046 = vst.msk [vmem:[#allocation5 + $0x38] sm:$0xff] %vm3038, %v2957
      %3047 = vst.msk [vmem:[#allocation5 + $0x40] sm:$0xff] %vm3038, %v2959
      %3048 = vst.msk [vmem:[#allocation5 + $0x48] sm:$0xff] %vm3038, %v2961
      %3049 = vst.msk [vmem:[#allocation5 + $0x50] sm:$0xff] %vm3038, %v2963
      %3050 = vst.msk [vmem:[#allocation5 + $0x58] sm:$0xff] %vm3038, %v2965
      %3051 = vst.msk [vmem:[#allocation5 + $0x60] sm:$0xff] %vm3038, %v2967
      %3052 = vst.msk [vmem:[#allocation5 + $0x68] sm:$0xff] %vm3038, %v2969
      %3053 = vst.msk [vmem:[#allocation5 + $0x70] sm:$0xff] %vm3038, %v2971
      %3054 = vst.msk [vmem:[#allocation5 + $0x78] sm:$0xff] %vm3038, %v2973
      %3055 = vst.msk [vmem:[#allocation5 + $0x80] sm:$0xff] %vm3038, %v2975
      %3056 = vst.msk [vmem:[#allocation5 + $0x88] sm:$0xff] %vm3038, %v2977
      %3057 = vst.msk [vmem:[#allocation5 + $0x90] sm:$0xff] %vm3038, %v2979
      %3058 = vst.msk [vmem:[#allocation5 + $0x98] sm:$0xff] %vm3038, %v2981
      %3059 = vst.msk [vmem:[#allocation5 + $0xa0] sm:$0xff] %vm3038, %v2983
      %3060 = vst.msk [vmem:[#allocation5 + $0xa8] sm:$0xff] %vm3038, %v2985
      %3061 = vst.msk [vmem:[#allocation5 + $0xb0] sm:$0xff] %vm3038, %v2987
      %3062 = vst.msk [vmem:[#allocation5 + $0xb8] sm:$0xff] %vm3038, %v2989
      %3063 = vst.msk [vmem:[#allocation5 + $0xc0] sm:$0xff] %vm3038, %v2991
      %3064 = vst.msk [vmem:[#allocation5 + $0xc8] sm:$0xff] %vm3038, %v2993
      %3065 = vst.msk [vmem:[#allocation5 + $0xd0] sm:$0xff] %vm3038, %v2995
      %3066 = vst.msk [vmem:[#allocation5 + $0xd8] sm:$0xff] %vm3038, %v2997
      %3067 = vst.msk [vmem:[#allocation5 + $0xe0] sm:$0xff] %vm3038, %v2999
      %3068 = vst.msk [vmem:[#allocation5 + $0xe8] sm:$0xff] %vm3038, %v3001
      %3069 = vst.msk [vmem:[#allocation5 + $0xf0] sm:$0xff] %vm3038, %v3003
      %3070 = vst.msk [vmem:[#allocation5 + $0xf8] sm:$0xff] %vm3038, %v3005
      %v3071 = vld [vmem:[%s2395 + $0x8] sm:$0xff]
      %v3072 = vld [vmem:[%s2395 + $0x10] sm:$0xff]
      %v3073 = vld [vmem:[%s2395 + $0x28] sm:$0xff]
      %v3074 = vld [vmem:[%s2395 + $0x30] sm:$0xff]
      %v3075 = vld [vmem:[%s2395 + $0x48] sm:$0xff]
      %v3076 = vld [vmem:[%s2395 + $0x50] sm:$0xff]
      %v3077 = vld [vmem:[%s2395 + $0x68] sm:$0xff]
      %v3078 = vld [vmem:[%s2395 + $0x70] sm:$0xff]
      %v3079 = vld [vmem:[%s2395 + $0x88] sm:$0xff]
      %v3080 = vld [vmem:[%s2395 + $0x90] sm:$0xff]
      %v3081 = vld [vmem:[%s2395 + $0xa8] sm:$0xff]
      %v3082 = vld [vmem:[%s2395 + $0xb0] sm:$0xff]
      %v3083 = vld [vmem:[%s2395 + $0xc8] sm:$0xff]
      %v3084 = vld [vmem:[%s2395 + $0xd0] sm:$0xff]
      %v3085 = vld [vmem:[%s2395 + $0xe8] sm:$0xff]
      %v3086 = vld [vmem:[%s2395 + $0xf0] sm:$0xff]
      %v3087 = vld [vmem:[%s2395 + $0x108] sm:$0xff]
      %v3088 = vld [vmem:[%s2395 + $0x110] sm:$0xff]
      %v3089 = vld [vmem:[%s2395 + $0x128] sm:$0xff]
      %v3090 = vld [vmem:[%s2395 + $0x130] sm:$0xff]
      %v3091 = vld [vmem:[%s2395 + $0x148] sm:$0xff]
      %v3092 = vld [vmem:[%s2395 + $0x150] sm:$0xff]
      %v3093 = vld [vmem:[%s2395 + $0x168] sm:$0xff]
      %v3094 = vld [vmem:[%s2395 + $0x170] sm:$0xff]
      %v3095 = vld [vmem:[%s2395 + $0x188] sm:$0xff]
      %v3096 = vld [vmem:[%s2395 + $0x190] sm:$0xff]
      %v3097 = vld [vmem:[%s2395 + $0x1a8] sm:$0xff]
      %v3098 = vld [vmem:[%s2395 + $0x1b0] sm:$0xff]
      %v3099 = vld [vmem:[%s2395 + $0x1c8] sm:$0xff]
      %v3100 = vld [vmem:[%s2395 + $0x1d0] sm:$0xff]
      %v3101 = vld [vmem:[%s2395 + $0x1e8] sm:$0xff]
      %v3102 = vld [vmem:[%s2395 + $0x1f0] sm:$0xff]
      %3135 = vrot.lane.b32.xlu0 %v3071, 32
      %v3136 = vpop.permute.xlu0 %3135
      %3137 = vrot.lane.b32.xlu0 %v3072, 32
      %v3138 = vpop.permute.xlu0 %3137
      %3139 = vrot.lane.b32.xlu0 %v3073, 32
      %v3140 = vpop.permute.xlu0 %3139
      %3141 = vrot.lane.b32.xlu0 %v3074, 32
      %v3142 = vpop.permute.xlu0 %3141
      %3143 = vrot.lane.b32.xlu0 %v3075, 32
      %v3144 = vpop.permute.xlu0 %3143
      %3145 = vrot.lane.b32.xlu0 %v3076, 32
      %v3146 = vpop.permute.xlu0 %3145
      %3147 = vrot.lane.b32.xlu0 %v3077, 32
      %v3148 = vpop.permute.xlu0 %3147
      %3149 = vrot.lane.b32.xlu0 %v3078, 32
      %v3150 = vpop.permute.xlu0 %3149
      %3151 = vrot.lane.b32.xlu0 %v3079, 32
      %v3152 = vpop.permute.xlu0 %3151
      %3153 = vrot.lane.b32.xlu0 %v3080, 32
      %v3154 = vpop.permute.xlu0 %3153
      %3155 = vrot.lane.b32.xlu0 %v3081, 32
      %v3156 = vpop.permute.xlu0 %3155
      %3157 = vrot.lane.b32.xlu0 %v3082, 32
      %v3158 = vpop.permute.xlu0 %3157
      %3159 = vrot.lane.b32.xlu0 %v3083, 32
      %v3160 = vpop.permute.xlu0 %3159
      %3161 = vrot.lane.b32.xlu0 %v3084, 32
      %v3162 = vpop.permute.xlu0 %3161
      %3163 = vrot.lane.b32.xlu0 %v3085, 32
      %v3164 = vpop.permute.xlu0 %3163
      %3165 = vrot.lane.b32.xlu0 %v3086, 32
      %v3166 = vpop.permute.xlu0 %3165
      %3167 = vrot.lane.b32.xlu0 %v3087, 32
      %v3168 = vpop.permute.xlu0 %3167
      %3169 = vrot.lane.b32.xlu0 %v3088, 32
      %v3170 = vpop.permute.xlu0 %3169
      %3171 = vrot.lane.b32.xlu0 %v3089, 32
      %v3172 = vpop.permute.xlu0 %3171
      %3173 = vrot.lane.b32.xlu0 %v3090, 32
      %v3174 = vpop.permute.xlu0 %3173
      %3175 = vrot.lane.b32.xlu0 %v3091, 32
      %v3176 = vpop.permute.xlu0 %3175
      %3177 = vrot.lane.b32.xlu0 %v3092, 32
      %v3178 = vpop.permute.xlu0 %3177
      %3179 = vrot.lane.b32.xlu0 %v3093, 32
      %v3180 = vpop.permute.xlu0 %3179
      %3181 = vrot.lane.b32.xlu0 %v3094, 32
      %v3182 = vpop.permute.xlu0 %3181
      %3183 = vrot.lane.b32.xlu0 %v3095, 32
      %v3184 = vpop.permute.xlu0 %3183
      %3185 = vrot.lane.b32.xlu0 %v3096, 32
      %v3186 = vpop.permute.xlu0 %3185
      %3187 = vrot.lane.b32.xlu0 %v3097, 32
      %v3188 = vpop.permute.xlu0 %3187
      %3189 = vrot.lane.b32.xlu0 %v3098, 32
      %v3190 = vpop.permute.xlu0 %3189
      %3191 = vrot.lane.b32.xlu0 %v3099, 32
      %v3192 = vpop.permute.xlu0 %3191
      %3193 = vrot.lane.b32.xlu0 %v3100, 32
      %v3194 = vpop.permute.xlu0 %3193
      %3195 = vrot.lane.b32.xlu0 %v3101, 32
      %v3196 = vpop.permute.xlu0 %3195
      %3197 = vrot.lane.b32.xlu0 %v3102, 32
      %v3198 = vpop.permute.xlu0 %3197
      %vm3231 = vcmask 326912
      %3232 = vst.msk [vmem:[#allocation5] sm:$0xff] %vm3231, %v3136
      %3233 = vst.msk [vmem:[#allocation5 + $0x8] sm:$0xff] %vm3231, %v3138
      %3234 = vst.msk [vmem:[#allocation5 + $0x10] sm:$0xff] %vm3231, %v3140
      %3235 = vst.msk [vmem:[#allocation5 + $0x18] sm:$0xff] %vm3231, %v3142
      %3236 = vst.msk [vmem:[#allocation5 + $0x20] sm:$0xff] %vm3231, %v3144
      %3237 = vst.msk [vmem:[#allocation5 + $0x28] sm:$0xff] %vm3231, %v3146
      %3238 = vst.msk [vmem:[#allocation5 + $0x30] sm:$0xff] %vm3231, %v3148
      %3239 = vst.msk [vmem:[#allocation5 + $0x38] sm:$0xff] %vm3231, %v3150
      %3240 = vst.msk [vmem:[#allocation5 + $0x40] sm:$0xff] %vm3231, %v3152
      %3241 = vst.msk [vmem:[#allocation5 + $0x48] sm:$0xff] %vm3231, %v3154
      %3242 = vst.msk [vmem:[#allocation5 + $0x50] sm:$0xff] %vm3231, %v3156
      %3243 = vst.msk [vmem:[#allocation5 + $0x58] sm:$0xff] %vm3231, %v3158
      %3244 = vst.msk [vmem:[#allocation5 + $0x60] sm:$0xff] %vm3231, %v3160
      %3245 = vst.msk [vmem:[#allocation5 + $0x68] sm:$0xff] %vm3231, %v3162
      %3246 = vst.msk [vmem:[#allocation5 + $0x70] sm:$0xff] %vm3231, %v3164
      %3247 = vst.msk [vmem:[#allocation5 + $0x78] sm:$0xff] %vm3231, %v3166
      %3248 = vst.msk [vmem:[#allocation5 + $0x80] sm:$0xff] %vm3231, %v3168
      %3249 = vst.msk [vmem:[#allocation5 + $0x88] sm:$0xff] %vm3231, %v3170
      %3250 = vst.msk [vmem:[#allocation5 + $0x90] sm:$0xff] %vm3231, %v3172
      %3251 = vst.msk [vmem:[#allocation5 + $0x98] sm:$0xff] %vm3231, %v3174
      %3252 = vst.msk [vmem:[#allocation5 + $0xa0] sm:$0xff] %vm3231, %v3176
      %3253 = vst.msk [vmem:[#allocation5 + $0xa8] sm:$0xff] %vm3231, %v3178
      %3254 = vst.msk [vmem:[#allocation5 + $0xb0] sm:$0xff] %vm3231, %v3180
      %3255 = vst.msk [vmem:[#allocation5 + $0xb8] sm:$0xff] %vm3231, %v3182
      %3256 = vst.msk [vmem:[#allocation5 + $0xc0] sm:$0xff] %vm3231, %v3184
      %3257 = vst.msk [vmem:[#allocation5 + $0xc8] sm:$0xff] %vm3231, %v3186
      %3258 = vst.msk [vmem:[#allocation5 + $0xd0] sm:$0xff] %vm3231, %v3188
      %3259 = vst.msk [vmem:[#allocation5 + $0xd8] sm:$0xff] %vm3231, %v3190
      %3260 = vst.msk [vmem:[#allocation5 + $0xe0] sm:$0xff] %vm3231, %v3192
      %3261 = vst.msk [vmem:[#allocation5 + $0xe8] sm:$0xff] %vm3231, %v3194
      %3262 = vst.msk [vmem:[#allocation5 + $0xf0] sm:$0xff] %vm3231, %v3196
      %3263 = vst.msk [vmem:[#allocation5 + $0xf8] sm:$0xff] %vm3231, %v3198
      %v3264 = vld [vmem:[%s2395 + $0x9] sm:$0xff]
      %v3265 = vld [vmem:[%s2395 + $0x11] sm:$0xff]
      %v3266 = vld [vmem:[%s2395 + $0x29] sm:$0xff]
      %v3267 = vld [vmem:[%s2395 + $0x31] sm:$0xff]
      %v3268 = vld [vmem:[%s2395 + $0x49] sm:$0xff]
      %v3269 = vld [vmem:[%s2395 + $0x51] sm:$0xff]
      %v3270 = vld [vmem:[%s2395 + $0x69] sm:$0xff]
      %v3271 = vld [vmem:[%s2395 + $0x71] sm:$0xff]
      %v3272 = vld [vmem:[%s2395 + $0x89] sm:$0xff]
      %v3273 = vld [vmem:[%s2395 + $0x91] sm:$0xff]
      %v3274 = vld [vmem:[%s2395 + $0xa9] sm:$0xff]
      %v3275 = vld [vmem:[%s2395 + $0xb1] sm:$0xff]
      %v3276 = vld [vmem:[%s2395 + $0xc9] sm:$0xff]
      %v3277 = vld [vmem:[%s2395 + $0xd1] sm:$0xff]
      %v3278 = vld [vmem:[%s2395 + $0xe9] sm:$0xff]
      %v3279 = vld [vmem:[%s2395 + $0xf1] sm:$0xff]
      %v3280 = vld [vmem:[%s2395 + $0x109] sm:$0xff]
      %v3281 = vld [vmem:[%s2395 + $0x111] sm:$0xff]
      %v3282 = vld [vmem:[%s2395 + $0x129] sm:$0xff]
      %v3283 = vld [vmem:[%s2395 + $0x131] sm:$0xff]
      %v3284 = vld [vmem:[%s2395 + $0x149] sm:$0xff]
      %v3285 = vld [vmem:[%s2395 + $0x151] sm:$0xff]
      %v3286 = vld [vmem:[%s2395 + $0x169] sm:$0xff]
      %v3287 = vld [vmem:[%s2395 + $0x171] sm:$0xff]
      %v3288 = vld [vmem:[%s2395 + $0x189] sm:$0xff]
      %v3289 = vld [vmem:[%s2395 + $0x191] sm:$0xff]
      %v3290 = vld [vmem:[%s2395 + $0x1a9] sm:$0xff]
      %v3291 = vld [vmem:[%s2395 + $0x1b1] sm:$0xff]
      %v3292 = vld [vmem:[%s2395 + $0x1c9] sm:$0xff]
      %v3293 = vld [vmem:[%s2395 + $0x1d1] sm:$0xff]
      %v3294 = vld [vmem:[%s2395 + $0x1e9] sm:$0xff]
      %v3295 = vld [vmem:[%s2395 + $0x1f1] sm:$0xff]
      %3328 = vrot.lane.b32.xlu0 %v3264, 40
      %v3329 = vpop.permute.xlu0 %3328
      %3330 = vrot.lane.b32.xlu0 %v3265, 40
      %v3331 = vpop.permute.xlu0 %3330
      %3332 = vrot.lane.b32.xlu0 %v3266, 40
      %v3333 = vpop.permute.xlu0 %3332
      %3334 = vrot.lane.b32.xlu0 %v3267, 40
      %v3335 = vpop.permute.xlu0 %3334
      %3336 = vrot.lane.b32.xlu0 %v3268, 40
      %v3337 = vpop.permute.xlu0 %3336
      %3338 = vrot.lane.b32.xlu0 %v3269, 40
      %v3339 = vpop.permute.xlu0 %3338
      %3340 = vrot.lane.b32.xlu0 %v3270, 40
      %v3341 = vpop.permute.xlu0 %3340
      %3342 = vrot.lane.b32.xlu0 %v3271, 40
      %v3343 = vpop.permute.xlu0 %3342
      %3344 = vrot.lane.b32.xlu0 %v3272, 40
      %v3345 = vpop.permute.xlu0 %3344
      %3346 = vrot.lane.b32.xlu0 %v3273, 40
      %v3347 = vpop.permute.xlu0 %3346
      %3348 = vrot.lane.b32.xlu0 %v3274, 40
      %v3349 = vpop.permute.xlu0 %3348
      %3350 = vrot.lane.b32.xlu0 %v3275, 40
      %v3351 = vpop.permute.xlu0 %3350
      %3352 = vrot.lane.b32.xlu0 %v3276, 40
      %v3353 = vpop.permute.xlu0 %3352
      %3354 = vrot.lane.b32.xlu0 %v3277, 40
      %v3355 = vpop.permute.xlu0 %3354
      %3356 = vrot.lane.b32.xlu0 %v3278, 40
      %v3357 = vpop.permute.xlu0 %3356
      %3358 = vrot.lane.b32.xlu0 %v3279, 40
      %v3359 = vpop.permute.xlu0 %3358
      %3360 = vrot.lane.b32.xlu0 %v3280, 40
      %v3361 = vpop.permute.xlu0 %3360
      %3362 = vrot.lane.b32.xlu0 %v3281, 40
      %v3363 = vpop.permute.xlu0 %3362
      %3364 = vrot.lane.b32.xlu0 %v3282, 40
      %v3365 = vpop.permute.xlu0 %3364
      %3366 = vrot.lane.b32.xlu0 %v3283, 40
      %v3367 = vpop.permute.xlu0 %3366
      %3368 = vrot.lane.b32.xlu0 %v3284, 40
      %v3369 = vpop.permute.xlu0 %3368
      %3370 = vrot.lane.b32.xlu0 %v3285, 40
      %v3371 = vpop.permute.xlu0 %3370
      %3372 = vrot.lane.b32.xlu0 %v3286, 40
      %v3373 = vpop.permute.xlu0 %3372
      %3374 = vrot.lane.b32.xlu0 %v3287, 40
      %v3375 = vpop.permute.xlu0 %3374
      %3376 = vrot.lane.b32.xlu0 %v3288, 40
      %v3377 = vpop.permute.xlu0 %3376
      %3378 = vrot.lane.b32.xlu0 %v3289, 40
      %v3379 = vpop.permute.xlu0 %3378
      %3380 = vrot.lane.b32.xlu0 %v3290, 40
      %v3381 = vpop.permute.xlu0 %3380
      %3382 = vrot.lane.b32.xlu0 %v3291, 40
      %v3383 = vpop.permute.xlu0 %3382
      %3384 = vrot.lane.b32.xlu0 %v3292, 40
      %v3385 = vpop.permute.xlu0 %3384
      %3386 = vrot.lane.b32.xlu0 %v3293, 40
      %v3387 = vpop.permute.xlu0 %3386
      %3388 = vrot.lane.b32.xlu0 %v3294, 40
      %v3389 = vpop.permute.xlu0 %3388
      %3390 = vrot.lane.b32.xlu0 %v3295, 40
      %v3391 = vpop.permute.xlu0 %3390
      %vm3424 = vcmask 392512
      %3425 = vst.msk [vmem:[#allocation5] sm:$0xff] %vm3424, %v3329
      %3426 = vst.msk [vmem:[#allocation5 + $0x8] sm:$0xff] %vm3424, %v3331
      %3427 = vst.msk [vmem:[#allocation5 + $0x10] sm:$0xff] %vm3424, %v3333
      %3428 = vst.msk [vmem:[#allocation5 + $0x18] sm:$0xff] %vm3424, %v3335
      %3429 = vst.msk [vmem:[#allocation5 + $0x20] sm:$0xff] %vm3424, %v3337
      %3430 = vst.msk [vmem:[#allocation5 + $0x28] sm:$0xff] %vm3424, %v3339
      %3431 = vst.msk [vmem:[#allocation5 + $0x30] sm:$0xff] %vm3424, %v3341
      %3432 = vst.msk [vmem:[#allocation5 + $0x38] sm:$0xff] %vm3424, %v3343
      %3433 = vst.msk [vmem:[#allocation5 + $0x40] sm:$0xff] %vm3424, %v3345
      %3434 = vst.msk [vmem:[#allocation5 + $0x48] sm:$0xff] %vm3424, %v3347
      %3435 = vst.msk [vmem:[#allocation5 + $0x50] sm:$0xff] %vm3424, %v3349
      %3436 = vst.msk [vmem:[#allocation5 + $0x58] sm:$0xff] %vm3424, %v3351
      %3437 = vst.msk [vmem:[#allocation5 + $0x60] sm:$0xff] %vm3424, %v3353
      %3438 = vst.msk [vmem:[#allocation5 + $0x68] sm:$0xff] %vm3424, %v3355
      %3439 = vst.msk [vmem:[#allocation5 + $0x70] sm:$0xff] %vm3424, %v3357
      %3440 = vst.msk [vmem:[#allocation5 + $0x78] sm:$0xff] %vm3424, %v3359
      %3441 = vst.msk [vmem:[#allocation5 + $0x80] sm:$0xff] %vm3424, %v3361
      %3442 = vst.msk [vmem:[#allocation5 + $0x88] sm:$0xff] %vm3424, %v3363
      %3443 = vst.msk [vmem:[#allocation5 + $0x90] sm:$0xff] %vm3424, %v3365
      %3444 = vst.msk [vmem:[#allocation5 + $0x98] sm:$0xff] %vm3424, %v3367
      %3445 = vst.msk [vmem:[#allocation5 + $0xa0] sm:$0xff] %vm3424, %v3369
      %3446 = vst.msk [vmem:[#allocation5 + $0xa8] sm:$0xff] %vm3424, %v3371
      %3447 = vst.msk [vmem:[#allocation5 + $0xb0] sm:$0xff] %vm3424, %v3373
      %3448 = vst.msk [vmem:[#allocation5 + $0xb8] sm:$0xff] %vm3424, %v3375
      %3449 = vst.msk [vmem:[#allocation5 + $0xc0] sm:$0xff] %vm3424, %v3377
      %3450 = vst.msk [vmem:[#allocation5 + $0xc8] sm:$0xff] %vm3424, %v3379
      %3451 = vst.msk [vmem:[#allocation5 + $0xd0] sm:$0xff] %vm3424, %v3381
      %3452 = vst.msk [vmem:[#allocation5 + $0xd8] sm:$0xff] %vm3424, %v3383
      %3453 = vst.msk [vmem:[#allocation5 + $0xe0] sm:$0xff] %vm3424, %v3385
      %3454 = vst.msk [vmem:[#allocation5 + $0xe8] sm:$0xff] %vm3424, %v3387
      %3455 = vst.msk [vmem:[#allocation5 + $0xf0] sm:$0xff] %vm3424, %v3389
      %3456 = vst.msk [vmem:[#allocation5 + $0xf8] sm:$0xff] %vm3424, %v3391
      %s3457 = scalar_lea.vmem [#allocation3], 64
      %v3458 = vld [vmem:[%s3457 + $0x7] sm:$0xff]
      %v3459 = vld [vmem:[%s3457 + $0xf] sm:$0xff]
      %v3460 = vld [vmem:[%s3457 + $0x27] sm:$0xff]
      %v3461 = vld [vmem:[%s3457 + $0x2f] sm:$0xff]
      %v3462 = vld [vmem:[%s3457 + $0x47] sm:$0xff]
      %v3463 = vld [vmem:[%s3457 + $0x4f] sm:$0xff]
      %v3464 = vld [vmem:[%s3457 + $0x67] sm:$0xff]
      %v3465 = vld [vmem:[%s3457 + $0x6f] sm:$0xff]
      %v3466 = vld [vmem:[%s3457 + $0x87] sm:$0xff]
      %v3467 = vld [vmem:[%s3457 + $0x8f] sm:$0xff]
      %v3468 = vld [vmem:[%s3457 + $0xa7] sm:$0xff]
      %v3469 = vld [vmem:[%s3457 + $0xaf] sm:$0xff]
      %v3470 = vld [vmem:[%s3457 + $0xc7] sm:$0xff]
      %v3471 = vld [vmem:[%s3457 + $0xcf] sm:$0xff]
      %v3472 = vld [vmem:[%s3457 + $0xe7] sm:$0xff]
      %v3473 = vld [vmem:[%s3457 + $0xef] sm:$0xff]
      %v3474 = vld [vmem:[%s3457 + $0x107] sm:$0xff]
      %v3475 = vld [vmem:[%s3457 + $0x10f] sm:$0xff]
      %v3476 = vld [vmem:[%s3457 + $0x127] sm:$0xff]
      %v3477 = vld [vmem:[%s3457 + $0x12f] sm:$0xff]
      %v3478 = vld [vmem:[%s3457 + $0x147] sm:$0xff]
      %v3479 = vld [vmem:[%s3457 + $0x14f] sm:$0xff]
      %v3480 = vld [vmem:[%s3457 + $0x167] sm:$0xff]
      %v3481 = vld [vmem:[%s3457 + $0x16f] sm:$0xff]
      %v3482 = vld [vmem:[%s3457 + $0x187] sm:$0xff]
      %v3483 = vld [vmem:[%s3457 + $0x18f] sm:$0xff]
      %v3484 = vld [vmem:[%s3457 + $0x1a7] sm:$0xff]
      %v3485 = vld [vmem:[%s3457 + $0x1af] sm:$0xff]
      %v3486 = vld [vmem:[%s3457 + $0x1c7] sm:$0xff]
      %v3487 = vld [vmem:[%s3457 + $0x1cf] sm:$0xff]
      %v3488 = vld [vmem:[%s3457 + $0x1e7] sm:$0xff]
      %v3489 = vld [vmem:[%s3457 + $0x1ef] sm:$0xff]
      %3522 = vrot.lane.b32.xlu0 %v3458, 48
      %v3523 = vpop.permute.xlu0 %3522
      %3524 = vrot.lane.b32.xlu0 %v3459, 48
      %v3525 = vpop.permute.xlu0 %3524
      %3526 = vrot.lane.b32.xlu0 %v3460, 48
      %v3527 = vpop.permute.xlu0 %3526
      %3528 = vrot.lane.b32.xlu0 %v3461, 48
      %v3529 = vpop.permute.xlu0 %3528
      %3530 = vrot.lane.b32.xlu0 %v3462, 48
      %v3531 = vpop.permute.xlu0 %3530
      %3532 = vrot.lane.b32.xlu0 %v3463, 48
      %v3533 = vpop.permute.xlu0 %3532
      %3534 = vrot.lane.b32.xlu0 %v3464, 48
      %v3535 = vpop.permute.xlu0 %3534
      %3536 = vrot.lane.b32.xlu0 %v3465, 48
      %v3537 = vpop.permute.xlu0 %3536
      %3538 = vrot.lane.b32.xlu0 %v3466, 48
      %v3539 = vpop.permute.xlu0 %3538
      %3540 = vrot.lane.b32.xlu0 %v3467, 48
      %v3541 = vpop.permute.xlu0 %3540
      %3542 = vrot.lane.b32.xlu0 %v3468, 48
      %v3543 = vpop.permute.xlu0 %3542
      %3544 = vrot.lane.b32.xlu0 %v3469, 48
      %v3545 = vpop.permute.xlu0 %3544
      %3546 = vrot.lane.b32.xlu0 %v3470, 48
      %v3547 = vpop.permute.xlu0 %3546
      %3548 = vrot.lane.b32.xlu0 %v3471, 48
      %v3549 = vpop.permute.xlu0 %3548
      %3550 = vrot.lane.b32.xlu0 %v3472, 48
      %v3551 = vpop.permute.xlu0 %3550
      %3552 = vrot.lane.b32.xlu0 %v3473, 48
      %v3553 = vpop.permute.xlu0 %3552
      %3554 = vrot.lane.b32.xlu0 %v3474, 48
      %v3555 = vpop.permute.xlu0 %3554
      %3556 = vrot.lane.b32.xlu0 %v3475, 48
      %v3557 = vpop.permute.xlu0 %3556
      %3558 = vrot.lane.b32.xlu0 %v3476, 48
      %v3559 = vpop.permute.xlu0 %3558
      %3560 = vrot.lane.b32.xlu0 %v3477, 48
      %v3561 = vpop.permute.xlu0 %3560
      %3562 = vrot.lane.b32.xlu0 %v3478, 48
      %v3563 = vpop.permute.xlu0 %3562
      %3564 = vrot.lane.b32.xlu0 %v3479, 48
      %v3565 = vpop.permute.xlu0 %3564
      %3566 = vrot.lane.b32.xlu0 %v3480, 48
      %v3567 = vpop.permute.xlu0 %3566
      %3568 = vrot.lane.b32.xlu0 %v3481, 48
      %v3569 = vpop.permute.xlu0 %3568
      %3570 = vrot.lane.b32.xlu0 %v3482, 48
      %v3571 = vpop.permute.xlu0 %3570
      %3572 = vrot.lane.b32.xlu0 %v3483, 48
      %v3573 = vpop.permute.xlu0 %3572
      %3574 = vrot.lane.b32.xlu0 %v3484, 48
      %v3575 = vpop.permute.xlu0 %3574
      %3576 = vrot.lane.b32.xlu0 %v3485, 48
      %v3577 = vpop.permute.xlu0 %3576
      %3578 = vrot.lane.b32.xlu0 %v3486, 48
      %v3579 = vpop.permute.xlu0 %3578
      %3580 = vrot.lane.b32.xlu0 %v3487, 48
      %v3581 = vpop.permute.xlu0 %3580
      %3582 = vrot.lane.b32.xlu0 %v3488, 48
      %v3583 = vpop.permute.xlu0 %3582
      %3584 = vrot.lane.b32.xlu0 %v3489, 48
      %v3585 = vpop.permute.xlu0 %3584
      %vm3618 = vcmask 458112
      %3619 = vst.msk [vmem:[#allocation5] sm:$0xff] %vm3618, %v3523
      %3620 = vst.msk [vmem:[#allocation5 + $0x8] sm:$0xff] %vm3618, %v3525
      %3621 = vst.msk [vmem:[#allocation5 + $0x10] sm:$0xff] %vm3618, %v3527
      %3622 = vst.msk [vmem:[#allocation5 + $0x18] sm:$0xff] %vm3618, %v3529
      %3623 = vst.msk [vmem:[#allocation5 + $0x20] sm:$0xff] %vm3618, %v3531
      %3624 = vst.msk [vmem:[#allocation5 + $0x28] sm:$0xff] %vm3618, %v3533
      %3625 = vst.msk [vmem:[#allocation5 + $0x30] sm:$0xff] %vm3618, %v3535
      %3626 = vst.msk [vmem:[#allocation5 + $0x38] sm:$0xff] %vm3618, %v3537
      %3627 = vst.msk [vmem:[#allocation5 + $0x40] sm:$0xff] %vm3618, %v3539
      %3628 = vst.msk [vmem:[#allocation5 + $0x48] sm:$0xff] %vm3618, %v3541
      %3629 = vst.msk [vmem:[#allocation5 + $0x50] sm:$0xff] %vm3618, %v3543
      %3630 = vst.msk [vmem:[#allocation5 + $0x58] sm:$0xff] %vm3618, %v3545
      %3631 = vst.msk [vmem:[#allocation5 + $0x60] sm:$0xff] %vm3618, %v3547
      %3632 = vst.msk [vmem:[#allocation5 + $0x68] sm:$0xff] %vm3618, %v3549
      %3633 = vst.msk [vmem:[#allocation5 + $0x70] sm:$0xff] %vm3618, %v3551
      %3634 = vst.msk [vmem:[#allocation5 + $0x78] sm:$0xff] %vm3618, %v3553
      %3635 = vst.msk [vmem:[#allocation5 + $0x80] sm:$0xff] %vm3618, %v3555
      %3636 = vst.msk [vmem:[#allocation5 + $0x88] sm:$0xff] %vm3618, %v3557
      %3637 = vst.msk [vmem:[#allocation5 + $0x90] sm:$0xff] %vm3618, %v3559
      %3638 = vst.msk [vmem:[#allocation5 + $0x98] sm:$0xff] %vm3618, %v3561
      %3639 = vst.msk [vmem:[#allocation5 + $0xa0] sm:$0xff] %vm3618, %v3563
      %3640 = vst.msk [vmem:[#allocation5 + $0xa8] sm:$0xff] %vm3618, %v3565
      %3641 = vst.msk [vmem:[#allocation5 + $0xb0] sm:$0xff] %vm3618, %v3567
      %3642 = vst.msk [vmem:[#allocation5 + $0xb8] sm:$0xff] %vm3618, %v3569
      %3643 = vst.msk [vmem:[#allocation5 + $0xc0] sm:$0xff] %vm3618, %v3571
      %3644 = vst.msk [vmem:[#allocation5 + $0xc8] sm:$0xff] %vm3618, %v3573
      %3645 = vst.msk [vmem:[#allocation5 + $0xd0] sm:$0xff] %vm3618, %v3575
      %3646 = vst.msk [vmem:[#allocation5 + $0xd8] sm:$0xff] %vm3618, %v3577
      %3647 = vst.msk [vmem:[#allocation5 + $0xe0] sm:$0xff] %vm3618, %v3579
      %3648 = vst.msk [vmem:[#allocation5 + $0xe8] sm:$0xff] %vm3618, %v3581
      %3649 = vst.msk [vmem:[#allocation5 + $0xf0] sm:$0xff] %vm3618, %v3583
      %3650 = vst.msk [vmem:[#allocation5 + $0xf8] sm:$0xff] %vm3618, %v3585
      %v3651 = vld [vmem:[%s3457 + $0x8] sm:$0xff]
      %v3652 = vld [vmem:[%s3457 + $0x10] sm:$0xff]
      %v3653 = vld [vmem:[%s3457 + $0x28] sm:$0xff]
      %v3654 = vld [vmem:[%s3457 + $0x30] sm:$0xff]
      %v3655 = vld [vmem:[%s3457 + $0x48] sm:$0xff]
      %v3656 = vld [vmem:[%s3457 + $0x50] sm:$0xff]
      %v3657 = vld [vmem:[%s3457 + $0x68] sm:$0xff]
      %v3658 = vld [vmem:[%s3457 + $0x70] sm:$0xff]
      %v3659 = vld [vmem:[%s3457 + $0x88] sm:$0xff]
      %v3660 = vld [vmem:[%s3457 + $0x90] sm:$0xff]
      %v3661 = vld [vmem:[%s3457 + $0xa8] sm:$0xff]
      %v3662 = vld [vmem:[%s3457 + $0xb0] sm:$0xff]
      %v3663 = vld [vmem:[%s3457 + $0xc8] sm:$0xff]
      %v3664 = vld [vmem:[%s3457 + $0xd0] sm:$0xff]
      %v3665 = vld [vmem:[%s3457 + $0xe8] sm:$0xff]
      %v3666 = vld [vmem:[%s3457 + $0xf0] sm:$0xff]
      %v3667 = vld [vmem:[%s3457 + $0x108] sm:$0xff]
      %v3668 = vld [vmem:[%s3457 + $0x110] sm:$0xff]
      %v3669 = vld [vmem:[%s3457 + $0x128] sm:$0xff]
      %v3670 = vld [vmem:[%s3457 + $0x130] sm:$0xff]
      %v3671 = vld [vmem:[%s3457 + $0x148] sm:$0xff]
      %v3672 = vld [vmem:[%s3457 + $0x150] sm:$0xff]
      %v3673 = vld [vmem:[%s3457 + $0x168] sm:$0xff]
      %v3674 = vld [vmem:[%s3457 + $0x170] sm:$0xff]
      %v3675 = vld [vmem:[%s3457 + $0x188] sm:$0xff]
      %v3676 = vld [vmem:[%s3457 + $0x190] sm:$0xff]
      %v3677 = vld [vmem:[%s3457 + $0x1a8] sm:$0xff]
      %v3678 = vld [vmem:[%s3457 + $0x1b0] sm:$0xff]
      %v3679 = vld [vmem:[%s3457 + $0x1c8] sm:$0xff]
      %v3680 = vld [vmem:[%s3457 + $0x1d0] sm:$0xff]
      %v3681 = vld [vmem:[%s3457 + $0x1e8] sm:$0xff]
      %v3682 = vld [vmem:[%s3457 + $0x1f0] sm:$0xff]
      %3715 = vrot.lane.b32.xlu0 %v3651, 56
      %v3716 = vpop.permute.xlu0 %3715
      %3717 = vrot.lane.b32.xlu0 %v3652, 56
      %v3718 = vpop.permute.xlu0 %3717
      %3719 = vrot.lane.b32.xlu0 %v3653, 56
      %v3720 = vpop.permute.xlu0 %3719
      %3721 = vrot.lane.b32.xlu0 %v3654, 56
      %v3722 = vpop.permute.xlu0 %3721
      %3723 = vrot.lane.b32.xlu0 %v3655, 56
      %v3724 = vpop.permute.xlu0 %3723
      %3725 = vrot.lane.b32.xlu0 %v3656, 56
      %v3726 = vpop.permute.xlu0 %3725
      %3727 = vrot.lane.b32.xlu0 %v3657, 56
      %v3728 = vpop.permute.xlu0 %3727
      %3729 = vrot.lane.b32.xlu0 %v3658, 56
      %v3730 = vpop.permute.xlu0 %3729
      %3731 = vrot.lane.b32.xlu0 %v3659, 56
      %v3732 = vpop.permute.xlu0 %3731
      %3733 = vrot.lane.b32.xlu0 %v3660, 56
      %v3734 = vpop.permute.xlu0 %3733
      %3735 = vrot.lane.b32.xlu0 %v3661, 56
      %v3736 = vpop.permute.xlu0 %3735
      %3737 = vrot.lane.b32.xlu0 %v3662, 56
      %v3738 = vpop.permute.xlu0 %3737
      %3739 = vrot.lane.b32.xlu0 %v3663, 56
      %v3740 = vpop.permute.xlu0 %3739
      %3741 = vrot.lane.b32.xlu0 %v3664, 56
      %v3742 = vpop.permute.xlu0 %3741
      %3743 = vrot.lane.b32.xlu0 %v3665, 56
      %v3744 = vpop.permute.xlu0 %3743
      %3745 = vrot.lane.b32.xlu0 %v3666, 56
      %v3746 = vpop.permute.xlu0 %3745
      %3747 = vrot.lane.b32.xlu0 %v3667, 56
      %v3748 = vpop.permute.xlu0 %3747
      %3749 = vrot.lane.b32.xlu0 %v3668, 56
      %v3750 = vpop.permute.xlu0 %3749
      %3751 = vrot.lane.b32.xlu0 %v3669, 56
      %v3752 = vpop.permute.xlu0 %3751
      %3753 = vrot.lane.b32.xlu0 %v3670, 56
      %v3754 = vpop.permute.xlu0 %3753
      %3755 = vrot.lane.b32.xlu0 %v3671, 56
      %v3756 = vpop.permute.xlu0 %3755
      %3757 = vrot.lane.b32.xlu0 %v3672, 56
      %v3758 = vpop.permute.xlu0 %3757
      %3759 = vrot.lane.b32.xlu0 %v3673, 56
      %v3760 = vpop.permute.xlu0 %3759
      %3761 = vrot.lane.b32.xlu0 %v3674, 56
      %v3762 = vpop.permute.xlu0 %3761
      %3763 = vrot.lane.b32.xlu0 %v3675, 56
      %v3764 = vpop.permute.xlu0 %3763
      %3765 = vrot.lane.b32.xlu0 %v3676, 56
      %v3766 = vpop.permute.xlu0 %3765
      %3767 = vrot.lane.b32.xlu0 %v3677, 56
      %v3768 = vpop.permute.xlu0 %3767
      %3769 = vrot.lane.b32.xlu0 %v3678, 56
      %v3770 = vpop.permute.xlu0 %3769
      %3771 = vrot.lane.b32.xlu0 %v3679, 56
      %v3772 = vpop.permute.xlu0 %3771
      %3773 = vrot.lane.b32.xlu0 %v3680, 56
      %v3774 = vpop.permute.xlu0 %3773
      %3775 = vrot.lane.b32.xlu0 %v3681, 56
      %v3776 = vpop.permute.xlu0 %3775
      %3777 = vrot.lane.b32.xlu0 %v3682, 56
      %v3778 = vpop.permute.xlu0 %3777
      %vm3811 = vcmask 523712
      %3812 = vst.msk [vmem:[#allocation5] sm:$0xff] %vm3811, %v3716
      %3813 = vst.msk [vmem:[#allocation5 + $0x8] sm:$0xff] %vm3811, %v3718
      %3814 = vst.msk [vmem:[#allocation5 + $0x10] sm:$0xff] %vm3811, %v3720
      %3815 = vst.msk [vmem:[#allocation5 + $0x18] sm:$0xff] %vm3811, %v3722
      %3816 = vst.msk [vmem:[#allocation5 + $0x20] sm:$0xff] %vm3811, %v3724
      %3817 = vst.msk [vmem:[#allocation5 + $0x28] sm:$0xff] %vm3811, %v3726
      %3818 = vst.msk [vmem:[#allocation5 + $0x30] sm:$0xff] %vm3811, %v3728
      %3819 = vst.msk [vmem:[#allocation5 + $0x38] sm:$0xff] %vm3811, %v3730
      %3820 = vst.msk [vmem:[#allocation5 + $0x40] sm:$0xff] %vm3811, %v3732
      %3821 = vst.msk [vmem:[#allocation5 + $0x48] sm:$0xff] %vm3811, %v3734
      %3822 = vst.msk [vmem:[#allocation5 + $0x50] sm:$0xff] %vm3811, %v3736
      %3823 = vst.msk [vmem:[#allocation5 + $0x58] sm:$0xff] %vm3811, %v3738
      %3824 = vst.msk [vmem:[#allocation5 + $0x60] sm:$0xff] %vm3811, %v3740
      %3825 = vst.msk [vmem:[#allocation5 + $0x68] sm:$0xff] %vm3811, %v3742
      %3826 = vst.msk [vmem:[#allocation5 + $0x70] sm:$0xff] %vm3811, %v3744
      %3827 = vst.msk [vmem:[#allocation5 + $0x78] sm:$0xff] %vm3811, %v3746
      %3828 = vst.msk [vmem:[#allocation5 + $0x80] sm:$0xff] %vm3811, %v3748
      %3829 = vst.msk [vmem:[#allocation5 + $0x88] sm:$0xff] %vm3811, %v3750
      %3830 = vst.msk [vmem:[#allocation5 + $0x90] sm:$0xff] %vm3811, %v3752
      %3831 = vst.msk [vmem:[#allocation5 + $0x98] sm:$0xff] %vm3811, %v3754
      %3832 = vst.msk [vmem:[#allocation5 + $0xa0] sm:$0xff] %vm3811, %v3756
      %3833 = vst.msk [vmem:[#allocation5 + $0xa8] sm:$0xff] %vm3811, %v3758
      %3834 = vst.msk [vmem:[#allocation5 + $0xb0] sm:$0xff] %vm3811, %v3760
      %3835 = vst.msk [vmem:[#allocation5 + $0xb8] sm:$0xff] %vm3811, %v3762
      %3836 = vst.msk [vmem:[#allocation5 + $0xc0] sm:$0xff] %vm3811, %v3764
      %3837 = vst.msk [vmem:[#allocation5 + $0xc8] sm:$0xff] %vm3811, %v3766
      %3838 = vst.msk [vmem:[#allocation5 + $0xd0] sm:$0xff] %vm3811, %v3768
      %3839 = vst.msk [vmem:[#allocation5 + $0xd8] sm:$0xff] %vm3811, %v3770
      %3840 = vst.msk [vmem:[#allocation5 + $0xe0] sm:$0xff] %vm3811, %v3772
      %3841 = vst.msk [vmem:[#allocation5 + $0xe8] sm:$0xff] %vm3811, %v3774
      %3842 = vst.msk [vmem:[#allocation5 + $0xf0] sm:$0xff] %vm3811, %v3776
      %3843 = vst.msk [vmem:[#allocation5 + $0xf8] sm:$0xff] %vm3811, %v3778
      %v3844 = vld [vmem:[%s3457 + $0x9] sm:$0xff]
      %v3845 = vld [vmem:[%s3457 + $0x11] sm:$0xff]
      %v3846 = vld [vmem:[%s3457 + $0x29] sm:$0xff]
      %v3847 = vld [vmem:[%s3457 + $0x31] sm:$0xff]
      %v3848 = vld [vmem:[%s3457 + $0x49] sm:$0xff]
      %v3849 = vld [vmem:[%s3457 + $0x51] sm:$0xff]
      %v3850 = vld [vmem:[%s3457 + $0x69] sm:$0xff]
      %v3851 = vld [vmem:[%s3457 + $0x71] sm:$0xff]
      %v3852 = vld [vmem:[%s3457 + $0x89] sm:$0xff]
      %v3853 = vld [vmem:[%s3457 + $0x91] sm:$0xff]
      %v3854 = vld [vmem:[%s3457 + $0xa9] sm:$0xff]
      %v3855 = vld [vmem:[%s3457 + $0xb1] sm:$0xff]
      %v3856 = vld [vmem:[%s3457 + $0xc9] sm:$0xff]
      %v3857 = vld [vmem:[%s3457 + $0xd1] sm:$0xff]
      %v3858 = vld [vmem:[%s3457 + $0xe9] sm:$0xff]
      %v3859 = vld [vmem:[%s3457 + $0xf1] sm:$0xff]
      %v3860 = vld [vmem:[%s3457 + $0x109] sm:$0xff]
      %v3861 = vld [vmem:[%s3457 + $0x111] sm:$0xff]
      %v3862 = vld [vmem:[%s3457 + $0x129] sm:$0xff]
      %v3863 = vld [vmem:[%s3457 + $0x131] sm:$0xff]
      %v3864 = vld [vmem:[%s3457 + $0x149] sm:$0xff]
      %v3865 = vld [vmem:[%s3457 + $0x151] sm:$0xff]
      %v3866 = vld [vmem:[%s3457 + $0x169] sm:$0xff]
      %v3867 = vld [vmem:[%s3457 + $0x171] sm:$0xff]
      %v3868 = vld [vmem:[%s3457 + $0x189] sm:$0xff]
      %v3869 = vld [vmem:[%s3457 + $0x191] sm:$0xff]
      %v3870 = vld [vmem:[%s3457 + $0x1a9] sm:$0xff]
      %v3871 = vld [vmem:[%s3457 + $0x1b1] sm:$0xff]
      %v3872 = vld [vmem:[%s3457 + $0x1c9] sm:$0xff]
      %v3873 = vld [vmem:[%s3457 + $0x1d1] sm:$0xff]
      %v3874 = vld [vmem:[%s3457 + $0x1e9] sm:$0xff]
      %v3875 = vld [vmem:[%s3457 + $0x1f1] sm:$0xff]
      %3908 = vrot.lane.b32.xlu0 %v3844, 64
      %v3909 = vpop.permute.xlu0 %3908
      %3910 = vrot.lane.b32.xlu0 %v3845, 64
      %v3911 = vpop.permute.xlu0 %3910
      %3912 = vrot.lane.b32.xlu0 %v3846, 64
      %v3913 = vpop.permute.xlu0 %3912
      %3914 = vrot.lane.b32.xlu0 %v3847, 64
      %v3915 = vpop.permute.xlu0 %3914
      %3916 = vrot.lane.b32.xlu0 %v3848, 64
      %v3917 = vpop.permute.xlu0 %3916
      %3918 = vrot.lane.b32.xlu0 %v3849, 64
      %v3919 = vpop.permute.xlu0 %3918
      %3920 = vrot.lane.b32.xlu0 %v3850, 64
      %v3921 = vpop.permute.xlu0 %3920
      %3922 = vrot.lane.b32.xlu0 %v3851, 64
      %v3923 = vpop.permute.xlu0 %3922
      %3924 = vrot.lane.b32.xlu0 %v3852, 64
      %v3925 = vpop.permute.xlu0 %3924
      %3926 = vrot.lane.b32.xlu0 %v3853, 64
      %v3927 = vpop.permute.xlu0 %3926
      %3928 = vrot.lane.b32.xlu0 %v3854, 64
      %v3929 = vpop.permute.xlu0 %3928
      %3930 = vrot.lane.b32.xlu0 %v3855, 64
      %v3931 = vpop.permute.xlu0 %3930
      %3932 = vrot.lane.b32.xlu0 %v3856, 64
      %v3933 = vpop.permute.xlu0 %3932
      %3934 = vrot.lane.b32.xlu0 %v3857, 64
      %v3935 = vpop.permute.xlu0 %3934
      %3936 = vrot.lane.b32.xlu0 %v3858, 64
      %v3937 = vpop.permute.xlu0 %3936
      %3938 = vrot.lane.b32.xlu0 %v3859, 64
      %v3939 = vpop.permute.xlu0 %3938
      %3940 = vrot.lane.b32.xlu0 %v3860, 64
      %v3941 = vpop.permute.xlu0 %3940
      %3942 = vrot.lane.b32.xlu0 %v3861, 64
      %v3943 = vpop.permute.xlu0 %3942
      %3944 = vrot.lane.b32.xlu0 %v3862, 64
      %v3945 = vpop.permute.xlu0 %3944
      %3946 = vrot.lane.b32.xlu0 %v3863, 64
      %v3947 = vpop.permute.xlu0 %3946
      %3948 = vrot.lane.b32.xlu0 %v3864, 64
      %v3949 = vpop.permute.xlu0 %3948
      %3950 = vrot.lane.b32.xlu0 %v3865, 64
      %v3951 = vpop.permute.xlu0 %3950
      %3952 = vrot.lane.b32.xlu0 %v3866, 64
      %v3953 = vpop.permute.xlu0 %3952
      %3954 = vrot.lane.b32.xlu0 %v3867, 64
      %v3955 = vpop.permute.xlu0 %3954
      %3956 = vrot.lane.b32.xlu0 %v3868, 64
      %v3957 = vpop.permute.xlu0 %3956
      %3958 = vrot.lane.b32.xlu0 %v3869, 64
      %v3959 = vpop.permute.xlu0 %3958
      %3960 = vrot.lane.b32.xlu0 %v3870, 64
      %v3961 = vpop.permute.xlu0 %3960
      %3962 = vrot.lane.b32.xlu0 %v3871, 64
      %v3963 = vpop.permute.xlu0 %3962
      %3964 = vrot.lane.b32.xlu0 %v3872, 64
      %v3965 = vpop.permute.xlu0 %3964
      %3966 = vrot.lane.b32.xlu0 %v3873, 64
      %v3967 = vpop.permute.xlu0 %3966
      %3968 = vrot.lane.b32.xlu0 %v3874, 64
      %v3969 = vpop.permute.xlu0 %3968
      %3970 = vrot.lane.b32.xlu0 %v3875, 64
      %v3971 = vpop.permute.xlu0 %3970
      %vm4004 = vcmask 589312
      %4005 = vst.msk [vmem:[#allocation5] sm:$0xff] %vm4004, %v3909
      %4006 = vst.msk [vmem:[#allocation5 + $0x8] sm:$0xff] %vm4004, %v3911
      %4007 = vst.msk [vmem:[#allocation5 + $0x10] sm:$0xff] %vm4004, %v3913
      %4008 = vst.msk [vmem:[#allocation5 + $0x18] sm:$0xff] %vm4004, %v3915
      %4009 = vst.msk [vmem:[#allocation5 + $0x20] sm:$0xff] %vm4004, %v3917
      %4010 = vst.msk [vmem:[#allocation5 + $0x28] sm:$0xff] %vm4004, %v3919
      %4011 = vst.msk [vmem:[#allocation5 + $0x30] sm:$0xff] %vm4004, %v3921
      %4012 = vst.msk [vmem:[#allocation5 + $0x38] sm:$0xff] %vm4004, %v3923
      %4013 = vst.msk [vmem:[#allocation5 + $0x40] sm:$0xff] %vm4004, %v3925
      %4014 = vst.msk [vmem:[#allocation5 + $0x48] sm:$0xff] %vm4004, %v3927
      %4015 = vst.msk [vmem:[#allocation5 + $0x50] sm:$0xff] %vm4004, %v3929
      %4016 = vst.msk [vmem:[#allocation5 + $0x58] sm:$0xff] %vm4004, %v3931
      %4017 = vst.msk [vmem:[#allocation5 + $0x60] sm:$0xff] %vm4004, %v3933
      %4018 = vst.msk [vmem:[#allocation5 + $0x68] sm:$0xff] %vm4004, %v3935
      %4019 = vst.msk [vmem:[#allocation5 + $0x70] sm:$0xff] %vm4004, %v3937
      %4020 = vst.msk [vmem:[#allocation5 + $0x78] sm:$0xff] %vm4004, %v3939
      %4021 = vst.msk [vmem:[#allocation5 + $0x80] sm:$0xff] %vm4004, %v3941
      %4022 = vst.msk [vmem:[#allocation5 + $0x88] sm:$0xff] %vm4004, %v3943
      %4023 = vst.msk [vmem:[#allocation5 + $0x90] sm:$0xff] %vm4004, %v3945
      %4024 = vst.msk [vmem:[#allocation5 + $0x98] sm:$0xff] %vm4004, %v3947
      %4025 = vst.msk [vmem:[#allocation5 + $0xa0] sm:$0xff] %vm4004, %v3949
      %4026 = vst.msk [vmem:[#allocation5 + $0xa8] sm:$0xff] %vm4004, %v3951
      %4027 = vst.msk [vmem:[#allocation5 + $0xb0] sm:$0xff] %vm4004, %v3953
      %4028 = vst.msk [vmem:[#allocation5 + $0xb8] sm:$0xff] %vm4004, %v3955
      %4029 = vst.msk [vmem:[#allocation5 + $0xc0] sm:$0xff] %vm4004, %v3957
      %4030 = vst.msk [vmem:[#allocation5 + $0xc8] sm:$0xff] %vm4004, %v3959
      %4031 = vst.msk [vmem:[#allocation5 + $0xd0] sm:$0xff] %vm4004, %v3961
      %4032 = vst.msk [vmem:[#allocation5 + $0xd8] sm:$0xff] %vm4004, %v3963
      %4033 = vst.msk [vmem:[#allocation5 + $0xe0] sm:$0xff] %vm4004, %v3965
      %4034 = vst.msk [vmem:[#allocation5 + $0xe8] sm:$0xff] %vm4004, %v3967
      %4035 = vst.msk [vmem:[#allocation5 + $0xf0] sm:$0xff] %vm4004, %v3969
      %4036 = vst.msk [vmem:[#allocation5 + $0xf8] sm:$0xff] %vm4004, %v3971
      %v4037 = vld [vmem:[#allocation5] sm:$0xff]
      %v4038 = vld [vmem:[#allocation5 + $0x8] sm:$0xff]
      %v4039 = vld [vmem:[#allocation5 + $0x10] sm:$0xff]
      %v4040 = vld [vmem:[#allocation5 + $0x18] sm:$0xff]
      %v4041 = vld [vmem:[#allocation5 + $0x20] sm:$0xff]
      %v4042 = vld [vmem:[#allocation5 + $0x28] sm:$0xff]
      %v4043 = vld [vmem:[#allocation5 + $0x30] sm:$0xff]
      %v4044 = vld [vmem:[#allocation5 + $0x38] sm:$0xff]
      %v4045 = vld [vmem:[#allocation5 + $0x40] sm:$0xff]
      %v4046 = vld [vmem:[#allocation5 + $0x48] sm:$0xff]
      %v4047 = vld [vmem:[#allocation5 + $0x50] sm:$0xff]
      %v4048 = vld [vmem:[#allocation5 + $0x58] sm:$0xff]
      %v4049 = vld [vmem:[#allocation5 + $0x60] sm:$0xff]
      %v4050 = vld [vmem:[#allocation5 + $0x68] sm:$0xff]
      %v4051 = vld [vmem:[#allocation5 + $0x70] sm:$0xff]
      %v4052 = vld [vmem:[#allocation5 + $0x78] sm:$0xff]
      %v4053 = vld [vmem:[#allocation5 + $0x80] sm:$0xff]
      %v4054 = vld [vmem:[#allocation5 + $0x88] sm:$0xff]
      %v4055 = vld [vmem:[#allocation5 + $0x90] sm:$0xff]
      %v4056 = vld [vmem:[#allocation5 + $0x98] sm:$0xff]
      %v4057 = vld [vmem:[#allocation5 + $0xa0] sm:$0xff]
      %v4058 = vld [vmem:[#allocation5 + $0xa8] sm:$0xff]
      %v4059 = vld [vmem:[#allocation5 + $0xb0] sm:$0xff]
      %v4060 = vld [vmem:[#allocation5 + $0xb8] sm:$0xff]
      %v4061 = vld [vmem:[#allocation5 + $0xc0] sm:$0xff]
      %v4062 = vld [vmem:[#allocation5 + $0xc8] sm:$0xff]
      %v4063 = vld [vmem:[#allocation5 + $0xd0] sm:$0xff]
      %v4064 = vld [vmem:[#allocation5 + $0xd8] sm:$0xff]
      %v4065 = vld [vmem:[#allocation5 + $0xe0] sm:$0xff]
      %v4066 = vld [vmem:[#allocation5 + $0xe8] sm:$0xff]
      %v4067 = vld [vmem:[#allocation5 + $0xf0] sm:$0xff]
      %v4068 = vld [vmem:[#allocation5 + $0xf8] sm:$0xff]
      %v4069 = vld [vmem:[%s3] sm:$0xff]
      %v4070 = vld [vmem:[%s3 + $0x8] sm:$0xff]
      %v4071 = vld [vmem:[%s3 + $0x10] sm:$0xff]
      %v4072 = vld [vmem:[%s3 + $0x18] sm:$0xff]
      %v4073 = vld [vmem:[%s3 + $0x20] sm:$0xff]
      %v4074 = vld [vmem:[%s3 + $0x28] sm:$0xff]
      %v4075 = vld [vmem:[%s3 + $0x30] sm:$0xff]
      %v4076 = vld [vmem:[%s3 + $0x38] sm:$0xff]
      %v4077 = vld [vmem:[%s3 + $0x40] sm:$0xff]
      %v4078 = vld [vmem:[%s4] sm:$0x1]
      %v4080 = vlaneseq
      %v4081 = vshrl.u32 %v4080, 7
      %v4082 = vsub.s32 0, %v4081
      %v4083 = vrot.slane %v4078, %v4082
      %vm4085 = vcmask 588800
      %v4087 = vsel %vm4085, %v4037, 0
      %v4090 = vsel %vm4085, %v4038, 0
      %v4093 = vsel %vm4085, %v4039, 0
      %v4096 = vsel %vm4085, %v4040, 0
      %v4099 = vsel %vm4085, %v4041, 0
      %v4102 = vsel %vm4085, %v4042, 0
      %v4105 = vsel %vm4085, %v4043, 0
      %v4108 = vsel %vm4085, %v4044, 0
      %v4111 = vsel %vm4085, %v4045, 0
      %v4114 = vsel %vm4085, %v4046, 0
      %v4117 = vsel %vm4085, %v4047, 0
      %v4120 = vsel %vm4085, %v4048, 0
      %v4123 = vsel %vm4085, %v4049, 0
      %v4126 = vsel %vm4085, %v4050, 0
      %v4129 = vsel %vm4085, %v4051, 0
      %v4132 = vsel %vm4085, %v4052, 0
      %v4135 = vsel %vm4085, %v4053, 0
      %v4138 = vsel %vm4085, %v4054, 0
      %v4141 = vsel %vm4085, %v4055, 0
      %v4144 = vsel %vm4085, %v4056, 0
      %v4147 = vsel %vm4085, %v4057, 0
      %v4150 = vsel %vm4085, %v4058, 0
      %v4153 = vsel %vm4085, %v4059, 0
      %v4156 = vsel %vm4085, %v4060, 0
      %v4159 = vsel %vm4085, %v4061, 0
      %v4162 = vsel %vm4085, %v4062, 0
      %v4165 = vsel %vm4085, %v4063, 0
      %v4168 = vsel %vm4085, %v4064, 0
      %v4171 = vsel %vm4085, %v4065, 0
      %v4174 = vsel %vm4085, %v4066, 0
      %v4177 = vsel %vm4085, %v4067, 0
      %v4180 = vsel %vm4085, %v4068, 0
      %4182 = vmatprep.subr.mxu0 0.0
      %4183 = vmatpush1.msra.mxu0 %v4069
      %4184 = vmatprep.subr.mxu0 0.0
      %4185 = vmatpush1.msra.mxu0 %v4070
      %4186 = vmatprep.subr.mxu0 0.0
      %4187 = vmatpush1.msra.mxu0 %v4071
      %4188 = vmatprep.subr.mxu0 0.0
      %4189 = vmatpush1.msra.mxu0 %v4072
      %4190 = vmatprep.subr.mxu0 0.0
      %4191 = vmatpush1.msra.mxu0 %v4073
      %4192 = vmatprep.subr.mxu0 0.0
      %4193 = vmatpush1.msra.mxu0 %v4074
      %4194 = vmatprep.subr.mxu0 0.0
      %4195 = vmatpush1.msra.mxu0 %v4075
      %4196 = vmatprep.subr.mxu0 0.0
      %4197 = vmatpush1.msra.mxu0 %v4076
      %4198 = vmatprep.subr.mxu0 0.0
      %4199 = vmatpush1.msra.mxu0 %v4077
      %4200 = vmatprep.subr.mxu0 0.0
      %4201 = vmatpush1.msra.mxu0 0.0
      %4202 = vmatprep.subr.mxu0 0.0
      %4203 = vmatpush1.msra.mxu0 0.0
      %4204 = vmatprep.subr.mxu0 0.0
      %4205 = vmatpush1.msra.mxu0 0.0
      %4206 = vmatprep.subr.mxu0 0.0
      %4207 = vmatpush1.msra.mxu0 0.0
      %4208 = vmatprep.subr.mxu0 0.0
      %4209 = vmatpush1.msra.mxu0 0.0
      %4210 = vmatprep.subr.mxu0 0.0
      %4211 = vmatpush1.msra.mxu0 0.0
      %4212 = vmatprep.subr.mxu0 0.0
      %4213 = vmatpush1.msra.mxu0 0.0
      %4214 = vmatprep.subr.mxu0 0.0
      %4215 = vmatpush1.msra.mxu0 0.0
      %4216 = vmatprep.subr.mxu0 0.0
      %4217 = vmatpush1.msra.mxu0 0.0
      %4218 = vmatprep.subr.mxu0 0.0
      %4219 = vmatpush1.msra.mxu0 0.0
      %4220 = vmatprep.subr.mxu0 0.0
      %4221 = vmatpush1.msra.mxu0 0.0
      %4222 = vmatprep.subr.mxu0 0.0
      %4223 = vmatpush1.msra.mxu0 0.0
      %4224 = vmatprep.subr.mxu0 0.0
      %4225 = vmatpush1.msra.mxu0 0.0
      %4226 = vmatprep.subr.mxu0 0.0
      %4227 = vmatpush1.msra.mxu0 0.0
      %4228 = vmatprep.subr.mxu0 0.0
      %4229 = vmatpush1.msra.mxu0 0.0
      %4230 = vmatprep.subr.mxu0 0.0
      %4231 = vmatpush1.msra.mxu0 0.0
      %4232 = vmatprep.subr.mxu0 0.0
      %4233 = vmatpush1.msra.mxu0 0.0
      %4234 = vmatprep.subr.mxu0 0.0
      %4235 = vmatpush1.msra.mxu0 0.0
      %4236 = vmatprep.subr.mxu0 0.0
      %4237 = vmatpush1.msra.mxu0 0.0
      %4238 = vmatprep.subr.mxu0 0.0
      %4239 = vmatpush1.msra.mxu0 0.0
      %4240 = vmatprep.subr.mxu0 0.0
      %4241 = vmatpush1.msra.mxu0 0.0
      %4242 = vmatprep.subr.mxu0 0.0
      %4243 = vmatpush1.msra.mxu0 0.0
      %4244 = vmatprep.subr.mxu0 0.0
      %4245 = vmatpush1.msra.mxu0 0.0
      %4246 = vmatprep.mubr.f32.mxu0 0.0
      %4247 = vmatmul.mubr.f32.gmra.mrb[0].mxu0 %v4087
      %v4248 = vpop.f32.mrb[0].mxu0
      %v4249 = vadd.f32 %v4083, %v4248
      %v4250 = vpop.f32.mrb[0].mxu0
      %4251 = vmatprep.mubr.f32.mxu0 0.0
      %4252 = vmatmul.mubr.f32.gmra.mrb[0].mxu0 %v4090
      %v4253 = vpop.f32.mrb[0].mxu0
      %v4254 = vadd.f32 %v4083, %v4253
      %v4255 = vpop.f32.mrb[0].mxu0
      %4256 = vmatprep.mubr.f32.mxu0 0.0
      %4257 = vmatmul.mubr.f32.gmra.mrb[0].mxu0 %v4093
      %v4258 = vpop.f32.mrb[0].mxu0
      %v4259 = vadd.f32 %v4083, %v4258
      %v4260 = vpop.f32.mrb[0].mxu0
      %4261 = vmatprep.mubr.f32.mxu0 0.0
      %4262 = vmatmul.mubr.f32.gmra.mrb[0].mxu0 %v4096
      %v4263 = vpop.f32.mrb[0].mxu0
      %v4264 = vadd.f32 %v4083, %v4263
      %v4265 = vpop.f32.mrb[0].mxu0
      %4266 = vmatprep.mubr.f32.mxu0 0.0
      %4267 = vmatmul.mubr.f32.gmra.mrb[0].mxu0 %v4099
      %v4268 = vpop.f32.mrb[0].mxu0
      %v4269 = vadd.f32 %v4083, %v4268
      %v4270 = vpop.f32.mrb[0].mxu0
      %4271 = vmatprep.mubr.f32.mxu0 0.0
      %4272 = vmatmul.mubr.f32.gmra.mrb[0].mxu0 %v4102
      %v4273 = vpop.f32.mrb[0].mxu0
      %v4274 = vadd.f32 %v4083, %v4273
      %v4275 = vpop.f32.mrb[0].mxu0
      %4276 = vmatprep.mubr.f32.mxu0 0.0
      %4277 = vmatmul.mubr.f32.gmra.mrb[0].mxu0 %v4105
      %v4278 = vpop.f32.mrb[0].mxu0
      %v4279 = vadd.f32 %v4083, %v4278
      %v4280 = vpop.f32.mrb[0].mxu0
      %4281 = vmatprep.mubr.f32.mxu0 0.0
      %4282 = vmatmul.mubr.f32.gmra.mrb[0].mxu0 %v4108
      %v4283 = vpop.f32.mrb[0].mxu0
      %v4284 = vadd.f32 %v4083, %v4283
      %v4285 = vpop.f32.mrb[0].mxu0
      %4286 = vmatprep.mubr.f32.mxu0 0.0
      %4287 = vmatmul.mubr.f32.gmra.mrb[0].mxu0 %v4111
      %v4288 = vpop.f32.mrb[0].mxu0
      %v4289 = vadd.f32 %v4083, %v4288
      %v4290 = vpop.f32.mrb[0].mxu0
      %4291 = vmatprep.mubr.f32.mxu0 0.0
      %4292 = vmatmul.mubr.f32.gmra.mrb[0].mxu0 %v4114
      %v4293 = vpop.f32.mrb[0].mxu0
      %v4294 = vadd.f32 %v4083, %v4293
      %v4295 = vpop.f32.mrb[0].mxu0
      %4296 = vmatprep.mubr.f32.mxu0 0.0
      %4297 = vmatmul.mubr.f32.gmra.mrb[0].mxu0 %v4117
      %v4298 = vpop.f32.mrb[0].mxu0
      %v4299 = vadd.f32 %v4083, %v4298
      %v4300 = vpop.f32.mrb[0].mxu0
      %4301 = vmatprep.mubr.f32.mxu0 0.0
      %4302 = vmatmul.mubr.f32.gmra.mrb[0].mxu0 %v4120
      %v4303 = vpop.f32.mrb[0].mxu0
      %v4304 = vadd.f32 %v4083, %v4303
      %v4305 = vpop.f32.mrb[0].mxu0
      %4306 = vmatprep.mubr.f32.mxu0 0.0
      %4307 = vmatmul.mubr.f32.gmra.mrb[0].mxu0 %v4123
      %v4308 = vpop.f32.mrb[0].mxu0
      %v4309 = vadd.f32 %v4083, %v4308
      %v4310 = vpop.f32.mrb[0].mxu0
      %4311 = vmatprep.mubr.f32.mxu0 0.0
      %4312 = vmatmul.mubr.f32.gmra.mrb[0].mxu0 %v4126
      %v4313 = vpop.f32.mrb[0].mxu0
      %v4314 = vadd.f32 %v4083, %v4313
      %v4315 = vpop.f32.mrb[0].mxu0
      %4316 = vmatprep.mubr.f32.mxu0 0.0
      %4317 = vmatmul.mubr.f32.gmra.mrb[0].mxu0 %v4129
      %v4318 = vpop.f32.mrb[0].mxu0
      %v4319 = vadd.f32 %v4083, %v4318
      %v4320 = vpop.f32.mrb[0].mxu0
      %4321 = vmatprep.mubr.f32.mxu0 0.0
      %4322 = vmatmul.mubr.f32.gmra.mrb[0].mxu0 %v4132
      %v4323 = vpop.f32.mrb[0].mxu0
      %v4324 = vadd.f32 %v4083, %v4323
      %v4325 = vpop.f32.mrb[0].mxu0
      %4326 = vmatprep.mubr.f32.mxu0 0.0
      %4327 = vmatmul.mubr.f32.gmra.mrb[0].mxu0 %v4135
      %v4328 = vpop.f32.mrb[0].mxu0
      %v4329 = vadd.f32 %v4083, %v4328
      %v4330 = vpop.f32.mrb[0].mxu0
      %4331 = vmatprep.mubr.f32.mxu0 0.0
      %4332 = vmatmul.mubr.f32.gmra.mrb[0].mxu0 %v4138
      %v4333 = vpop.f32.mrb[0].mxu0
      %v4334 = vadd.f32 %v4083, %v4333
      %v4335 = vpop.f32.mrb[0].mxu0
      %4336 = vmatprep.mubr.f32.mxu0 0.0
      %4337 = vmatmul.mubr.f32.gmra.mrb[0].mxu0 %v4141
      %v4338 = vpop.f32.mrb[0].mxu0
      %v4339 = vadd.f32 %v4083, %v4338
      %v4340 = vpop.f32.mrb[0].mxu0
      %4341 = vmatprep.mubr.f32.mxu0 0.0
      %4342 = vmatmul.mubr.f32.gmra.mrb[0].mxu0 %v4144
      %v4343 = vpop.f32.mrb[0].mxu0
      %v4344 = vadd.f32 %v4083, %v4343
      %v4345 = vpop.f32.mrb[0].mxu0
      %4346 = vmatprep.mubr.f32.mxu0 0.0
      %4347 = vmatmul.mubr.f32.gmra.mrb[0].mxu0 %v4147
      %v4348 = vpop.f32.mrb[0].mxu0
      %v4349 = vadd.f32 %v4083, %v4348
      %v4350 = vpop.f32.mrb[0].mxu0
      %4351 = vmatprep.mubr.f32.mxu0 0.0
      %4352 = vmatmul.mubr.f32.gmra.mrb[0].mxu0 %v4150
      %v4353 = vpop.f32.mrb[0].mxu0
      %v4354 = vadd.f32 %v4083, %v4353
      %v4355 = vpop.f32.mrb[0].mxu0
      %4356 = vmatprep.mubr.f32.mxu0 0.0
      %4357 = vmatmul.mubr.f32.gmra.mrb[0].mxu0 %v4153
      %v4358 = vpop.f32.mrb[0].mxu0
      %v4359 = vadd.f32 %v4083, %v4358
      %v4360 = vpop.f32.mrb[0].mxu0
      %4361 = vmatprep.mubr.f32.mxu0 0.0
      %4362 = vmatmul.mubr.f32.gmra.mrb[0].mxu0 %v4156
      %v4363 = vpop.f32.mrb[0].mxu0
      %v4364 = vadd.f32 %v4083, %v4363
      %v4365 = vpop.f32.mrb[0].mxu0
      %4366 = vmatprep.mubr.f32.mxu0 0.0
      %4367 = vmatmul.mubr.f32.gmra.mrb[0].mxu0 %v4159
      %v4368 = vpop.f32.mrb[0].mxu0
      %v4369 = vadd.f32 %v4083, %v4368
      %v4370 = vpop.f32.mrb[0].mxu0
      %4371 = vmatprep.mubr.f32.mxu0 0.0
      %4372 = vmatmul.mubr.f32.gmra.mrb[0].mxu0 %v4162
      %v4373 = vpop.f32.mrb[0].mxu0
      %v4374 = vadd.f32 %v4083, %v4373
      %v4375 = vpop.f32.mrb[0].mxu0
      %4376 = vmatprep.mubr.f32.mxu0 0.0
      %4377 = vmatmul.mubr.f32.gmra.mrb[0].mxu0 %v4165
      %v4378 = vpop.f32.mrb[0].mxu0
      %v4379 = vadd.f32 %v4083, %v4378
      %v4380 = vpop.f32.mrb[0].mxu0
      %4381 = vmatprep.mubr.f32.mxu0 0.0
      %4382 = vmatmul.mubr.f32.gmra.mrb[0].mxu0 %v4168
      %v4383 = vpop.f32.mrb[0].mxu0
      %v4384 = vadd.f32 %v4083, %v4383
      %v4385 = vpop.f32.mrb[0].mxu0
      %4386 = vmatprep.mubr.f32.mxu0 0.0
      %4387 = vmatmul.mubr.f32.gmra.mrb[0].mxu0 %v4171
      %v4388 = vpop.f32.mrb[0].mxu0
      %v4389 = vadd.f32 %v4083, %v4388
      %v4390 = vpop.f32.mrb[0].mxu0
      %4391 = vmatprep.mubr.f32.mxu0 0.0
      %4392 = vmatmul.mubr.f32.gmra.mrb[0].mxu0 %v4174
      %v4393 = vpop.f32.mrb[0].mxu0
      %v4394 = vadd.f32 %v4083, %v4393
      %v4395 = vpop.f32.mrb[0].mxu0
      %4396 = vmatprep.mubr.f32.mxu0 0.0
      %4397 = vmatmul.mubr.f32.gmra.mrb[0].mxu0 %v4177
      %v4398 = vpop.f32.mrb[0].mxu0
      %v4399 = vadd.f32 %v4083, %v4398
      %v4400 = vpop.f32.mrb[0].mxu0
      %4401 = vmatprep.mubr.f32.mxu0 0.0
      %4402 = vmatmul.mubr.f32.gmra.mrb[0].mxu0 %v4180
      %v4403 = vpop.f32.mrb[0].mxu0
      %v4404 = vadd.f32 %v4083, %v4403
      %v4405 = vpop.f32.mrb[0].mxu0
      %4406 = vdwg.mxu0
      %v4407 = vmax.f32 %v4249, 0.0
      %v4408 = vmax.f32 %v4254, 0.0
      %v4409 = vmax.f32 %v4259, 0.0
      %v4410 = vmax.f32 %v4264, 0.0
      %v4411 = vmax.f32 %v4269, 0.0
      %v4412 = vmax.f32 %v4274, 0.0
      %v4413 = vmax.f32 %v4279, 0.0
      %v4414 = vmax.f32 %v4284, 0.0
      %v4415 = vmax.f32 %v4289, 0.0
      %v4416 = vmax.f32 %v4294, 0.0
      %v4417 = vmax.f32 %v4299, 0.0
      %v4418 = vmax.f32 %v4304, 0.0
      %v4419 = vmax.f32 %v4309, 0.0
      %v4420 = vmax.f32 %v4314, 0.0
      %v4421 = vmax.f32 %v4319, 0.0
      %v4422 = vmax.f32 %v4324, 0.0
      %v4423 = vmax.f32 %v4329, 0.0
      %v4424 = vmax.f32 %v4334, 0.0
      %v4425 = vmax.f32 %v4339, 0.0
      %v4426 = vmax.f32 %v4344, 0.0
      %v4427 = vmax.f32 %v4349, 0.0
      %v4428 = vmax.f32 %v4354, 0.0
      %v4429 = vmax.f32 %v4359, 0.0
      %v4430 = vmax.f32 %v4364, 0.0
      %v4431 = vmax.f32 %v4369, 0.0
      %v4432 = vmax.f32 %v4374, 0.0
      %v4433 = vmax.f32 %v4379, 0.0
      %v4434 = vmax.f32 %v4384, 0.0
      %v4435 = vmax.f32 %v4389, 0.0
      %v4436 = vmax.f32 %v4394, 0.0
      %v4437 = vmax.f32 %v4399, 0.0
      %v4438 = vmax.f32 %v4404, 0.0
      %4439 = vst.msk [vmem:[%s224] sm:$0xff] %vm2348, %v4407
      %4440 = vst.msk [vmem:[%s224 + $0x8] sm:$0xff] %vm2348, %v4408
      %4441 = vst.msk [vmem:[%s224 + $0x10] sm:$0xff] %vm2348, %v4409
      %4442 = vst.msk [vmem:[%s224 + $0x18] sm:$0xff] %vm2348, %v4410
      %4443 = vst.msk [vmem:[%s224 + $0x20] sm:$0xff] %vm2348, %v4411
      %4444 = vst.msk [vmem:[%s224 + $0x28] sm:$0xff] %vm2348, %v4412
      %4445 = vst.msk [vmem:[%s224 + $0x30] sm:$0xff] %vm2348, %v4413
      %4446 = vst.msk [vmem:[%s224 + $0x38] sm:$0xff] %vm2348, %v4414
      %4447 = vst.msk [vmem:[%s224 + $0x40] sm:$0xff] %vm2348, %v4415
      %4448 = vst.msk [vmem:[%s224 + $0x48] sm:$0xff] %vm2348, %v4416
      %4449 = vst.msk [vmem:[%s224 + $0x50] sm:$0xff] %vm2348, %v4417
      %4450 = vst.msk [vmem:[%s224 + $0x58] sm:$0xff] %vm2348, %v4418
      %4451 = vst.msk [vmem:[%s224 + $0x60] sm:$0xff] %vm2348, %v4419
      %4452 = vst.msk [vmem:[%s224 + $0x68] sm:$0xff] %vm2348, %v4420
      %4453 = vst.msk [vmem:[%s224 + $0x70] sm:$0xff] %vm2348, %v4421
      %4454 = vst.msk [vmem:[%s224 + $0x78] sm:$0xff] %vm2348, %v4422
      %4455 = vst.msk [vmem:[%s224 + $0x80] sm:$0xff] %vm2348, %v4423
      %4456 = vst.msk [vmem:[%s224 + $0x88] sm:$0xff] %vm2348, %v4424
      %4457 = vst.msk [vmem:[%s224 + $0x90] sm:$0xff] %vm2348, %v4425
      %4458 = vst.msk [vmem:[%s224 + $0x98] sm:$0xff] %vm2348, %v4426
      %4459 = vst.msk [vmem:[%s224 + $0xa0] sm:$0xff] %vm2348, %v4427
      %4460 = vst.msk [vmem:[%s224 + $0xa8] sm:$0xff] %vm2348, %v4428
      %4461 = vst.msk [vmem:[%s224 + $0xb0] sm:$0xff] %vm2348, %v4429
      %4462 = vst.msk [vmem:[%s224 + $0xb8] sm:$0xff] %vm2348, %v4430
      %4463 = vst.msk [vmem:[%s224 + $0xc0] sm:$0xff] %vm2348, %v4431
      %4464 = vst.msk [vmem:[%s224 + $0xc8] sm:$0xff] %vm2348, %v4432
      %4465 = vst.msk [vmem:[%s224 + $0xd0] sm:$0xff] %vm2348, %v4433
      %4466 = vst.msk [vmem:[%s224 + $0xd8] sm:$0xff] %vm2348, %v4434
      %4467 = vst.msk [vmem:[%s224 + $0xe0] sm:$0xff] %vm2348, %v4435
      %4468 = vst.msk [vmem:[%s224 + $0xe8] sm:$0xff] %vm2348, %v4436
      %4469 = vst.msk [vmem:[%s224 + $0xf0] sm:$0xff] %vm2348, %v4437
      %4470 = vst.msk [vmem:[%s224 + $0xf8] sm:$0xff] %vm2348, %v4438
      %p4471 = scmp.lt.s32.totalorder %s16, 1
      %s4472 = scalar_select %p4471, %s16, 1
      %s4473 = smul.addr %s4472, 32
      %s4474 = smul.addr %s4473, 8
      %s4475 = scalar_lea.vmem %s5, %s4474
      // Predicated region
      $region41: #{tpu_custom_call.1} parent=39 // pred_check
        %p4476 = pneg %p144
      $region42: #{tpu_custom_call.1} parent=39 // pred_check_branch
        %4478 = sbr.rel (%p4476) target = $region44
      $region43: #{tpu_custom_call.1} parent=39 // pred_region
        _
      $region44: #{tpu_custom_call.1} parent=39 // pred_fallthru
        _
    $region40: #{tpu_custom_call.1} parent=5 // pred_fallthru
      _
    %p4479 = scmp.le.s32.totalorder 2, %s11
    // Predicated region
    $region45: #{tpu_custom_call.1} parent=5 // pred_check
      %p4480 = pneg %p4479
    $region46: #{tpu_custom_call.1} parent=5 // pred_check_branch
      %4482 = sbr.rel (%p4480) target = $region48
    $region47: #{tpu_custom_call.1} parent=5 // pred_region
      %s4483 = ssub.s32 %s11, 2
      // Predicated region
      $region49: #{tpu_custom_call.1} parent=47 // pred_check
        %p4484 = pneg %p150
      $region50: #{tpu_custom_call.1} parent=47 // pred_check_branch
        %4486 = sbr.rel (%p4484) target = $region52
      $region51: #{tpu_custom_call.1} parent=47 // pred_region
        %p4487 = scmp.lt.s32.totalorder %s17, 1
        %s4488 = scalar_select %p4487, %s17, 1
        %s4489 = smul.addr %s4488, 32
        %s4490 = smul.addr %s4489, 8
        %s4491 = scalar_lea.vmem %s5, %s4490
      $region52: #{tpu_custom_call.1} parent=47 // pred_fallthru
        _
    $region48: #{tpu_custom_call.1} parent=5 // pred_fallthru
      _
  $region6: #{tpu_custom_call.1} parent=0 // loop_footer
    %s15 = sadd.s32 1, %s11
  $region7: #{tpu_custom_call.1} parent=0 // loop_footer_branch
    %10 = sbr.rel target = $region3
  $region8: #{tpu_custom_call.1} parent=0 // loop_exit
    _

</llo_original>
